<compile_context>
chip_gen: v7x
topology: tpu7x:2x2x1
jax: 0.10.0
libtpu: 0.0.40
codegen_flags: <defaults>
</compile_context>

<pallas_src>
import jax
import jax.numpy as jnp
import numpy as np
from jax.experimental import pallas as pl
from jax.experimental.pallas import tpu as pltpu

MXU_DTYPE = jnp.bfloat16     # MXU operand / HBM activation dtype (f32 accum)
OUT_DTYPE = jnp.bfloat16     # what the next U-Net block consumes
BN_EPS = 1e-5


# ----------------------------------------------------------------------------
# Fused kernel: maxpool(2) -> [conv3x3 + folded-BN + ReLU] x 2, NB images/step.
# ----------------------------------------------------------------------------
def _down_fused_kernel(x_ref, w1_ref, b1_ref, w2_ref, b2_ref, o_ref,
                       pad1_ref, pad2_ref):
    # x_ref block: (NB, H, Wo, 2*Cin) bf16 -- W pairs pre-grouped by wrapper.
    NB, H, Wo, C2 = x_ref.shape
    Cin = C2 // 2
    Ho = H // 2
    Cmid = w1_ref.shape[2]
    Cout = w2_ref.shape[2]
    M = NB * Ho * Wo

    # Zero the padded scratch ONCE.  Scratch persists across grid steps and
    # only the interior is rewritten below, so the 1-pixel halo stays zero.
    @pl.when(pl.program_id(0) == 0)
    def _():
        pad1_ref[...] = jnp.zeros(pad1_ref.shape, pad1_ref.dtype)
        pad2_ref[...] = jnp.zeros(pad2_ref.shape, pad2_ref.dtype)

    # ---- MaxPool2d(2): two VPU maximums per image (exact in bf16) ----------
    for i in range(NB):                      # NB is small and static
        xi = x_ref[i]                                        # (H, Wo, 2*Cin)
        wmax = jnp.maximum(xi[:, :, :Cin], xi[:, :, Cin:])   # pool along W
        w4 = wmax.reshape(Ho, 2, Wo, Cin)                    # leading split
        pooled = jnp.maximum(w4[:, 0], w4[:, 1])             # (Ho, Wo, Cin)
        pad1_ref[i, 1:Ho + 1, 1:Wo + 1, :] = pooled          # interior fill

    # ---- conv1: 9 shifted matmuls accumulated in f32 (no im2col buffer) ----
    acc1 = jnp.zeros((M, Cmid), jnp.float32)
    for dy in range(3):
        for dx in range(3):
            t = dy * 3 + dx
            lhs = pad1_ref[:, dy:dy + Ho, dx:dx + Wo, :].reshape(M, Cin)
            acc1 = acc1 + jnp.dot(lhs, w1_ref[t],
                                  preferred_element_type=jnp.float32)
    h = jnp.maximum(acc1 + b1_ref[...], 0.0)                 # folded BN + ReLU
    # Epilogue written straight into pad2's interior (no separate `h` slab).
    pad2_ref[:, 1:Ho + 1, 1:Wo + 1, :] = (
        h.reshape(NB, Ho, Wo, Cmid).astype(pad2_ref.dtype))

    # ---- conv2: same scheme -------------------------------------------------
    acc2 = jnp.zeros((M, Cout), jnp.float32)
    for dy in range(3):
        for dx in range(3):
            t = dy * 3 + dx
            lhs = pad2_ref[:, dy:dy + Ho, dx:dx + Wo, :].reshape(M, Cmid)
            acc2 = acc2 + jnp.dot(lhs, w2_ref[t],
                                  preferred_element_type=jnp.float32)
    y = jnp.maximum(acc2 + b2_ref[...], 0.0)

    # Flat (NB, Ho*Wo, Cout) store -- wrapper reshapes back to image layout.
    o_ref[...] = y.reshape(NB, Ho * Wo, Cout).astype(o_ref.dtype)


# ----------------------------------------------------------------------------
# BN folding (call once, OUTSIDE the jitted forward).
# ----------------------------------------------------------------------------
def _fold_bn_into_conv(w, b, gamma, beta, mean, var, eps=BN_EPS):
    """conv(x;W)+b then BN  ==  conv(x; W*s) + shift  (inference mode)."""
    scale = gamma / jnp.sqrt(var + eps)                      # (Cout,)
    w_f = (w * scale).reshape(9, w.shape[2], w.shape[3])     # (9, Cin, Cout)
    shift = (b - mean) * scale + beta                        # (Cout,)
    return w_f.astype(MXU_DTYPE), shift.reshape(1, -1).astype(jnp.float32)


def fold_down_params(params):
    w1, b1 = _fold_bn_into_conv(params["w1"], params["b1"], params["g1"],
                                params["beta1"], params["m1"], params["v1"])
    w2, b2 = _fold_bn_into_conv(params["w2"], params["b2"], params["g2"],
                                params["beta2"], params["m2"], params["v2"])
    return dict(w1=w1, b1=b1, w2=w2, b2=b2)


# ----------------------------------------------------------------------------
# Wrapper.
# ----------------------------------------------------------------------------
def _vmem_limit_bytes():
    # Per-generation budget: ~3/4 of physical VMEM (=> ~48 MiB v7x, ~96 MiB
    # v5e/v6e), capped, with a conservative fallback if the query fails.
    try:
        cap = pltpu.get_tpu_info().vmem_capacity_bytes
    except Exception:
        cap = 64 * 1024 * 1024
    return int(min(cap * 3 // 4, 100 * 1024 * 1024))


def _pick_nb(N, H, W, Cin, Cmid, Cout, budget):
    """Largest divisor of N whose per-step VMEM estimate fits the budget."""
    Ho, Wo = H // 2, W // 2

    def est(nb):
        b2 = 2  # bf16 bytes
        return (nb * H * W * Cin * b2 * 2                       # input, 2 bufs
                + nb * (Ho + 2) * (Wo + 2) * (Cin + Cmid) * b2  # pad scratch
                + nb * Ho * Wo * (Cmid + Cout) * 4              # f32 accum
                + nb * Ho * Wo * Cout * b2 * 2                  # output, 2 bufs
                + 9 * (Cin * Cmid + Cmid * Cout) * b2)          # weights

    for nb in range(min(N, 8), 0, -1):
        if N % nb == 0 and est(nb) <= budget:
            return nb
    # TODO(synk): row-tile with a 1-row halo when even nb=1 overflows VMEM.
    return 1


@jax.jit
def down_forward(x_nchw, folded):
    """x_nchw: (N, Cin, H, W), H and W even.  Returns (N, Cout, H//2, W//2)."""
    N, Cin, H, W = x_nchw.shape
    assert H % 2 == 0 and W % 2 == 0, "MaxPool2d(2) expects even H, W here"
    Ho, Wo = H // 2, W // 2
    Cmid = folded["w1"].shape[2]
    Cout = folded["w2"].shape[2]

    vmem_limit = _vmem_limit_bytes()
    NB = _pick_nb(N, H, W, Cin, Cmid, Cout, budget=int(vmem_limit * 0.75))

    # bf16 at the HBM boundary; NHWC with W-pool pairs grouped into the lane
    # dim by a free metadata reshape.
    x = jnp.transpose(x_nchw.astype(MXU_DTYPE), (0, 2, 3, 1))   # (N,H,W,Cin)
    xg = x.reshape(N, H, Wo, 2 * Cin)

    out_flat = pl.pallas_call(
        _down_fused_kernel,
        out_shape=jax.ShapeDtypeStruct((N, Ho * Wo, Cout), OUT_DTYPE),
        grid=(N // NB,),
        in_specs=[
            pl.BlockSpec((NB, H, Wo, 2 * Cin), lambda n: (n, 0, 0, 0)),
            pl.BlockSpec((9, Cin, Cmid), lambda n: (0, 0, 0)),   # resident
            pl.BlockSpec((1, Cmid), lambda n: (0, 0)),
            pl.BlockSpec((9, Cmid, Cout), lambda n: (0, 0, 0)),  # resident
            pl.BlockSpec((1, Cout), lambda n: (0, 0)),
        ],
        out_specs=pl.BlockSpec((NB, Ho * Wo, Cout), lambda n: (n, 0, 0)),
        scratch_shapes=[
            pltpu.VMEM((NB, Ho + 2, Wo + 2, Cin), MXU_DTYPE),   # padded pooled x
            pltpu.VMEM((NB, Ho + 2, Wo + 2, Cmid), MXU_DTYPE),  # padded hidden
        ],
        compiler_params=pltpu.CompilerParams(
            dimension_semantics=("parallel",),   # batch blocks across TCs
            vmem_limit_bytes=vmem_limit,
        ),
    )(xg, folded["w1"], folded["b1"], folded["w2"], folded["b2"])

    out = out_flat.reshape(N, Ho, Wo, Cout)
    return jnp.transpose(out, (0, 3, 1, 2))                    # back to NCHW


# ----------------------------------------------------------------------------
# Pure-JAX reference (NCHW, XLA conv / reduce_window) for correctness check.
# ----------------------------------------------------------------------------
def ref_forward(x_nchw, params, eps=BN_EPS):
    p = jax.lax.reduce_window(x_nchw, -jnp.inf, jax.lax.max,
                              (1, 1, 2, 2), (1, 1, 2, 2), "VALID")

    def cbr(z, w, b, g, beta, m, v):
        c = lambda a: a.reshape(1, -1, 1, 1)
        y = jax.lax.conv_general_dilated(
            z, w, (1, 1), "SAME",
            dimension_numbers=("NCHW", "HWIO", "NCHW")) + c(b)
        y = (y - c(m)) / jnp.sqrt(c(v) + eps) * c(g) + c(beta)
        return jnp.maximum(y, 0.0)

    h = cbr(p, params["w1"], params["b1"], params["g1"], params["beta1"],
            params["m1"], params["v1"])
    return cbr(h, params["w2"], params["b2"], params["g2"], params["beta2"],
               params["m2"], params["v2"])


if __name__ == "__main__":
    key = jax.random.PRNGKey(0)
    ks = jax.random.split(key, 13)

    # Down(in_channels=4, out_channels=8): MaxPool2d(2) then DoubleConv(4, 8)
    # (mid_channels defaults to out_channels).
    N, H, W = 2, 16, 16
    Cin, Cout = 4, 8
    Cmid = Cout

    x = jax.random.normal(ks[0], (N, Cin, H, W), jnp.float32)   # NCHW

    params = dict(
        # conv1: Cin -> Cmid  (HWIO weights)
        w1=0.2 * jax.random.normal(ks[1], (3, 3, Cin, Cmid), jnp.float32),
        b1=0.1 * jax.random.normal(ks[2], (Cmid,), jnp.float32),
        g1=1.0 + 0.1 * jax.random.normal(ks[3], (Cmid,), jnp.float32),
        beta1=0.1 * jax.random.normal(ks[4], (Cmid,), jnp.float32),
        m1=0.05 * jax.random.normal(ks[5], (Cmid,), jnp.float32),
        v1=1.0 + 0.1 * jnp.abs(jax.random.normal(ks[6], (Cmid,), jnp.float32)),
        # conv2: Cmid -> Cout
        w2=0.2 * jax.random.normal(ks[7], (3, 3, Cmid, Cout), jnp.float32),
        b2=0.1 * jax.random.normal(ks[8], (Cout,), jnp.float32),
        g2=1.0 + 0.1 * jax.random.normal(ks[9], (Cout,), jnp.float32),
        beta2=0.1 * jax.random.normal(ks[10], (Cout,), jnp.float32),
        m2=0.05 * jax.random.normal(ks[11], (Cout,), jnp.float32),
        v2=1.0 + 0.1 * jnp.abs(jax.random.normal(ks[12], (Cout,), jnp.float32)),
    )

    folded = fold_down_params(params)          # BN folding once, outside jit
    out = jax.block_until_ready(down_forward(x, folded))
    assert out.shape == (N, Cout, H // 2, W // 2), out.shape

    ref = jax.block_until_ready(ref_forward(x, params))
    # bf16 activations / MXU operands (f32 accumulation) vs f32 XLA reference.
    np.testing.assert_allclose(np.asarray(out.astype(jnp.float32)),
                               np.asarray(ref), rtol=5e-2, atol=5e-2)
    print("KERNEL_OK")
</pallas_src>

<mosaic_0001>
module attributes {stable_mosaic.version = 11 : i64} {
  func.func @_down_fused_kernel(%arg0: i32, %arg1: memref<2x16x8x8xbf16, #tpu.memory_space<vmem>>, %arg2: memref<9x4x8xbf16, #tpu.memory_space<vmem>>, %arg3: memref<1x8xf32, #tpu.memory_space<vmem>>, %arg4: memref<9x8x8xbf16, #tpu.memory_space<vmem>>, %arg5: memref<1x8xf32, #tpu.memory_space<vmem>>, %arg6: memref<2x64x8xbf16, #tpu.memory_space<vmem>>, %arg7: memref<2x10x10x4xbf16, #tpu.memory_space<vmem>>, %arg8: memref<2x10x10x8xbf16, #tpu.memory_space<vmem>>) attributes {dimension_semantics = [#tpu.dimension_semantics<parallel>], iteration_bounds = array<i64: 1>, scalar_prefetch = 0 : i64, scratch_operands = 2 : i64, tpu.core_type = #tpu.core_type<tc>, window_params = [{transform_indices = @transform_0, window_bounds = array<i64: 2, 16, 8, 8>}, {pipeline_mode = #tpu.pipeline_mode<synchronous>, transform_indices = @transform_1, window_bounds = array<i64: 9, 4, 8>}, {pipeline_mode = #tpu.pipeline_mode<synchronous>, transform_indices = @transform_2, window_bounds = array<i64: 1, 8>}, {pipeline_mode = #tpu.pipeline_mode<synchronous>, transform_indices = @transform_3, window_bounds = array<i64: 9, 8, 8>}, {pipeline_mode = #tpu.pipeline_mode<synchronous>, transform_indices = @transform_4, window_bounds = array<i64: 1, 8>}, {transform_indices = @transform_5, window_bounds = array<i64: 2, 64, 8>}]} {
    %c0_i32 = arith.constant 0 : i32
    %0 = arith.cmpi eq, %arg0, %c0_i32 : i32
    %1 = arith.extui %0 : i1 to i32
    %c0_i32_0 = arith.constant 0 : i32
    %2 = arith.cmpi ne, %1, %c0_i32_0 : i32
    scf.if %2 {
      %cst_166 = arith.constant 0.000000e+00 : bf16
      %157 = vector.broadcast %cst_166 : bf16 to vector<2x10x10x4xbf16>
      %c0_167 = arith.constant 0 : index
      %c0_168 = arith.constant 0 : index
      %c0_169 = arith.constant 0 : index
      %c0_170 = arith.constant 0 : index
      %158 = vector.load %arg7[%c0_167, %c0_168, %c0_169, %c0_170] : memref<2x10x10x4xbf16, #tpu.memory_space<vmem>>, vector<2x10x10x4xbf16>
      tpu.vector_store %arg7[%c0_167, %c0_168, %c0_169, %c0_170], %157 {strides = array<i32>} : memref<2x10x10x4xbf16, #tpu.memory_space<vmem>>, vector<2x10x10x4xbf16>,
      %cst_171 = arith.constant 0.000000e+00 : bf16
      %159 = vector.broadcast %cst_171 : bf16 to vector<2x10x10x8xbf16>
      %c0_172 = arith.constant 0 : index
      %c0_173 = arith.constant 0 : index
      %c0_174 = arith.constant 0 : index
      %c0_175 = arith.constant 0 : index
      %160 = vector.load %arg8[%c0_172, %c0_173, %c0_174, %c0_175] : memref<2x10x10x8xbf16, #tpu.memory_space<vmem>>, vector<2x10x10x8xbf16>
      tpu.vector_store %arg8[%c0_172, %c0_173, %c0_174, %c0_175], %159 {strides = array<i32>} : memref<2x10x10x8xbf16, #tpu.memory_space<vmem>>, vector<2x10x10x8xbf16>,
    } else {
    }
    %c0 = arith.constant 0 : index
    %c0_1 = arith.constant 0 : index
    %c0_2 = arith.constant 0 : index
    %c0_3 = arith.constant 0 : index
    %3 = vector.load %arg1[%c0, %c0_1, %c0_2, %c0_3] : memref<2x16x8x8xbf16, #tpu.memory_space<vmem>>, vector<1x16x8x8xbf16>
    %4 = vector.shape_cast %3 : vector<1x16x8x8xbf16> to vector<16x8x8xbf16>
    %5 = vector.extract_strided_slice %4 {offsets = [0, 0, 0], sizes = [16, 8, 4], strides = [1, 1, 1]} : vector<16x8x8xbf16> to vector<16x8x4xbf16>
    %6 = vector.extract_strided_slice %4 {offsets = [0, 0, 4], sizes = [16, 8, 4], strides = [1, 1, 1]} : vector<16x8x8xbf16> to vector<16x8x4xbf16>
    %7 = arith.maximumf %5, %6 : vector<16x8x4xbf16>
    %8 = vector.shape_cast %7 : vector<16x8x4xbf16> to vector<8x2x8x4xbf16>
    %9 = vector.extract_strided_slice %8 {offsets = [0, 0, 0, 0], sizes = [8, 1, 8, 4], strides = [1, 1, 1, 1]} : vector<8x2x8x4xbf16> to vector<8x1x8x4xbf16>
    %10 = vector.shape_cast %9 : vector<8x1x8x4xbf16> to vector<8x8x4xbf16>
    %11 = vector.extract_strided_slice %8 {offsets = [0, 1, 0, 0], sizes = [8, 1, 8, 4], strides = [1, 1, 1, 1]} : vector<8x2x8x4xbf16> to vector<8x1x8x4xbf16>
    %12 = vector.shape_cast %11 : vector<8x1x8x4xbf16> to vector<8x8x4xbf16>
    %13 = arith.maximumf %10, %12 : vector<8x8x4xbf16>
    %c0_4 = arith.constant 0 : index
    %c1 = arith.constant 1 : index
    %c1_5 = arith.constant 1 : index
    %c0_6 = arith.constant 0 : index
    %14 = vector.load %arg7[%c0_4, %c1, %c1_5, %c0_6] : memref<2x10x10x4xbf16, #tpu.memory_space<vmem>>, vector<1x8x8x4xbf16>
    %15 = vector.shape_cast %14 : vector<1x8x8x4xbf16> to vector<8x8x4xbf16>
    %16 = vector.shape_cast %13 : vector<8x8x4xbf16> to vector<1x8x8x4xbf16>
    tpu.vector_store %arg7[%c0_4, %c1, %c1_5, %c0_6], %16 {strides = array<i32>} : memref<2x10x10x4xbf16, #tpu.memory_space<vmem>>, vector<1x8x8x4xbf16>,
    %c1_7 = arith.constant 1 : index
    %c0_8 = arith.constant 0 : index
    %c0_9 = arith.constant 0 : index
    %c0_10 = arith.constant 0 : index
    %17 = vector.load %arg1[%c1_7, %c0_8, %c0_9, %c0_10] : memref<2x16x8x8xbf16, #tpu.memory_space<vmem>>, vector<1x16x8x8xbf16>
    %18 = vector.shape_cast %17 : vector<1x16x8x8xbf16> to vector<16x8x8xbf16>
    %19 = vector.extract_strided_slice %18 {offsets = [0, 0, 0], sizes = [16, 8, 4], strides = [1, 1, 1]} : vector<16x8x8xbf16> to vector<16x8x4xbf16>
    %20 = vector.extract_strided_slice %18 {offsets = [0, 0, 4], sizes = [16, 8, 4], strides = [1, 1, 1]} : vector<16x8x8xbf16> to vector<16x8x4xbf16>
    %21 = arith.maximumf %19, %20 : vector<16x8x4xbf16>
    %22 = vector.shape_cast %21 : vector<16x8x4xbf16> to vector<8x2x8x4xbf16>
    %23 = vector.extract_strided_slice %22 {offsets = [0, 0, 0, 0], sizes = [8, 1, 8, 4], strides = [1, 1, 1, 1]} : vector<8x2x8x4xbf16> to vector<8x1x8x4xbf16>
    %24 = vector.shape_cast %23 : vector<8x1x8x4xbf16> to vector<8x8x4xbf16>
    %25 = vector.extract_strided_slice %22 {offsets = [0, 1, 0, 0], sizes = [8, 1, 8, 4], strides = [1, 1, 1, 1]} : vector<8x2x8x4xbf16> to vector<8x1x8x4xbf16>
    %26 = vector.shape_cast %25 : vector<8x1x8x4xbf16> to vector<8x8x4xbf16>
    %27 = arith.maximumf %24, %26 : vector<8x8x4xbf16>
    %c1_11 = arith.constant 1 : index
    %c1_12 = arith.constant 1 : index
    %c1_13 = arith.constant 1 : index
    %c0_14 = arith.constant 0 : index
    %28 = vector.load %arg7[%c1_11, %c1_12, %c1_13, %c0_14] : memref<2x10x10x4xbf16, #tpu.memory_space<vmem>>, vector<1x8x8x4xbf16>
    %29 = vector.shape_cast %28 : vector<1x8x8x4xbf16> to vector<8x8x4xbf16>
    %30 = vector.shape_cast %27 : vector<8x8x4xbf16> to vector<1x8x8x4xbf16>
    tpu.vector_store %arg7[%c1_11, %c1_12, %c1_13, %c0_14], %30 {strides = array<i32>} : memref<2x10x10x4xbf16, #tpu.memory_space<vmem>>, vector<1x8x8x4xbf16>,
    %cst = arith.constant 0.000000e+00 : f32
    %31 = vector.broadcast %cst : f32 to vector<128x8xf32>
    %c0_15 = arith.constant 0 : index
    %c0_16 = arith.constant 0 : index
    %c0_17 = arith.constant 0 : index
    %c0_18 = arith.constant 0 : index
    %32 = vector.load %arg7[%c0_15, %c0_16, %c0_17, %c0_18] : memref<2x10x10x4xbf16, #tpu.memory_space<vmem>>, vector<2x8x8x4xbf16>
    %33 = vector.shape_cast %32 : vector<2x8x8x4xbf16> to vector<128x4xbf16>
    %c0_19 = arith.constant 0 : index
    %c0_20 = arith.constant 0 : index
    %c0_21 = arith.constant 0 : index
    %34 = vector.load %arg2[%c0_19, %c0_20, %c0_21] : memref<9x4x8xbf16, #tpu.memory_space<vmem>>, vector<1x4x8xbf16>
    %35 = vector.shape_cast %34 : vector<1x4x8xbf16> to vector<4x8xbf16>
    %cst_22 = arith.constant dense<0.000000e+00> : vector<128x8xf32>
    %36 = tpu.matmul %33, %35, %cst_22 {dimension_numbers = #tpu.dot_dimension_numbers<[1], [0], [0], [1], [0, 0, 1, 1], [], []>} : vector<128x4xbf16>, vector<4x8xbf16>, vector<128x8xf32> -> vector<128x8xf32>
    %37 = arith.addf %31, %36 : vector<128x8xf32>
    %c0_23 = arith.constant 0 : index
    %c0_24 = arith.constant 0 : index
    %c1_25 = arith.constant 1 : index
    %c0_26 = arith.constant 0 : index
    %38 = vector.load %arg7[%c0_23, %c0_24, %c1_25, %c0_26] : memref<2x10x10x4xbf16, #tpu.memory_space<vmem>>, vector<2x8x8x4xbf16>
    %39 = vector.shape_cast %38 : vector<2x8x8x4xbf16> to vector<128x4xbf16>
    %c1_27 = arith.constant 1 : index
    %c0_28 = arith.constant 0 : index
    %c0_29 = arith.constant 0 : index
    %40 = vector.load %arg2[%c1_27, %c0_28, %c0_29] : memref<9x4x8xbf16, #tpu.memory_space<vmem>>, vector<1x4x8xbf16>
    %41 = vector.shape_cast %40 : vector<1x4x8xbf16> to vector<4x8xbf16>
    %cst_30 = arith.constant dense<0.000000e+00> : vector<128x8xf32>
    %42 = tpu.matmul %39, %41, %cst_30 {dimension_numbers = #tpu.dot_dimension_numbers<[1], [0], [0], [1], [0, 0, 1, 1], [], []>} : vector<128x4xbf16>, vector<4x8xbf16>, vector<128x8xf32> -> vector<128x8xf32>
    %43 = arith.addf %37, %42 : vector<128x8xf32>
    %c0_31 = arith.constant 0 : index
    %c0_32 = arith.constant 0 : index
    %c2 = arith.constant 2 : index
    %c0_33 = arith.constant 0 : index
    %44 = vector.load %arg7[%c0_31, %c0_32, %c2, %c0_33] : memref<2x10x10x4xbf16, #tpu.memory_space<vmem>>, vector<2x8x8x4xbf16>
    %45 = vector.shape_cast %44 : vector<2x8x8x4xbf16> to vector<128x4xbf16>
    %c2_34 = arith.constant 2 : index
    %c0_35 = arith.constant 0 : index
    %c0_36 = arith.constant 0 : index
    %46 = vector.load %arg2[%c2_34, %c0_35, %c0_36] : memref<9x4x8xbf16, #tpu.memory_space<vmem>>, vector<1x4x8xbf16>
    %47 = vector.shape_cast %46 : vector<1x4x8xbf16> to vector<4x8xbf16>
    %cst_37 = arith.constant dense<0.000000e+00> : vector<128x8xf32>
    %48 = tpu.matmul %45, %47, %cst_37 {dimension_numbers = #tpu.dot_dimension_numbers<[1], [0], [0], [1], [0, 0, 1, 1], [], []>} : vector<128x4xbf16>, vector<4x8xbf16>, vector<128x8xf32> -> vector<128x8xf32>
    %49 = arith.addf %43, %48 : vector<128x8xf32>
    %c0_38 = arith.constant 0 : index
    %c1_39 = arith.constant 1 : index
    %c0_40 = arith.constant 0 : index
    %c0_41 = arith.constant 0 : index
    %50 = vector.load %arg7[%c0_38, %c1_39, %c0_40, %c0_41] : memref<2x10x10x4xbf16, #tpu.memory_space<vmem>>, vector<2x8x8x4xbf16>
    %51 = vector.shape_cast %50 : vector<2x8x8x4xbf16> to vector<128x4xbf16>
    %c3 = arith.constant 3 : index
    %c0_42 = arith.constant 0 : index
    %c0_43 = arith.constant 0 : index
    %52 = vector.load %arg2[%c3, %c0_42, %c0_43] : memref<9x4x8xbf16, #tpu.memory_space<vmem>>, vector<1x4x8xbf16>
    %53 = vector.shape_cast %52 : vector<1x4x8xbf16> to vector<4x8xbf16>
    %cst_44 = arith.constant dense<0.000000e+00> : vector<128x8xf32>
    %54 = tpu.matmul %51, %53, %cst_44 {dimension_numbers = #tpu.dot_dimension_numbers<[1], [0], [0], [1], [0, 0, 1, 1], [], []>} : vector<128x4xbf16>, vector<4x8xbf16>, vector<128x8xf32> -> vector<128x8xf32>
    %55 = arith.addf %49, %54 : vector<128x8xf32>
    %c0_45 = arith.constant 0 : index
    %c1_46 = arith.constant 1 : index
    %c1_47 = arith.constant 1 : index
    %c0_48 = arith.constant 0 : index
    %56 = vector.load %arg7[%c0_45, %c1_46, %c1_47, %c0_48] : memref<2x10x10x4xbf16, #tpu.memory_space<vmem>>, vector<2x8x8x4xbf16>
    %57 = vector.shape_cast %56 : vector<2x8x8x4xbf16> to vector<128x4xbf16>
    %c4 = arith.constant 4 : index
    %c0_49 = arith.constant 0 : index
    %c0_50 = arith.constant 0 : index
    %58 = vector.load %arg2[%c4, %c0_49, %c0_50] : memref<9x4x8xbf16, #tpu.memory_space<vmem>>, vector<1x4x8xbf16>
    %59 = vector.shape_cast %58 : vector<1x4x8xbf16> to vector<4x8xbf16>
    %cst_51 = arith.constant dense<0.000000e+00> : vector<128x8xf32>
    %60 = tpu.matmul %57, %59, %cst_51 {dimension_numbers = #tpu.dot_dimension_numbers<[1], [0], [0], [1], [0, 0, 1, 1], [], []>} : vector<128x4xbf16>, vector<4x8xbf16>, vector<128x8xf32> -> vector<128x8xf32>
    %61 = arith.addf %55, %60 : vector<128x8xf32>
    %c0_52 = arith.constant 0 : index
    %c1_53 = arith.constant 1 : index
    %c2_54 = arith.constant 2 : index
    %c0_55 = arith.constant 0 : index
    %62 = vector.load %arg7[%c0_52, %c1_53, %c2_54, %c0_55] : memref<2x10x10x4xbf16, #tpu.memory_space<vmem>>, vector<2x8x8x4xbf16>
    %63 = vector.shape_cast %62 : vector<2x8x8x4xbf16> to vector<128x4xbf16>
    %c5 = arith.constant 5 : index
    %c0_56 = arith.constant 0 : index
    %c0_57 = arith.constant 0 : index
    %64 = vector.load %arg2[%c5, %c0_56, %c0_57] : memref<9x4x8xbf16, #tpu.memory_space<vmem>>, vector<1x4x8xbf16>
    %65 = vector.shape_cast %64 : vector<1x4x8xbf16> to vector<4x8xbf16>
    %cst_58 = arith.constant dense<0.000000e+00> : vector<128x8xf32>
    %66 = tpu.matmul %63, %65, %cst_58 {dimension_numbers = #tpu.dot_dimension_numbers<[1], [0], [0], [1], [0, 0, 1, 1], [], []>} : vector<128x4xbf16>, vector<4x8xbf16>, vector<128x8xf32> -> vector<128x8xf32>
    %67 = arith.addf %61, %66 : vector<128x8xf32>
    %c0_59 = arith.constant 0 : index
    %c2_60 = arith.constant 2 : index
    %c0_61 = arith.constant 0 : index
    %c0_62 = arith.constant 0 : index
    %68 = vector.load %arg7[%c0_59, %c2_60, %c0_61, %c0_62] : memref<2x10x10x4xbf16, #tpu.memory_space<vmem>>, vector<2x8x8x4xbf16>
    %69 = vector.shape_cast %68 : vector<2x8x8x4xbf16> to vector<128x4xbf16>
    %c6 = arith.constant 6 : index
    %c0_63 = arith.constant 0 : index
    %c0_64 = arith.constant 0 : index
    %70 = vector.load %arg2[%c6, %c0_63, %c0_64] : memref<9x4x8xbf16, #tpu.memory_space<vmem>>, vector<1x4x8xbf16>
    %71 = vector.shape_cast %70 : vector<1x4x8xbf16> to vector<4x8xbf16>
    %cst_65 = arith.constant dense<0.000000e+00> : vector<128x8xf32>
    %72 = tpu.matmul %69, %71, %cst_65 {dimension_numbers = #tpu.dot_dimension_numbers<[1], [0], [0], [1], [0, 0, 1, 1], [], []>} : vector<128x4xbf16>, vector<4x8xbf16>, vector<128x8xf32> -> vector<128x8xf32>
    %73 = arith.addf %67, %72 : vector<128x8xf32>
    %c0_66 = arith.constant 0 : index
    %c2_67 = arith.constant 2 : index
    %c1_68 = arith.constant 1 : index
    %c0_69 = arith.constant 0 : index
    %74 = vector.load %arg7[%c0_66, %c2_67, %c1_68, %c0_69] : memref<2x10x10x4xbf16, #tpu.memory_space<vmem>>, vector<2x8x8x4xbf16>
    %75 = vector.shape_cast %74 : vector<2x8x8x4xbf16> to vector<128x4xbf16>
    %c7 = arith.constant 7 : index
    %c0_70 = arith.constant 0 : index
    %c0_71 = arith.constant 0 : index
    %76 = vector.load %arg2[%c7, %c0_70, %c0_71] : memref<9x4x8xbf16, #tpu.memory_space<vmem>>, vector<1x4x8xbf16>
    %77 = vector.shape_cast %76 : vector<1x4x8xbf16> to vector<4x8xbf16>
    %cst_72 = arith.constant dense<0.000000e+00> : vector<128x8xf32>
    %78 = tpu.matmul %75, %77, %cst_72 {dimension_numbers = #tpu.dot_dimension_numbers<[1], [0], [0], [1], [0, 0, 1, 1], [], []>} : vector<128x4xbf16>, vector<4x8xbf16>, vector<128x8xf32> -> vector<128x8xf32>
    %79 = arith.addf %73, %78 : vector<128x8xf32>
    %c0_73 = arith.constant 0 : index
    %c2_74 = arith.constant 2 : index
    %c2_75 = arith.constant 2 : index
    %c0_76 = arith.constant 0 : index
    %80 = vector.load %arg7[%c0_73, %c2_74, %c2_75, %c0_76] : memref<2x10x10x4xbf16, #tpu.memory_space<vmem>>, vector<2x8x8x4xbf16>
    %81 = vector.shape_cast %80 : vector<2x8x8x4xbf16> to vector<128x4xbf16>
    %c8 = arith.constant 8 : index
    %c0_77 = arith.constant 0 : index
    %c0_78 = arith.constant 0 : index
    %82 = vector.load %arg2[%c8, %c0_77, %c0_78] : memref<9x4x8xbf16, #tpu.memory_space<vmem>>, vector<1x4x8xbf16>
    %83 = vector.shape_cast %82 : vector<1x4x8xbf16> to vector<4x8xbf16>
    %cst_79 = arith.constant dense<0.000000e+00> : vector<128x8xf32>
    %84 = tpu.matmul %81, %83, %cst_79 {dimension_numbers = #tpu.dot_dimension_numbers<[1], [0], [0], [1], [0, 0, 1, 1], [], []>} : vector<128x4xbf16>, vector<4x8xbf16>, vector<128x8xf32> -> vector<128x8xf32>
    %85 = arith.addf %79, %84 : vector<128x8xf32>
    %c0_80 = arith.constant 0 : index
    %c0_81 = arith.constant 0 : index
    %86 = vector.load %arg3[%c0_80, %c0_81] : memref<1x8xf32, #tpu.memory_space<vmem>>, vector<1x8xf32>
    %87 = vector.broadcast %86 : vector<1x8xf32> to vector<128x8xf32>
    %88 = arith.addf %85, %87 : vector<128x8xf32>
    %cst_82 = arith.constant 0.000000e+00 : f32
    %89 = vector.broadcast %cst_82 : f32 to vector<128x8xf32>
    %90 = arith.maximumf %88, %89 : vector<128x8xf32>
    %91 = vector.shape_cast %90 : vector<128x8xf32> to vector<2x8x8x8xf32>
    %92 = arith.truncf %91 : vector<2x8x8x8xf32> to vector<2x8x8x8xbf16>
    %c0_83 = arith.constant 0 : index
    %c1_84 = arith.constant 1 : index
    %c1_85 = arith.constant 1 : index
    %c0_86 = arith.constant 0 : index
    %93 = vector.load %arg8[%c0_83, %c1_84, %c1_85, %c0_86] : memref<2x10x10x8xbf16, #tpu.memory_space<vmem>>, vector<2x8x8x8xbf16>
    tpu.vector_store %arg8[%c0_83, %c1_84, %c1_85, %c0_86], %92 {strides = array<i32>} : memref<2x10x10x8xbf16, #tpu.memory_space<vmem>>, vector<2x8x8x8xbf16>,
    %cst_87 = arith.constant 0.000000e+00 : f32
    %94 = vector.broadcast %cst_87 : f32 to vector<128x8xf32>
    %c0_88 = arith.constant 0 : index
    %c0_89 = arith.constant 0 : index
    %c0_90 = arith.constant 0 : index
    %c0_91 = arith.constant 0 : index
    %95 = vector.load %arg8[%c0_88, %c0_89, %c0_90, %c0_91] : memref<2x10x10x8xbf16, #tpu.memory_space<vmem>>, vector<2x8x8x8xbf16>
    %96 = vector.shape_cast %95 : vector<2x8x8x8xbf16> to vector<128x8xbf16>
    %c0_92 = arith.constant 0 : index
    %c0_93 = arith.constant 0 : index
    %c0_94 = arith.constant 0 : index
    %97 = vector.load %arg4[%c0_92, %c0_93, %c0_94] : memref<9x8x8xbf16, #tpu.memory_space<vmem>>, vector<1x8x8xbf16>
    %98 = vector.shape_cast %97 : vector<1x8x8xbf16> to vector<8x8xbf16>
    %cst_95 = arith.constant dense<0.000000e+00> : vector<128x8xf32>
    %99 = tpu.matmul %96, %98, %cst_95 {dimension_numbers = #tpu.dot_dimension_numbers<[1], [0], [0], [1], [0, 0, 1, 1], [], []>} : vector<128x8xbf16>, vector<8x8xbf16>, vector<128x8xf32> -> vector<128x8xf32>
    %100 = arith.addf %94, %99 : vector<128x8xf32>
    %c0_96 = arith.constant 0 : index
    %c0_97 = arith.constant 0 : index
    %c1_98 = arith.constant 1 : index
    %c0_99 = arith.constant 0 : index
    %101 = vector.load %arg8[%c0_96, %c0_97, %c1_98, %c0_99] : memref<2x10x10x8xbf16, #tpu.memory_space<vmem>>, vector<2x8x8x8xbf16>
    %102 = vector.shape_cast %101 : vector<2x8x8x8xbf16> to vector<128x8xbf16>
    %c1_100 = arith.constant 1 : index
    %c0_101 = arith.constant 0 : index
    %c0_102 = arith.constant 0 : index
    %103 = vector.load %arg4[%c1_100, %c0_101, %c0_102] : memref<9x8x8xbf16, #tpu.memory_space<vmem>>, vector<1x8x8xbf16>
    %104 = vector.shape_cast %103 : vector<1x8x8xbf16> to vector<8x8xbf16>
    %cst_103 = arith.constant dense<0.000000e+00> : vector<128x8xf32>
    %105 = tpu.matmul %102, %104, %cst_103 {dimension_numbers = #tpu.dot_dimension_numbers<[1], [0], [0], [1], [0, 0, 1, 1], [], []>} : vector<128x8xbf16>, vector<8x8xbf16>, vector<128x8xf32> -> vector<128x8xf32>
    %106 = arith.addf %100, %105 : vector<128x8xf32>
    %c0_104 = arith.constant 0 : index
    %c0_105 = arith.constant 0 : index
    %c2_106 = arith.constant 2 : index
    %c0_107 = arith.constant 0 : index
    %107 = vector.load %arg8[%c0_104, %c0_105, %c2_106, %c0_107] : memref<2x10x10x8xbf16, #tpu.memory_space<vmem>>, vector<2x8x8x8xbf16>
    %108 = vector.shape_cast %107 : vector<2x8x8x8xbf16> to vector<128x8xbf16>
    %c2_108 = arith.constant 2 : index
    %c0_109 = arith.constant 0 : index
    %c0_110 = arith.constant 0 : index
    %109 = vector.load %arg4[%c2_108, %c0_109, %c0_110] : memref<9x8x8xbf16, #tpu.memory_space<vmem>>, vector<1x8x8xbf16>
    %110 = vector.shape_cast %109 : vector<1x8x8xbf16> to vector<8x8xbf16>
    %cst_111 = arith.constant dense<0.000000e+00> : vector<128x8xf32>
    %111 = tpu.matmul %108, %110, %cst_111 {dimension_numbers = #tpu.dot_dimension_numbers<[1], [0], [0], [1], [0, 0, 1, 1], [], []>} : vector<128x8xbf16>, vector<8x8xbf16>, vector<128x8xf32> -> vector<128x8xf32>
    %112 = arith.addf %106, %111 : vector<128x8xf32>
    %c0_112 = arith.constant 0 : index
    %c1_113 = arith.constant 1 : index
    %c0_114 = arith.constant 0 : index
    %c0_115 = arith.constant 0 : index
    %113 = vector.load %arg8[%c0_112, %c1_113, %c0_114, %c0_115] : memref<2x10x10x8xbf16, #tpu.memory_space<vmem>>, vector<2x8x8x8xbf16>
    %114 = vector.shape_cast %113 : vector<2x8x8x8xbf16> to vector<128x8xbf16>
    %c3_116 = arith.constant 3 : index
    %c0_117 = arith.constant 0 : index
    %c0_118 = arith.constant 0 : index
    %115 = vector.load %arg4[%c3_116, %c0_117, %c0_118] : memref<9x8x8xbf16, #tpu.memory_space<vmem>>, vector<1x8x8xbf16>
    %116 = vector.shape_cast %115 : vector<1x8x8xbf16> to vector<8x8xbf16>
    %cst_119 = arith.constant dense<0.000000e+00> : vector<128x8xf32>
    %117 = tpu.matmul %114, %116, %cst_119 {dimension_numbers = #tpu.dot_dimension_numbers<[1], [0], [0], [1], [0, 0, 1, 1], [], []>} : vector<128x8xbf16>, vector<8x8xbf16>, vector<128x8xf32> -> vector<128x8xf32>
    %118 = arith.addf %112, %117 : vector<128x8xf32>
    %c0_120 = arith.constant 0 : index
    %c1_121 = arith.constant 1 : index
    %c1_122 = arith.constant 1 : index
    %c0_123 = arith.constant 0 : index
    %119 = vector.load %arg8[%c0_120, %c1_121, %c1_122, %c0_123] : memref<2x10x10x8xbf16, #tpu.memory_space<vmem>>, vector<2x8x8x8xbf16>
    %120 = vector.shape_cast %119 : vector<2x8x8x8xbf16> to vector<128x8xbf16>
    %c4_124 = arith.constant 4 : index
    %c0_125 = arith.constant 0 : index
    %c0_126 = arith.constant 0 : index
    %121 = vector.load %arg4[%c4_124, %c0_125, %c0_126] : memref<9x8x8xbf16, #tpu.memory_space<vmem>>, vector<1x8x8xbf16>
    %122 = vector.shape_cast %121 : vector<1x8x8xbf16> to vector<8x8xbf16>
    %cst_127 = arith.constant dense<0.000000e+00> : vector<128x8xf32>
    %123 = tpu.matmul %120, %122, %cst_127 {dimension_numbers = #tpu.dot_dimension_numbers<[1], [0], [0], [1], [0, 0, 1, 1], [], []>} : vector<128x8xbf16>, vector<8x8xbf16>, vector<128x8xf32> -> vector<128x8xf32>
    %124 = arith.addf %118, %123 : vector<128x8xf32>
    %c0_128 = arith.constant 0 : index
    %c1_129 = arith.constant 1 : index
    %c2_130 = arith.constant 2 : index
    %c0_131 = arith.constant 0 : index
    %125 = vector.load %arg8[%c0_128, %c1_129, %c2_130, %c0_131] : memref<2x10x10x8xbf16, #tpu.memory_space<vmem>>, vector<2x8x8x8xbf16>
    %126 = vector.shape_cast %125 : vector<2x8x8x8xbf16> to vector<128x8xbf16>
    %c5_132 = arith.constant 5 : index
    %c0_133 = arith.constant 0 : index
    %c0_134 = arith.constant 0 : index
    %127 = vector.load %arg4[%c5_132, %c0_133, %c0_134] : memref<9x8x8xbf16, #tpu.memory_space<vmem>>, vector<1x8x8xbf16>
    %128 = vector.shape_cast %127 : vector<1x8x8xbf16> to vector<8x8xbf16>
    %cst_135 = arith.constant dense<0.000000e+00> : vector<128x8xf32>
    %129 = tpu.matmul %126, %128, %cst_135 {dimension_numbers = #tpu.dot_dimension_numbers<[1], [0], [0], [1], [0, 0, 1, 1], [], []>} : vector<128x8xbf16>, vector<8x8xbf16>, vector<128x8xf32> -> vector<128x8xf32>
    %130 = arith.addf %124, %129 : vector<128x8xf32>
    %c0_136 = arith.constant 0 : index
    %c2_137 = arith.constant 2 : index
    %c0_138 = arith.constant 0 : index
    %c0_139 = arith.constant 0 : index
    %131 = vector.load %arg8[%c0_136, %c2_137, %c0_138, %c0_139] : memref<2x10x10x8xbf16, #tpu.memory_space<vmem>>, vector<2x8x8x8xbf16>
    %132 = vector.shape_cast %131 : vector<2x8x8x8xbf16> to vector<128x8xbf16>
    %c6_140 = arith.constant 6 : index
    %c0_141 = arith.constant 0 : index
    %c0_142 = arith.constant 0 : index
    %133 = vector.load %arg4[%c6_140, %c0_141, %c0_142] : memref<9x8x8xbf16, #tpu.memory_space<vmem>>, vector<1x8x8xbf16>
    %134 = vector.shape_cast %133 : vector<1x8x8xbf16> to vector<8x8xbf16>
    %cst_143 = arith.constant dense<0.000000e+00> : vector<128x8xf32>
    %135 = tpu.matmul %132, %134, %cst_143 {dimension_numbers = #tpu.dot_dimension_numbers<[1], [0], [0], [1], [0, 0, 1, 1], [], []>} : vector<128x8xbf16>, vector<8x8xbf16>, vector<128x8xf32> -> vector<128x8xf32>
    %136 = arith.addf %130, %135 : vector<128x8xf32>
    %c0_144 = arith.constant 0 : index
    %c2_145 = arith.constant 2 : index
    %c1_146 = arith.constant 1 : index
    %c0_147 = arith.constant 0 : index
    %137 = vector.load %arg8[%c0_144, %c2_145, %c1_146, %c0_147] : memref<2x10x10x8xbf16, #tpu.memory_space<vmem>>, vector<2x8x8x8xbf16>
    %138 = vector.shape_cast %137 : vector<2x8x8x8xbf16> to vector<128x8xbf16>
    %c7_148 = arith.constant 7 : index
    %c0_149 = arith.constant 0 : index
    %c0_150 = arith.constant 0 : index
    %139 = vector.load %arg4[%c7_148, %c0_149, %c0_150] : memref<9x8x8xbf16, #tpu.memory_space<vmem>>, vector<1x8x8xbf16>
    %140 = vector.shape_cast %139 : vector<1x8x8xbf16> to vector<8x8xbf16>
    %cst_151 = arith.constant dense<0.000000e+00> : vector<128x8xf32>
    %141 = tpu.matmul %138, %140, %cst_151 {dimension_numbers = #tpu.dot_dimension_numbers<[1], [0], [0], [1], [0, 0, 1, 1], [], []>} : vector<128x8xbf16>, vector<8x8xbf16>, vector<128x8xf32> -> vector<128x8xf32>
    %142 = arith.addf %136, %141 : vector<128x8xf32>
    %c0_152 = arith.constant 0 : index
    %c2_153 = arith.constant 2 : index
    %c2_154 = arith.constant 2 : index
    %c0_155 = arith.constant 0 : index
    %143 = vector.load %arg8[%c0_152, %c2_153, %c2_154, %c0_155] : memref<2x10x10x8xbf16, #tpu.memory_space<vmem>>, vector<2x8x8x8xbf16>
    %144 = vector.shape_cast %143 : vector<2x8x8x8xbf16> to vector<128x8xbf16>
    %c8_156 = arith.constant 8 : index
    %c0_157 = arith.constant 0 : index
    %c0_158 = arith.constant 0 : index
    %145 = vector.load %arg4[%c8_156, %c0_157, %c0_158] : memref<9x8x8xbf16, #tpu.memory_space<vmem>>, vector<1x8x8xbf16>
    %146 = vector.shape_cast %145 : vector<1x8x8xbf16> to vector<8x8xbf16>
    %cst_159 = arith.constant dense<0.000000e+00> : vector<128x8xf32>
    %147 = tpu.matmul %144, %146, %cst_159 {dimension_numbers = #tpu.dot_dimension_numbers<[1], [0], [0], [1], [0, 0, 1, 1], [], []>} : vector<128x8xbf16>, vector<8x8xbf16>, vector<128x8xf32> -> vector<128x8xf32>
    %148 = arith.addf %142, %147 : vector<128x8xf32>
    %c0_160 = arith.constant 0 : index
    %c0_161 = arith.constant 0 : index
    %149 = vector.load %arg5[%c0_160, %c0_161] : memref<1x8xf32, #tpu.memory_space<vmem>>, vector<1x8xf32>
    %150 = vector.broadcast %149 : vector<1x8xf32> to vector<128x8xf32>
    %151 = arith.addf %148, %150 : vector<128x8xf32>
    %cst_162 = arith.constant 0.000000e+00 : f32
    %152 = vector.broadcast %cst_162 : f32 to vector<128x8xf32>
    %153 = arith.maximumf %151, %152 : vector<128x8xf32>
    %154 = vector.shape_cast %153 : vector<128x8xf32> to vector<2x64x8xf32>
    %155 = arith.truncf %154 : vector<2x64x8xf32> to vector<2x64x8xbf16>
    %c0_163 = arith.constant 0 : index
    %c0_164 = arith.constant 0 : index
    %c0_165 = arith.constant 0 : index
    %156 = vector.load %arg6[%c0_163, %c0_164, %c0_165] : memref<2x64x8xbf16, #tpu.memory_space<vmem>>, vector<2x64x8xbf16>
    tpu.vector_store %arg6[%c0_163, %c0_164, %c0_165], %155 {strides = array<i32>} : memref<2x64x8xbf16, #tpu.memory_space<vmem>>, vector<2x64x8xbf16>,
    return
  }
  func.func @transform_0(%arg0: i32) -> (i32, i32, i32, i32) {
    %c0_i32 = arith.constant 0 : i32
    %c0_i32_0 = arith.constant 0 : i32
    %c0_i32_1 = arith.constant 0 : i32
    %c0_i32_2 = arith.constant 0 : i32
    return %arg0, %c0_i32, %c0_i32_0, %c0_i32_1 : i32, i32, i32, i32
  }
  func.func @transform_1(%arg0: i32) -> (i32, i32, i32) {
    %c0_i32 = arith.constant 0 : i32
    %c0_i32_0 = arith.constant 0 : i32
    %c0_i32_1 = arith.constant 0 : i32
    %c0_i32_2 = arith.constant 0 : i32
    return %c0_i32, %c0_i32_0, %c0_i32_1 : i32, i32, i32
  }
  func.func @transform_2(%arg0: i32) -> (i32, i32) {
    %c0_i32 = arith.constant 0 : i32
    %c0_i32_0 = arith.constant 0 : i32
    %c0_i32_1 = arith.constant 0 : i32
    return %c0_i32, %c0_i32_0 : i32, i32
  }
  func.func @transform_3(%arg0: i32) -> (i32, i32, i32) {
    %c0_i32 = arith.constant 0 : i32
    %c0_i32_0 = arith.constant 0 : i32
    %c0_i32_1 = arith.constant 0 : i32
    %c0_i32_2 = arith.constant 0 : i32
    return %c0_i32, %c0_i32_0, %c0_i32_1 : i32, i32, i32
  }
  func.func @transform_4(%arg0: i32) -> (i32, i32) {
    %c0_i32 = arith.constant 0 : i32
    %c0_i32_0 = arith.constant 0 : i32
    %c0_i32_1 = arith.constant 0 : i32
    return %c0_i32, %c0_i32_0 : i32, i32
  }
  func.func @transform_5(%arg0: i32) -> (i32, i32, i32) {
    %c0_i32 = arith.constant 0 : i32
    %c0_i32_0 = arith.constant 0 : i32
    %c0_i32_1 = arith.constant 0 : i32
    return %arg0, %c0_i32, %c0_i32_0 : i32, i32, i32
  }
}

</mosaic_0001>

<llo_original>
// kernel: down_forward.1
$region0: #{down_forward.1}
  #allocation0 [shape = 'u32[]', space=smem, size = 0x4, offset = 0x4, fixed_abs, tag = 'smem constant byte address 0x4 - core index']
  #allocation1 [shape = 'u32[144,128]{1,0:T(1,128)}', space=vmem, size = 0x12000, scoped, tag = 'internal scratch']
  #allocation2 [shape = 'bf16[2,10,10,4]{3,2,1,0:T(8,128)(2,1)}', space=vmem, size = 0x14000, scoped, tag = 'scratch operand']
  #allocation3 [shape = 'bf16[2,10,10,8]{3,2,1,0:T(8,128)(2,1)}', space=vmem, size = 0x14000, scoped, tag = 'scratch operand']
  %s0 = inlined_call_operand.vmem [shape: bf16[2,16,8,8], index: 0, kind: input, shape index: {}]
  %s1 = inlined_call_operand.vmem [shape: bf16[9,4,8], index: 1, kind: input, shape index: {}]
  %s2 = inlined_call_operand.vmem [shape: f32[1,8], index: 2, kind: input, shape index: {}]
  %s3 = inlined_call_operand.vmem [shape: bf16[9,8,8], index: 3, kind: input, shape index: {}]
  %s4 = inlined_call_operand.vmem [shape: f32[1,8], index: 4, kind: input, shape index: {}]
  %s5 = inlined_call_operand.vmem [shape: bf16[2,64,8], index: 5, kind: output, shape index: {}]
  %s6 = sld [smem:[#allocation0]]
  $region34: #{down_forward.1} parent=0
    _
  %s8 = ssub.s32 1, %s6
  %s9 = scalar_select 0, %s8, %s6
  // Predicated region
  $region2: #{down_forward.1} parent=0 // pred_check
    _
  $region3: #{down_forward.1} parent=0 // pred_check_branch
    %11 = sbr.rel (0) target = $region5
  $region4: #{down_forward.1} parent=0 // pred_region
    _
  $region5: #{down_forward.1} parent=0 // pred_fallthru
    _
  // Predicated region
  $region6: #{down_forward.1} parent=0 // pred_check
    _
  $region7: #{down_forward.1} parent=0 // pred_check_branch
    %13 = sbr.rel (0) target = $region9
  $region8: #{down_forward.1} parent=0 // pred_region
    _
  $region9: #{down_forward.1} parent=0 // pred_fallthru
    _
  // Predicated region
  $region10: #{down_forward.1} parent=0 // pred_check
    _
  $region11: #{down_forward.1} parent=0 // pred_check_branch
    %15 = sbr.rel (0) target = $region13
  $region12: #{down_forward.1} parent=0 // pred_region
    _
  $region13: #{down_forward.1} parent=0 // pred_fallthru
    _
  // Predicated region
  $region14: #{down_forward.1} parent=0 // pred_check
    _
  $region15: #{down_forward.1} parent=0 // pred_check_branch
    %17 = sbr.rel (0) target = $region17
  $region16: #{down_forward.1} parent=0 // pred_region
    _
  $region17: #{down_forward.1} parent=0 // pred_fallthru
    _
  // Predicated region
  $region18: #{down_forward.1} parent=0 // pred_check
    _
  $region19: #{down_forward.1} parent=0 // pred_check_branch
    %19 = sbr.rel (0) target = $region21
  $region20: #{down_forward.1} parent=0 // pred_region
    _
  $region21: #{down_forward.1} parent=0 // pred_fallthru
    _
  %p21 = scmp.eq.s32.totalorder 0, 0
  // Predicated region
  $region22: #{down_forward.1} parent=0 // pred_check
    %p22 = pneg %p21
  $region23: #{down_forward.1} parent=0 // pred_check_branch
    %24 = sbr.rel (%p22) target = $region25
  $region24: #{down_forward.1} parent=0 // pred_region
    %vm25 = vcmask 27648
    %26 = vst.msk [vmem:[#allocation2] sm:$0xf] %vm25, 0
    %vm27 = vcmask 24576
    %28 = vst.msk [vmem:[#allocation2 + $0x4] sm:$0x1] %vm27, 0
    %29 = vst.msk [vmem:[#allocation2 + $0x8] sm:$0xf] %vm25, 0
    %30 = vst.msk [vmem:[#allocation2 + $0xc] sm:$0x1] %vm27, 0
    %31 = vst.msk [vmem:[#allocation2 + $0x10] sm:$0xf] %vm25, 0
    %32 = vst.msk [vmem:[#allocation2 + $0x14] sm:$0x1] %vm27, 0
    %33 = vst.msk [vmem:[#allocation2 + $0x18] sm:$0xf] %vm25, 0
    %34 = vst.msk [vmem:[#allocation2 + $0x1c] sm:$0x1] %vm27, 0
    %35 = vst.msk [vmem:[#allocation2 + $0x20] sm:$0xf] %vm25, 0
    %36 = vst.msk [vmem:[#allocation2 + $0x24] sm:$0x1] %vm27, 0
    %37 = vst.msk [vmem:[#allocation2 + $0x28] sm:$0xf] %vm25, 0
    %38 = vst.msk [vmem:[#allocation2 + $0x2c] sm:$0x1] %vm27, 0
    %39 = vst.msk [vmem:[#allocation2 + $0x30] sm:$0xf] %vm25, 0
    %40 = vst.msk [vmem:[#allocation2 + $0x34] sm:$0x1] %vm27, 0
    %41 = vst.msk [vmem:[#allocation2 + $0x38] sm:$0xf] %vm25, 0
    %42 = vst.msk [vmem:[#allocation2 + $0x3c] sm:$0x1] %vm27, 0
    %43 = vst.msk [vmem:[#allocation2 + $0x40] sm:$0xf] %vm25, 0
    %44 = vst.msk [vmem:[#allocation2 + $0x44] sm:$0x1] %vm27, 0
    %45 = vst.msk [vmem:[#allocation2 + $0x48] sm:$0xf] %vm25, 0
    %46 = vst.msk [vmem:[#allocation2 + $0x4c] sm:$0x1] %vm27, 0
    %47 = vst.msk [vmem:[#allocation2 + $0x50] sm:$0xf] %vm25, 0
    %48 = vst.msk [vmem:[#allocation2 + $0x54] sm:$0x1] %vm27, 0
    %49 = vst.msk [vmem:[#allocation2 + $0x58] sm:$0xf] %vm25, 0
    %50 = vst.msk [vmem:[#allocation2 + $0x5c] sm:$0x1] %vm27, 0
    %51 = vst.msk [vmem:[#allocation2 + $0x60] sm:$0xf] %vm25, 0
    %52 = vst.msk [vmem:[#allocation2 + $0x64] sm:$0x1] %vm27, 0
    %53 = vst.msk [vmem:[#allocation2 + $0x68] sm:$0xf] %vm25, 0
    %54 = vst.msk [vmem:[#allocation2 + $0x6c] sm:$0x1] %vm27, 0
    %55 = vst.msk [vmem:[#allocation2 + $0x70] sm:$0xf] %vm25, 0
    %56 = vst.msk [vmem:[#allocation2 + $0x74] sm:$0x1] %vm27, 0
    %57 = vst.msk [vmem:[#allocation2 + $0x78] sm:$0xf] %vm25, 0
    %58 = vst.msk [vmem:[#allocation2 + $0x7c] sm:$0x1] %vm27, 0
    %59 = vst.msk [vmem:[#allocation2 + $0x80] sm:$0xf] %vm25, 0
    %60 = vst.msk [vmem:[#allocation2 + $0x84] sm:$0x1] %vm27, 0
    %61 = vst.msk [vmem:[#allocation2 + $0x88] sm:$0xf] %vm25, 0
    %62 = vst.msk [vmem:[#allocation2 + $0x8c] sm:$0x1] %vm27, 0
    %63 = vst.msk [vmem:[#allocation2 + $0x90] sm:$0xf] %vm25, 0
    %64 = vst.msk [vmem:[#allocation2 + $0x94] sm:$0x1] %vm27, 0
    %65 = vst.msk [vmem:[#allocation2 + $0x98] sm:$0xf] %vm25, 0
    %66 = vst.msk [vmem:[#allocation2 + $0x9c] sm:$0x1] %vm27, 0
    %vm67 = vcmask 60416
    %68 = vst.msk [vmem:[#allocation3] sm:$0xf] %vm67, 0
    %vm69 = vcmask 57344
    %70 = vst.msk [vmem:[#allocation3 + $0x4] sm:$0x1] %vm69, 0
    %71 = vst.msk [vmem:[#allocation3 + $0x8] sm:$0xf] %vm67, 0
    %72 = vst.msk [vmem:[#allocation3 + $0xc] sm:$0x1] %vm69, 0
    %73 = vst.msk [vmem:[#allocation3 + $0x10] sm:$0xf] %vm67, 0
    %74 = vst.msk [vmem:[#allocation3 + $0x14] sm:$0x1] %vm69, 0
    %75 = vst.msk [vmem:[#allocation3 + $0x18] sm:$0xf] %vm67, 0
    %76 = vst.msk [vmem:[#allocation3 + $0x1c] sm:$0x1] %vm69, 0
    %77 = vst.msk [vmem:[#allocation3 + $0x20] sm:$0xf] %vm67, 0
    %78 = vst.msk [vmem:[#allocation3 + $0x24] sm:$0x1] %vm69, 0
    %79 = vst.msk [vmem:[#allocation3 + $0x28] sm:$0xf] %vm67, 0
    %80 = vst.msk [vmem:[#allocation3 + $0x2c] sm:$0x1] %vm69, 0
    %81 = vst.msk [vmem:[#allocation3 + $0x30] sm:$0xf] %vm67, 0
    %82 = vst.msk [vmem:[#allocation3 + $0x34] sm:$0x1] %vm69, 0
    %83 = vst.msk [vmem:[#allocation3 + $0x38] sm:$0xf] %vm67, 0
    %84 = vst.msk [vmem:[#allocation3 + $0x3c] sm:$0x1] %vm69, 0
    %85 = vst.msk [vmem:[#allocation3 + $0x40] sm:$0xf] %vm67, 0
    %86 = vst.msk [vmem:[#allocation3 + $0x44] sm:$0x1] %vm69, 0
    %87 = vst.msk [vmem:[#allocation3 + $0x48] sm:$0xf] %vm67, 0
    %88 = vst.msk [vmem:[#allocation3 + $0x4c] sm:$0x1] %vm69, 0
    %89 = vst.msk [vmem:[#allocation3 + $0x50] sm:$0xf] %vm67, 0
    %90 = vst.msk [vmem:[#allocation3 + $0x54] sm:$0x1] %vm69, 0
    %91 = vst.msk [vmem:[#allocation3 + $0x58] sm:$0xf] %vm67, 0
    %92 = vst.msk [vmem:[#allocation3 + $0x5c] sm:$0x1] %vm69, 0
    %93 = vst.msk [vmem:[#allocation3 + $0x60] sm:$0xf] %vm67, 0
    %94 = vst.msk [vmem:[#allocation3 + $0x64] sm:$0x1] %vm69, 0
    %95 = vst.msk [vmem:[#allocation3 + $0x68] sm:$0xf] %vm67, 0
    %96 = vst.msk [vmem:[#allocation3 + $0x6c] sm:$0x1] %vm69, 0
    %97 = vst.msk [vmem:[#allocation3 + $0x70] sm:$0xf] %vm67, 0
    %98 = vst.msk [vmem:[#allocation3 + $0x74] sm:$0x1] %vm69, 0
    %99 = vst.msk [vmem:[#allocation3 + $0x78] sm:$0xf] %vm67, 0
    %100 = vst.msk [vmem:[#allocation3 + $0x7c] sm:$0x1] %vm69, 0
    %101 = vst.msk [vmem:[#allocation3 + $0x80] sm:$0xf] %vm67, 0
    %102 = vst.msk [vmem:[#allocation3 + $0x84] sm:$0x1] %vm69, 0
    %103 = vst.msk [vmem:[#allocation3 + $0x88] sm:$0xf] %vm67, 0
    %104 = vst.msk [vmem:[#allocation3 + $0x8c] sm:$0x1] %vm69, 0
    %105 = vst.msk [vmem:[#allocation3 + $0x90] sm:$0xf] %vm67, 0
    %106 = vst.msk [vmem:[#allocation3 + $0x94] sm:$0x1] %vm69, 0
    %107 = vst.msk [vmem:[#allocation3 + $0x98] sm:$0xf] %vm67, 0
    %108 = vst.msk [vmem:[#allocation3 + $0x9c] sm:$0x1] %vm69, 0
  $region25: #{down_forward.1} parent=0 // pred_fallthru
    _
  %v109 = vld [vmem:[%s0] sm:$0xf]
  %v110 = vld [vmem:[%s0 + $0x4] sm:$0xf]
  %v111 = vld [vmem:[%s0 + $0x8] sm:$0xf]
  %v112 = vld [vmem:[%s0 + $0xc] sm:$0xf]
  %v113 = vld [vmem:[%s0 + $0x10] sm:$0xf]
  %v114 = vld [vmem:[%s0 + $0x14] sm:$0xf]
  %v115 = vld [vmem:[%s0 + $0x18] sm:$0xf]
  %v116 = vld [vmem:[%s0 + $0x1c] sm:$0xf]
  %v117 = vld [vmem:[%s0 + $0x20] sm:$0xf]
  %v118 = vld [vmem:[%s0 + $0x24] sm:$0xf]
  %v119 = vld [vmem:[%s0 + $0x28] sm:$0xf]
  %v120 = vld [vmem:[%s0 + $0x2c] sm:$0xf]
  %v121 = vld [vmem:[%s0 + $0x30] sm:$0xf]
  %v122 = vld [vmem:[%s0 + $0x34] sm:$0xf]
  %v123 = vld [vmem:[%s0 + $0x38] sm:$0xf]
  %v124 = vld [vmem:[%s0 + $0x3c] sm:$0xf]
  %141 = vrot.lane.b32.xlu0 %v109, 124
  %v142 = vpop.permute.xlu0 %141
  %143 = vrot.lane.b32.xlu0 %v110, 124
  %v144 = vpop.permute.xlu0 %143
  %145 = vrot.lane.b32.xlu0 %v111, 124
  %v146 = vpop.permute.xlu0 %145
  %147 = vrot.lane.b32.xlu0 %v112, 124
  %v148 = vpop.permute.xlu0 %147
  %149 = vrot.lane.b32.xlu0 %v113, 124
  %v150 = vpop.permute.xlu0 %149
  %151 = vrot.lane.b32.xlu0 %v114, 124
  %v152 = vpop.permute.xlu0 %151
  %153 = vrot.lane.b32.xlu0 %v115, 124
  %v154 = vpop.permute.xlu0 %153
  %155 = vrot.lane.b32.xlu0 %v116, 124
  %v156 = vpop.permute.xlu0 %155
  %157 = vrot.lane.b32.xlu0 %v117, 124
  %v158 = vpop.permute.xlu0 %157
  %159 = vrot.lane.b32.xlu0 %v118, 124
  %v160 = vpop.permute.xlu0 %159
  %161 = vrot.lane.b32.xlu0 %v119, 124
  %v162 = vpop.permute.xlu0 %161
  %163 = vrot.lane.b32.xlu0 %v120, 124
  %v164 = vpop.permute.xlu0 %163
  %165 = vrot.lane.b32.xlu0 %v121, 124
  %v166 = vpop.permute.xlu0 %165
  %167 = vrot.lane.b32.xlu0 %v122, 124
  %v168 = vpop.permute.xlu0 %167
  %169 = vrot.lane.b32.xlu0 %v123, 124
  %v170 = vpop.permute.xlu0 %169
  %171 = vrot.lane.b32.xlu0 %v124, 124
  %v172 = vpop.permute.xlu0 %171
  %v189 = vmax.bf16 %v109, %v142
  %v190 = vmax.bf16 %v110, %v144
  %v191 = vmax.bf16 %v111, %v146
  %v192 = vmax.bf16 %v112, %v148
  %v193 = vmax.bf16 %v113, %v150
  %v194 = vmax.bf16 %v114, %v152
  %v195 = vmax.bf16 %v115, %v154
  %v196 = vmax.bf16 %v116, %v156
  %v197 = vmax.bf16 %v117, %v158
  %v198 = vmax.bf16 %v118, %v160
  %v199 = vmax.bf16 %v119, %v162
  %v200 = vmax.bf16 %v120, %v164
  %v201 = vmax.bf16 %v121, %v166
  %v202 = vmax.bf16 %v122, %v168
  %v203 = vmax.bf16 %v123, %v170
  %v204 = vmax.bf16 %v124, %v172
  %v205 = vmax.bf16 %v189, %v190
  %v206 = vmax.bf16 %v191, %v192
  %v207 = vmax.bf16 %v193, %v194
  %v208 = vmax.bf16 %v195, %v196
  %v209 = vmax.bf16 %v197, %v198
  %v210 = vmax.bf16 %v199, %v200
  %v211 = vmax.bf16 %v201, %v202
  %v212 = vmax.bf16 %v203, %v204
  %v214 = vshrl.u32 %v205, 16
  %v216 = vrot.slane %v214, 7
  %v217 = vshll.u32 %v205, 16
  %v219 = vor.u32 %v216, %v217
  %v220 = vrot.slane %v216, 4
  %v222 = vshrl.u32 %v206, 16
  %v224 = vrot.slane %v222, 7
  %v225 = vshll.u32 %v206, 16
  %v227 = vor.u32 %v224, %v225
  %v228 = vrot.slane %v224, 4
  %v230 = vshrl.u32 %v207, 16
  %v232 = vrot.slane %v230, 7
  %v233 = vshll.u32 %v207, 16
  %v235 = vor.u32 %v232, %v233
  %v236 = vrot.slane %v232, 4
  %v238 = vshrl.u32 %v208, 16
  %v240 = vrot.slane %v238, 7
  %v241 = vshll.u32 %v208, 16
  %v243 = vor.u32 %v240, %v241
  %v244 = vrot.slane %v240, 4
  %v246 = vshrl.u32 %v209, 16
  %v248 = vrot.slane %v246, 7
  %v249 = vshll.u32 %v209, 16
  %v251 = vor.u32 %v248, %v249
  %v252 = vrot.slane %v248, 4
  %v254 = vshrl.u32 %v210, 16
  %v256 = vrot.slane %v254, 7
  %v257 = vshll.u32 %v210, 16
  %v259 = vor.u32 %v256, %v257
  %v260 = vrot.slane %v256, 4
  %v262 = vshrl.u32 %v211, 16
  %v264 = vrot.slane %v262, 7
  %v265 = vshll.u32 %v211, 16
  %v267 = vor.u32 %v264, %v265
  %v268 = vrot.slane %v264, 4
  %v270 = vshrl.u32 %v212, 16
  %v272 = vrot.slane %v270, 7
  %v273 = vshll.u32 %v212, 16
  %v275 = vor.u32 %v272, %v273
  %v276 = vrot.slane %v272, 4
  %s293 = scalar_lea.vmem [#allocation2], 8
  %vm294 = vcmask 27648
  %vm295 = vsmask.f32 7938
  %vm296 = vmand %vm294, %vm295
  %v297 = vld [vmem:[%s293] sm:$0xf]
  %v298 = vsel %vm296, %v219, %v297
  %299 = vst [vmem:[%s293] sm:$0xf] %v298
  %vm300 = vcmask 24576
  %vm301 = vsmask.f32 256
  %vm302 = vmand %vm300, %vm301
  %v303 = vld [vmem:[%s293 + $0x4] sm:$0x1]
  %v304 = vsel %vm302, %v220, %v303
  %305 = vst [vmem:[%s293 + $0x4] sm:$0x1] %v304
  %v306 = vld [vmem:[%s293 + $0x8] sm:$0xf]
  %v307 = vsel %vm296, %v227, %v306
  %308 = vst [vmem:[%s293 + $0x8] sm:$0xf] %v307
  %v309 = vld [vmem:[%s293 + $0xc] sm:$0x1]
  %v310 = vsel %vm302, %v228, %v309
  %311 = vst [vmem:[%s293 + $0xc] sm:$0x1] %v310
  %v312 = vld [vmem:[%s293 + $0x10] sm:$0xf]
  %v313 = vsel %vm296, %v235, %v312
  %314 = vst [vmem:[%s293 + $0x10] sm:$0xf] %v313
  %v315 = vld [vmem:[%s293 + $0x14] sm:$0x1]
  %v316 = vsel %vm302, %v236, %v315
  %317 = vst [vmem:[%s293 + $0x14] sm:$0x1] %v316
  %v318 = vld [vmem:[%s293 + $0x18] sm:$0xf]
  %v319 = vsel %vm296, %v243, %v318
  %320 = vst [vmem:[%s293 + $0x18] sm:$0xf] %v319
  %v321 = vld [vmem:[%s293 + $0x1c] sm:$0x1]
  %v322 = vsel %vm302, %v244, %v321
  %323 = vst [vmem:[%s293 + $0x1c] sm:$0x1] %v322
  %v324 = vld [vmem:[%s293 + $0x20] sm:$0xf]
  %v325 = vsel %vm296, %v251, %v324
  %326 = vst [vmem:[%s293 + $0x20] sm:$0xf] %v325
  %v327 = vld [vmem:[%s293 + $0x24] sm:$0x1]
  %v328 = vsel %vm302, %v252, %v327
  %329 = vst [vmem:[%s293 + $0x24] sm:$0x1] %v328
  %v330 = vld [vmem:[%s293 + $0x28] sm:$0xf]
  %v331 = vsel %vm296, %v259, %v330
  %332 = vst [vmem:[%s293 + $0x28] sm:$0xf] %v331
  %v333 = vld [vmem:[%s293 + $0x2c] sm:$0x1]
  %v334 = vsel %vm302, %v260, %v333
  %335 = vst [vmem:[%s293 + $0x2c] sm:$0x1] %v334
  %v336 = vld [vmem:[%s293 + $0x30] sm:$0xf]
  %v337 = vsel %vm296, %v267, %v336
  %338 = vst [vmem:[%s293 + $0x30] sm:$0xf] %v337
  %v339 = vld [vmem:[%s293 + $0x34] sm:$0x1]
  %v340 = vsel %vm302, %v268, %v339
  %341 = vst [vmem:[%s293 + $0x34] sm:$0x1] %v340
  %v342 = vld [vmem:[%s293 + $0x38] sm:$0xf]
  %v343 = vsel %vm296, %v275, %v342
  %344 = vst [vmem:[%s293 + $0x38] sm:$0xf] %v343
  %v345 = vld [vmem:[%s293 + $0x3c] sm:$0x1]
  %v346 = vsel %vm302, %v276, %v345
  %347 = vst [vmem:[%s293 + $0x3c] sm:$0x1] %v346
  %s348 = scalar_lea.vmem %s0, 64
  %v349 = vld [vmem:[%s348] sm:$0xf]
  %v350 = vld [vmem:[%s348 + $0x4] sm:$0xf]
  %v351 = vld [vmem:[%s348 + $0x8] sm:$0xf]
  %v352 = vld [vmem:[%s348 + $0xc] sm:$0xf]
  %v353 = vld [vmem:[%s348 + $0x10] sm:$0xf]
  %v354 = vld [vmem:[%s348 + $0x14] sm:$0xf]
  %v355 = vld [vmem:[%s348 + $0x18] sm:$0xf]
  %v356 = vld [vmem:[%s348 + $0x1c] sm:$0xf]
  %v357 = vld [vmem:[%s348 + $0x20] sm:$0xf]
  %v358 = vld [vmem:[%s348 + $0x24] sm:$0xf]
  %v359 = vld [vmem:[%s348 + $0x28] sm:$0xf]
  %v360 = vld [vmem:[%s348 + $0x2c] sm:$0xf]
  %v361 = vld [vmem:[%s348 + $0x30] sm:$0xf]
  %v362 = vld [vmem:[%s348 + $0x34] sm:$0xf]
  %v363 = vld [vmem:[%s348 + $0x38] sm:$0xf]
  %v364 = vld [vmem:[%s348 + $0x3c] sm:$0xf]
  %381 = vrot.lane.b32.xlu0 %v349, 124
  %v382 = vpop.permute.xlu0 %381
  %383 = vrot.lane.b32.xlu0 %v350, 124
  %v384 = vpop.permute.xlu0 %383
  %385 = vrot.lane.b32.xlu0 %v351, 124
  %v386 = vpop.permute.xlu0 %385
  %387 = vrot.lane.b32.xlu0 %v352, 124
  %v388 = vpop.permute.xlu0 %387
  %389 = vrot.lane.b32.xlu0 %v353, 124
  %v390 = vpop.permute.xlu0 %389
  %391 = vrot.lane.b32.xlu0 %v354, 124
  %v392 = vpop.permute.xlu0 %391
  %393 = vrot.lane.b32.xlu0 %v355, 124
  %v394 = vpop.permute.xlu0 %393
  %395 = vrot.lane.b32.xlu0 %v356, 124
  %v396 = vpop.permute.xlu0 %395
  %397 = vrot.lane.b32.xlu0 %v357, 124
  %v398 = vpop.permute.xlu0 %397
  %399 = vrot.lane.b32.xlu0 %v358, 124
  %v400 = vpop.permute.xlu0 %399
  %401 = vrot.lane.b32.xlu0 %v359, 124
  %v402 = vpop.permute.xlu0 %401
  %403 = vrot.lane.b32.xlu0 %v360, 124
  %v404 = vpop.permute.xlu0 %403
  %405 = vrot.lane.b32.xlu0 %v361, 124
  %v406 = vpop.permute.xlu0 %405
  %407 = vrot.lane.b32.xlu0 %v362, 124
  %v408 = vpop.permute.xlu0 %407
  %409 = vrot.lane.b32.xlu0 %v363, 124
  %v410 = vpop.permute.xlu0 %409
  %411 = vrot.lane.b32.xlu0 %v364, 124
  %v412 = vpop.permute.xlu0 %411
  %v429 = vmax.bf16 %v349, %v382
  %v430 = vmax.bf16 %v350, %v384
  %v431 = vmax.bf16 %v351, %v386
  %v432 = vmax.bf16 %v352, %v388
  %v433 = vmax.bf16 %v353, %v390
  %v434 = vmax.bf16 %v354, %v392
  %v435 = vmax.bf16 %v355, %v394
  %v436 = vmax.bf16 %v356, %v396
  %v437 = vmax.bf16 %v357, %v398
  %v438 = vmax.bf16 %v358, %v400
  %v439 = vmax.bf16 %v359, %v402
  %v440 = vmax.bf16 %v360, %v404
  %v441 = vmax.bf16 %v361, %v406
  %v442 = vmax.bf16 %v362, %v408
  %v443 = vmax.bf16 %v363, %v410
  %v444 = vmax.bf16 %v364, %v412
  %v445 = vmax.bf16 %v429, %v430
  %v446 = vmax.bf16 %v431, %v432
  %v447 = vmax.bf16 %v433, %v434
  %v448 = vmax.bf16 %v435, %v436
  %v449 = vmax.bf16 %v437, %v438
  %v450 = vmax.bf16 %v439, %v440
  %v451 = vmax.bf16 %v441, %v442
  %v452 = vmax.bf16 %v443, %v444
  %v454 = vshrl.u32 %v445, 16
  %v456 = vrot.slane %v454, 7
  %v457 = vshll.u32 %v445, 16
  %v459 = vor.u32 %v456, %v457
  %v460 = vrot.slane %v456, 4
  %v462 = vshrl.u32 %v446, 16
  %v464 = vrot.slane %v462, 7
  %v465 = vshll.u32 %v446, 16
  %v467 = vor.u32 %v464, %v465
  %v468 = vrot.slane %v464, 4
  %v470 = vshrl.u32 %v447, 16
  %v472 = vrot.slane %v470, 7
  %v473 = vshll.u32 %v447, 16
  %v475 = vor.u32 %v472, %v473
  %v476 = vrot.slane %v472, 4
  %v478 = vshrl.u32 %v448, 16
  %v480 = vrot.slane %v478, 7
  %v481 = vshll.u32 %v448, 16
  %v483 = vor.u32 %v480, %v481
  %v484 = vrot.slane %v480, 4
  %v486 = vshrl.u32 %v449, 16
  %v488 = vrot.slane %v486, 7
  %v489 = vshll.u32 %v449, 16
  %v491 = vor.u32 %v488, %v489
  %v492 = vrot.slane %v488, 4
  %v494 = vshrl.u32 %v450, 16
  %v496 = vrot.slane %v494, 7
  %v497 = vshll.u32 %v450, 16
  %v499 = vor.u32 %v496, %v497
  %v500 = vrot.slane %v496, 4
  %v502 = vshrl.u32 %v451, 16
  %v504 = vrot.slane %v502, 7
  %v505 = vshll.u32 %v451, 16
  %v507 = vor.u32 %v504, %v505
  %v508 = vrot.slane %v504, 4
  %v510 = vshrl.u32 %v452, 16
  %v512 = vrot.slane %v510, 7
  %v513 = vshll.u32 %v452, 16
  %v515 = vor.u32 %v512, %v513
  %v516 = vrot.slane %v512, 4
  %s533 = scalar_lea.vmem [#allocation2], 88
  %v534 = vld [vmem:[%s533] sm:$0xf]
  %v535 = vsel %vm296, %v459, %v534
  %536 = vst [vmem:[%s533] sm:$0xf] %v535
  %v537 = vld [vmem:[%s533 + $0x4] sm:$0x1]
  %v538 = vsel %vm302, %v460, %v537
  %539 = vst [vmem:[%s533 + $0x4] sm:$0x1] %v538
  %v540 = vld [vmem:[%s533 + $0x8] sm:$0xf]
  %v541 = vsel %vm296, %v467, %v540
  %542 = vst [vmem:[%s533 + $0x8] sm:$0xf] %v541
  %v543 = vld [vmem:[%s533 + $0xc] sm:$0x1]
  %v544 = vsel %vm302, %v468, %v543
  %545 = vst [vmem:[%s533 + $0xc] sm:$0x1] %v544
  %v546 = vld [vmem:[%s533 + $0x10] sm:$0xf]
  %v547 = vsel %vm296, %v475, %v546
  %548 = vst [vmem:[%s533 + $0x10] sm:$0xf] %v547
  %v549 = vld [vmem:[%s533 + $0x14] sm:$0x1]
  %v550 = vsel %vm302, %v476, %v549
  %551 = vst [vmem:[%s533 + $0x14] sm:$0x1] %v550
  %v552 = vld [vmem:[%s533 + $0x18] sm:$0xf]
  %v553 = vsel %vm296, %v483, %v552
  %554 = vst [vmem:[%s533 + $0x18] sm:$0xf] %v553
  %v555 = vld [vmem:[%s533 + $0x1c] sm:$0x1]
  %v556 = vsel %vm302, %v484, %v555
  %557 = vst [vmem:[%s533 + $0x1c] sm:$0x1] %v556
  %v558 = vld [vmem:[%s533 + $0x20] sm:$0xf]
  %v559 = vsel %vm296, %v491, %v558
  %560 = vst [vmem:[%s533 + $0x20] sm:$0xf] %v559
  %v561 = vld [vmem:[%s533 + $0x24] sm:$0x1]
  %v562 = vsel %vm302, %v492, %v561
  %563 = vst [vmem:[%s533 + $0x24] sm:$0x1] %v562
  %v564 = vld [vmem:[%s533 + $0x28] sm:$0xf]
  %v565 = vsel %vm296, %v499, %v564
  %566 = vst [vmem:[%s533 + $0x28] sm:$0xf] %v565
  %v567 = vld [vmem:[%s533 + $0x2c] sm:$0x1]
  %v568 = vsel %vm302, %v500, %v567
  %569 = vst [vmem:[%s533 + $0x2c] sm:$0x1] %v568
  %v570 = vld [vmem:[%s533 + $0x30] sm:$0xf]
  %v571 = vsel %vm296, %v507, %v570
  %572 = vst [vmem:[%s533 + $0x30] sm:$0xf] %v571
  %v573 = vld [vmem:[%s533 + $0x34] sm:$0x1]
  %v574 = vsel %vm302, %v508, %v573
  %575 = vst [vmem:[%s533 + $0x34] sm:$0x1] %v574
  %v576 = vld [vmem:[%s533 + $0x38] sm:$0xf]
  %v577 = vsel %vm296, %v515, %v576
  %578 = vst [vmem:[%s533 + $0x38] sm:$0xf] %v577
  %v579 = vld [vmem:[%s533 + $0x3c] sm:$0x1]
  %v580 = vsel %vm302, %v516, %v579
  %581 = vst [vmem:[%s533 + $0x3c] sm:$0x1] %v580
  %v582 = vld [vmem:[#allocation2] sm:$0xf]
  %v583 = vld [vmem:[#allocation2 + $0x8] sm:$0xf]
  %v584 = vld [vmem:[#allocation2 + $0x10] sm:$0xf]
  %v585 = vld [vmem:[#allocation2 + $0x18] sm:$0xf]
  %v586 = vld [vmem:[#allocation2 + $0x20] sm:$0xf]
  %v587 = vld [vmem:[#allocation2 + $0x28] sm:$0xf]
  %v588 = vld [vmem:[#allocation2 + $0x30] sm:$0xf]
  %v589 = vld [vmem:[#allocation2 + $0x38] sm:$0xf]
  %v590 = vld [vmem:[#allocation2 + $0x50] sm:$0xf]
  %v591 = vld [vmem:[#allocation2 + $0x58] sm:$0xf]
  %v592 = vld [vmem:[#allocation2 + $0x60] sm:$0xf]
  %v593 = vld [vmem:[#allocation2 + $0x68] sm:$0xf]
  %v594 = vld [vmem:[#allocation2 + $0x70] sm:$0xf]
  %v595 = vld [vmem:[#allocation2 + $0x78] sm:$0xf]
  %v596 = vld [vmem:[#allocation2 + $0x80] sm:$0xf]
  %v597 = vld [vmem:[#allocation2 + $0x88] sm:$0xf]
  %v598 = vld [vmem:[%s1] sm:$0x3]
  %v599 = vld [vmem:[#allocation2 + $0x4] sm:$0x1]
  %v600 = vld [vmem:[#allocation2 + $0xc] sm:$0x1]
  %v601 = vld [vmem:[#allocation2 + $0x14] sm:$0x1]
  %v602 = vld [vmem:[#allocation2 + $0x1c] sm:$0x1]
  %v603 = vld [vmem:[#allocation2 + $0x24] sm:$0x1]
  %v604 = vld [vmem:[#allocation2 + $0x2c] sm:$0x1]
  %v605 = vld [vmem:[#allocation2 + $0x34] sm:$0x1]
  %v606 = vld [vmem:[#allocation2 + $0x3c] sm:$0x1]
  %v607 = vld [vmem:[#allocation2 + $0x54] sm:$0x1]
  %v608 = vld [vmem:[#allocation2 + $0x5c] sm:$0x1]
  %v609 = vld [vmem:[#allocation2 + $0x64] sm:$0x1]
  %v610 = vld [vmem:[#allocation2 + $0x6c] sm:$0x1]
  %v611 = vld [vmem:[#allocation2 + $0x74] sm:$0x1]
  %v612 = vld [vmem:[#allocation2 + $0x7c] sm:$0x1]
  %v613 = vld [vmem:[#allocation2 + $0x84] sm:$0x1]
  %v614 = vld [vmem:[#allocation2 + $0x8c] sm:$0x1]
  %vm615 = vsmask.f32 3328
  %vm616 = vsmask.f32 7440
  %vm617 = vmor %vm615, %vm616
  %v619 = vshrl.u32 %v582, 16
  %v621 = vrot.slane %v619, 4
  %v622 = vshll.u32 %v582, 16
  %v624 = vrot.slane %v622, 5
  %v625 = vor.u32 %v621, %v624
  %v626 = vrot.slane %v625, 4
  %v628 = vshll.u32 %v599, 16
  %v630 = vrot.slane %v628, 5
  %v631 = vsel %vm617, %v626, %v630
  %v633 = vshrl.u32 %v583, 16
  %v635 = vrot.slane %v633, 4
  %v636 = vshll.u32 %v583, 16
  %v638 = vrot.slane %v636, 5
  %v639 = vor.u32 %v635, %v638
  %v640 = vrot.slane %v639, 4
  %v642 = vshll.u32 %v600, 16
  %v644 = vrot.slane %v642, 5
  %v645 = vsel %vm617, %v640, %v644
  %v647 = vshrl.u32 %v584, 16
  %v649 = vrot.slane %v647, 4
  %v650 = vshll.u32 %v584, 16
  %v652 = vrot.slane %v650, 5
  %v653 = vor.u32 %v649, %v652
  %v654 = vrot.slane %v653, 4
  %v656 = vshll.u32 %v601, 16
  %v658 = vrot.slane %v656, 5
  %v659 = vsel %vm617, %v654, %v658
  %v661 = vshrl.u32 %v585, 16
  %v663 = vrot.slane %v661, 4
  %v664 = vshll.u32 %v585, 16
  %v666 = vrot.slane %v664, 5
  %v667 = vor.u32 %v663, %v666
  %v668 = vrot.slane %v667, 4
  %v670 = vshll.u32 %v602, 16
  %v672 = vrot.slane %v670, 5
  %v673 = vsel %vm617, %v668, %v672
  %v675 = vshrl.u32 %v586, 16
  %v677 = vrot.slane %v675, 4
  %v678 = vshll.u32 %v586, 16
  %v680 = vrot.slane %v678, 5
  %v681 = vor.u32 %v677, %v680
  %v682 = vrot.slane %v681, 4
  %v684 = vshll.u32 %v603, 16
  %v686 = vrot.slane %v684, 5
  %v687 = vsel %vm617, %v682, %v686
  %v689 = vshrl.u32 %v587, 16
  %v691 = vrot.slane %v689, 4
  %v692 = vshll.u32 %v587, 16
  %v694 = vrot.slane %v692, 5
  %v695 = vor.u32 %v691, %v694
  %v696 = vrot.slane %v695, 4
  %v698 = vshll.u32 %v604, 16
  %v700 = vrot.slane %v698, 5
  %v701 = vsel %vm617, %v696, %v700
  %v703 = vshrl.u32 %v588, 16
  %v705 = vrot.slane %v703, 4
  %v706 = vshll.u32 %v588, 16
  %v708 = vrot.slane %v706, 5
  %v709 = vor.u32 %v705, %v708
  %v710 = vrot.slane %v709, 4
  %v712 = vshll.u32 %v605, 16
  %v714 = vrot.slane %v712, 5
  %v715 = vsel %vm617, %v710, %v714
  %v717 = vshrl.u32 %v589, 16
  %v719 = vrot.slane %v717, 4
  %v720 = vshll.u32 %v589, 16
  %v722 = vrot.slane %v720, 5
  %v723 = vor.u32 %v719, %v722
  %v724 = vrot.slane %v723, 4
  %v726 = vshll.u32 %v606, 16
  %v728 = vrot.slane %v726, 5
  %v729 = vsel %vm617, %v724, %v728
  %v731 = vshrl.u32 %v590, 16
  %v733 = vrot.slane %v731, 4
  %v734 = vshll.u32 %v590, 16
  %v736 = vrot.slane %v734, 5
  %v737 = vor.u32 %v733, %v736
  %v738 = vrot.slane %v737, 4
  %v740 = vshll.u32 %v607, 16
  %v742 = vrot.slane %v740, 5
  %v743 = vsel %vm617, %v738, %v742
  %v745 = vshrl.u32 %v591, 16
  %v747 = vrot.slane %v745, 4
  %v748 = vshll.u32 %v591, 16
  %v750 = vrot.slane %v748, 5
  %v751 = vor.u32 %v747, %v750
  %v752 = vrot.slane %v751, 4
  %v754 = vshll.u32 %v608, 16
  %v756 = vrot.slane %v754, 5
  %v757 = vsel %vm617, %v752, %v756
  %v759 = vshrl.u32 %v592, 16
  %v761 = vrot.slane %v759, 4
  %v762 = vshll.u32 %v592, 16
  %v764 = vrot.slane %v762, 5
  %v765 = vor.u32 %v761, %v764
  %v766 = vrot.slane %v765, 4
  %v768 = vshll.u32 %v609, 16
  %v770 = vrot.slane %v768, 5
  %v771 = vsel %vm617, %v766, %v770
  %v773 = vshrl.u32 %v593, 16
  %v775 = vrot.slane %v773, 4
  %v776 = vshll.u32 %v593, 16
  %v778 = vrot.slane %v776, 5
  %v779 = vor.u32 %v775, %v778
  %v780 = vrot.slane %v779, 4
  %v782 = vshll.u32 %v610, 16
  %v784 = vrot.slane %v782, 5
  %v785 = vsel %vm617, %v780, %v784
  %v787 = vshrl.u32 %v594, 16
  %v789 = vrot.slane %v787, 4
  %v790 = vshll.u32 %v594, 16
  %v792 = vrot.slane %v790, 5
  %v793 = vor.u32 %v789, %v792
  %v794 = vrot.slane %v793, 4
  %v796 = vshll.u32 %v611, 16
  %v798 = vrot.slane %v796, 5
  %v799 = vsel %vm617, %v794, %v798
  %v801 = vshrl.u32 %v595, 16
  %v803 = vrot.slane %v801, 4
  %v804 = vshll.u32 %v595, 16
  %v806 = vrot.slane %v804, 5
  %v807 = vor.u32 %v803, %v806
  %v808 = vrot.slane %v807, 4
  %v810 = vshll.u32 %v612, 16
  %v812 = vrot.slane %v810, 5
  %v813 = vsel %vm617, %v808, %v812
  %v815 = vshrl.u32 %v596, 16
  %v817 = vrot.slane %v815, 4
  %v818 = vshll.u32 %v596, 16
  %v820 = vrot.slane %v818, 5
  %v821 = vor.u32 %v817, %v820
  %v822 = vrot.slane %v821, 4
  %v824 = vshll.u32 %v613, 16
  %v826 = vrot.slane %v824, 5
  %v827 = vsel %vm617, %v822, %v826
  %v829 = vshrl.u32 %v597, 16
  %v831 = vrot.slane %v829, 4
  %v832 = vshll.u32 %v597, 16
  %v834 = vrot.slane %v832, 5
  %v835 = vor.u32 %v831, %v834
  %v836 = vrot.slane %v835, 4
  %v838 = vshll.u32 %v614, 16
  %v840 = vrot.slane %v838, 5
  %v841 = vsel %vm617, %v836, %v840
  %s842 = scalar_lea.vmem %s1, 2
  %v843 = vld [vmem:[%s842] sm:$0x3]
  %v844 = vunpack.c.l.b16 %v631
  %v845 = vunpack.c.l.b16 %v645
  %v846 = vunpack.c.l.b16 %v659
  %v847 = vunpack.c.l.b16 %v673
  %v848 = vunpack.c.l.b16 %v687
  %v849 = vunpack.c.l.b16 %v701
  %v850 = vunpack.c.l.b16 %v715
  %v851 = vunpack.c.l.b16 %v729
  %v852 = vunpack.c.l.b16 %v743
  %v853 = vunpack.c.l.b16 %v757
  %v854 = vunpack.c.l.b16 %v771
  %v855 = vunpack.c.l.b16 %v785
  %v856 = vunpack.c.l.b16 %v799
  %v857 = vunpack.c.l.b16 %v813
  %v858 = vunpack.c.l.b16 %v827
  %v859 = vunpack.c.l.b16 %v841
  %v860 = vpack.c.b16 %v845, %v844
  %v861 = vpack.c.b16 %v847, %v846
  %v862 = vpack.c.b16 %v849, %v848
  %v863 = vpack.c.b16 %v851, %v850
  %v864 = vpack.c.b16 %v853, %v852
  %v865 = vpack.c.b16 %v855, %v854
  %v866 = vpack.c.b16 %v857, %v856
  %v867 = vpack.c.b16 %v859, %v858
  %vm868 = vcmask 31744
  %v870 = vsel %vm868, %v860, 0
  %v873 = vsel %vm868, %v861, 0
  %v876 = vsel %vm868, %v862, 0
  %v879 = vsel %vm868, %v863, 0
  %v882 = vsel %vm868, %v864, 0
  %v885 = vsel %vm868, %v865, 0
  %v888 = vsel %vm868, %v866, 0
  %v891 = vsel %vm868, %v867, 0
  %vm893 = vcmask 1041408
  %v895 = vsel %vm893, %v843, 0
  %897 = vmatprep.subr.bf16.mxu0 0
  %898 = vmatpush1.bf16.msra.mxu0 %v895
  %899 = vmatprep.subr.bf16.mxu0 0
  %900 = vmatpush1.bf16.msra.mxu0 0
  %901 = vmatprep.subr.bf16.mxu0 0
  %902 = vmatpush1.bf16.msra.mxu0 0
  %903 = vmatprep.subr.bf16.mxu0 0
  %904 = vmatpush1.bf16.msra.mxu0 0
  %905 = vmatprep.subr.bf16.mxu0 0
  %906 = vmatpush1.bf16.msra.mxu0 0
  %907 = vmatprep.subr.bf16.mxu0 0
  %908 = vmatpush1.bf16.msra.mxu0 0
  %909 = vmatprep.subr.bf16.mxu0 0
  %910 = vmatpush1.bf16.msra.mxu0 0
  %911 = vmatprep.subr.bf16.mxu0 0
  %912 = vmatpush1.bf16.msra.mxu0 0
  %913 = vmatprep.subr.bf16.mxu0 0
  %914 = vmatpush1.bf16.msra.mxu0 0
  %915 = vmatprep.subr.bf16.mxu0 0
  %916 = vmatpush1.bf16.msra.mxu0 0
  %917 = vmatprep.subr.bf16.mxu0 0
  %918 = vmatpush1.bf16.msra.mxu0 0
  %919 = vmatprep.subr.bf16.mxu0 0
  %920 = vmatpush1.bf16.msra.mxu0 0
  %921 = vmatprep.subr.bf16.mxu0 0
  %922 = vmatpush1.bf16.msra.mxu0 0
  %923 = vmatprep.subr.bf16.mxu0 0
  %924 = vmatpush1.bf16.msra.mxu0 0
  %925 = vmatprep.subr.bf16.mxu0 0
  %926 = vmatpush1.bf16.msra.mxu0 0
  %927 = vmatprep.subr.bf16.mxu0 0
  %928 = vmatpush1.bf16.msra.mxu0 0
  %929 = vmatprep.mubr.bf16.mxu0 0
  %930 = vmatmul.mubr.bf16.gmra.mrb[0].mxu0 %v870
  %v931 = vpop.f32.mrb[0].mxu0
  %v932 = vadd.f32 0.0, %v931
  %v933 = vpop.f32.mrb[0].mxu0
  %v934 = vpop.f32.mrb[0].mxu0
  %v935 = vadd.f32 0.0, %v934
  %v936 = vpop.f32.mrb[0].mxu0
  %937 = vmatprep.mubr.bf16.mxu0 0
  %938 = vmatmul.mubr.bf16.gmra.mrb[0].mxu0 %v873
  %v939 = vpop.f32.mrb[0].mxu0
  %v940 = vadd.f32 0.0, %v939
  %v941 = vpop.f32.mrb[0].mxu0
  %v942 = vpop.f32.mrb[0].mxu0
  %v943 = vadd.f32 0.0, %v942
  %v944 = vpop.f32.mrb[0].mxu0
  %945 = vmatprep.mubr.bf16.mxu0 0
  %946 = vmatmul.mubr.bf16.gmra.mrb[0].mxu0 %v876
  %v947 = vpop.f32.mrb[0].mxu0
  %v948 = vadd.f32 0.0, %v947
  %v949 = vpop.f32.mrb[0].mxu0
  %v950 = vpop.f32.mrb[0].mxu0
  %v951 = vadd.f32 0.0, %v950
  %v952 = vpop.f32.mrb[0].mxu0
  %953 = vmatprep.mubr.bf16.mxu0 0
  %954 = vmatmul.mubr.bf16.gmra.mrb[0].mxu0 %v879
  %v955 = vpop.f32.mrb[0].mxu0
  %v956 = vadd.f32 0.0, %v955
  %v957 = vpop.f32.mrb[0].mxu0
  %v958 = vpop.f32.mrb[0].mxu0
  %v959 = vadd.f32 0.0, %v958
  %v960 = vpop.f32.mrb[0].mxu0
  %961 = vmatprep.mubr.bf16.mxu0 0
  %962 = vmatmul.mubr.bf16.gmra.mrb[0].mxu0 %v882
  %v963 = vpop.f32.mrb[0].mxu0
  %v964 = vadd.f32 0.0, %v963
  %v965 = vpop.f32.mrb[0].mxu0
  %v966 = vpop.f32.mrb[0].mxu0
  %v967 = vadd.f32 0.0, %v966
  %v968 = vpop.f32.mrb[0].mxu0
  %969 = vmatprep.mubr.bf16.mxu0 0
  %970 = vmatmul.mubr.bf16.gmra.mrb[0].mxu0 %v885
  %v971 = vpop.f32.mrb[0].mxu0
  %v972 = vadd.f32 0.0, %v971
  %v973 = vpop.f32.mrb[0].mxu0
  %v974 = vpop.f32.mrb[0].mxu0
  %v975 = vadd.f32 0.0, %v974
  %v976 = vpop.f32.mrb[0].mxu0
  %977 = vmatprep.mubr.bf16.mxu0 0
  %978 = vmatmul.mubr.bf16.gmra.mrb[0].mxu0 %v888
  %v979 = vpop.f32.mrb[0].mxu0
  %v980 = vadd.f32 0.0, %v979
  %v981 = vpop.f32.mrb[0].mxu0
  %v982 = vpop.f32.mrb[0].mxu0
  %v983 = vadd.f32 0.0, %v982
  %v984 = vpop.f32.mrb[0].mxu0
  %985 = vmatprep.mubr.bf16.mxu0 0
  %986 = vmatmul.mubr.bf16.gmra.mrb[0].mxu0 %v891
  %v987 = vpop.f32.mrb[0].mxu0
  %v988 = vadd.f32 0.0, %v987
  %v989 = vpop.f32.mrb[0].mxu0
  %v990 = vpop.f32.mrb[0].mxu0
  %v991 = vadd.f32 0.0, %v990
  %v992 = vpop.f32.mrb[0].mxu0
  %993 = vdwg.mxu0
  %v1010 = vunpack.c.l.b16 %v582
  %v1011 = vunpack.c.l.b16 %v583
  %v1012 = vunpack.c.l.b16 %v584
  %v1013 = vunpack.c.l.b16 %v585
  %v1014 = vunpack.c.l.b16 %v586
  %v1015 = vunpack.c.l.b16 %v587
  %v1016 = vunpack.c.l.b16 %v588
  %v1017 = vunpack.c.l.b16 %v589
  %v1018 = vunpack.c.l.b16 %v590
  %v1019 = vunpack.c.l.b16 %v591
  %v1020 = vunpack.c.l.b16 %v592
  %v1021 = vunpack.c.l.b16 %v593
  %v1022 = vunpack.c.l.b16 %v594
  %v1023 = vunpack.c.l.b16 %v595
  %v1024 = vunpack.c.l.b16 %v596
  %v1025 = vunpack.c.l.b16 %v597
  %v1026 = vpack.c.b16 %v1011, %v1010
  %v1027 = vpack.c.b16 %v1013, %v1012
  %v1028 = vpack.c.b16 %v1015, %v1014
  %v1029 = vpack.c.b16 %v1017, %v1016
  %v1030 = vpack.c.b16 %v1019, %v1018
  %v1031 = vpack.c.b16 %v1021, %v1020
  %v1032 = vpack.c.b16 %v1023, %v1022
  %v1033 = vpack.c.b16 %v1025, %v1024
  %v1035 = vsel %vm868, %v1026, 0
  %v1038 = vsel %vm868, %v1027, 0
  %v1041 = vsel %vm868, %v1028, 0
  %v1044 = vsel %vm868, %v1029, 0
  %v1047 = vsel %vm868, %v1030, 0
  %v1050 = vsel %vm868, %v1031, 0
  %v1053 = vsel %vm868, %v1032, 0
  %v1056 = vsel %vm868, %v1033, 0
  %v1059 = vsel %vm893, %v598, 0
  %1061 = vmatprep.subr.bf16.mxu0 0
  %1062 = vmatpush1.bf16.msra.mxu0 %v1059
  %1063 = vmatprep.subr.bf16.mxu0 0
  %1064 = vmatpush1.bf16.msra.mxu0 0
  %1065 = vmatprep.subr.bf16.mxu0 0
  %1066 = vmatpush1.bf16.msra.mxu0 0
  %1067 = vmatprep.subr.bf16.mxu0 0
  %1068 = vmatpush1.bf16.msra.mxu0 0
  %1069 = vmatprep.subr.bf16.mxu0 0
  %1070 = vmatpush1.bf16.msra.mxu0 0
  %1071 = vmatprep.subr.bf16.mxu0 0
  %1072 = vmatpush1.bf16.msra.mxu0 0
  %1073 = vmatprep.subr.bf16.mxu0 0
  %1074 = vmatpush1.bf16.msra.mxu0 0
  %1075 = vmatprep.subr.bf16.mxu0 0
  %1076 = vmatpush1.bf16.msra.mxu0 0
  %1077 = vmatprep.subr.bf16.mxu0 0
  %1078 = vmatpush1.bf16.msra.mxu0 0
  %1079 = vmatprep.subr.bf16.mxu0 0
  %1080 = vmatpush1.bf16.msra.mxu0 0
  %1081 = vmatprep.subr.bf16.mxu0 0
  %1082 = vmatpush1.bf16.msra.mxu0 0
  %1083 = vmatprep.subr.bf16.mxu0 0
  %1084 = vmatpush1.bf16.msra.mxu0 0
  %1085 = vmatprep.subr.bf16.mxu0 0
  %1086 = vmatpush1.bf16.msra.mxu0 0
  %1087 = vmatprep.subr.bf16.mxu0 0
  %1088 = vmatpush1.bf16.msra.mxu0 0
  %1089 = vmatprep.subr.bf16.mxu0 0
  %1090 = vmatpush1.bf16.msra.mxu0 0
  %1091 = vmatprep.subr.bf16.mxu0 0
  %1092 = vmatpush1.bf16.msra.mxu0 0
  %1093 = vmatprep.mubr.bf16.mxu0 0
  %1094 = vmatmul.mubr.bf16.gmra.mrb[0].mxu0 %v1035
  %v1095 = vpop.f32.mrb[0].mxu0
  %v1096 = vadd.f32 %v932, %v1095
  %v1097 = vpop.f32.mrb[0].mxu0
  %v1098 = vpop.f32.mrb[0].mxu0
  %v1099 = vadd.f32 %v935, %v1098
  %v1100 = vpop.f32.mrb[0].mxu0
  %1101 = vmatprep.mubr.bf16.mxu0 0
  %1102 = vmatmul.mubr.bf16.gmra.mrb[0].mxu0 %v1038
  %v1103 = vpop.f32.mrb[0].mxu0
  %v1104 = vadd.f32 %v940, %v1103
  %v1105 = vpop.f32.mrb[0].mxu0
  %v1106 = vpop.f32.mrb[0].mxu0
  %v1107 = vadd.f32 %v943, %v1106
  %v1108 = vpop.f32.mrb[0].mxu0
  %1109 = vmatprep.mubr.bf16.mxu0 0
  %1110 = vmatmul.mubr.bf16.gmra.mrb[0].mxu0 %v1041
  %v1111 = vpop.f32.mrb[0].mxu0
  %v1112 = vadd.f32 %v948, %v1111
  %v1113 = vpop.f32.mrb[0].mxu0
  %v1114 = vpop.f32.mrb[0].mxu0
  %v1115 = vadd.f32 %v951, %v1114
  %v1116 = vpop.f32.mrb[0].mxu0
  %1117 = vmatprep.mubr.bf16.mxu0 0
  %1118 = vmatmul.mubr.bf16.gmra.mrb[0].mxu0 %v1044
  %v1119 = vpop.f32.mrb[0].mxu0
  %v1120 = vadd.f32 %v956, %v1119
  %v1121 = vpop.f32.mrb[0].mxu0
  %v1122 = vpop.f32.mrb[0].mxu0
  %v1123 = vadd.f32 %v959, %v1122
  %v1124 = vpop.f32.mrb[0].mxu0
  %1125 = vmatprep.mubr.bf16.mxu0 0
  %1126 = vmatmul.mubr.bf16.gmra.mrb[0].mxu0 %v1047
  %v1127 = vpop.f32.mrb[0].mxu0
  %v1128 = vadd.f32 %v964, %v1127
  %v1129 = vpop.f32.mrb[0].mxu0
  %v1130 = vpop.f32.mrb[0].mxu0
  %v1131 = vadd.f32 %v967, %v1130
  %v1132 = vpop.f32.mrb[0].mxu0
  %1133 = vmatprep.mubr.bf16.mxu0 0
  %1134 = vmatmul.mubr.bf16.gmra.mrb[0].mxu0 %v1050
  %v1135 = vpop.f32.mrb[0].mxu0
  %v1136 = vadd.f32 %v972, %v1135
  %v1137 = vpop.f32.mrb[0].mxu0
  %v1138 = vpop.f32.mrb[0].mxu0
  %v1139 = vadd.f32 %v975, %v1138
  %v1140 = vpop.f32.mrb[0].mxu0
  %1141 = vmatprep.mubr.bf16.mxu0 0
  %1142 = vmatmul.mubr.bf16.gmra.mrb[0].mxu0 %v1053
  %v1143 = vpop.f32.mrb[0].mxu0
  %v1144 = vadd.f32 %v980, %v1143
  %v1145 = vpop.f32.mrb[0].mxu0
  %v1146 = vpop.f32.mrb[0].mxu0
  %v1147 = vadd.f32 %v983, %v1146
  %v1148 = vpop.f32.mrb[0].mxu0
  %1149 = vmatprep.mubr.bf16.mxu0 0
  %1150 = vmatmul.mubr.bf16.gmra.mrb[0].mxu0 %v1056
  %v1151 = vpop.f32.mrb[0].mxu0
  %v1152 = vadd.f32 %v988, %v1151
  %v1153 = vpop.f32.mrb[0].mxu0
  %v1154 = vpop.f32.mrb[0].mxu0
  %v1155 = vadd.f32 %v991, %v1154
  %v1156 = vpop.f32.mrb[0].mxu0
  %1157 = vdwg.mxu0
  %v1158 = vld [vmem:[#allocation2] sm:$0xe]
  %v1159 = vld [vmem:[#allocation2 + $0x8] sm:$0xe]
  %v1160 = vld [vmem:[#allocation2 + $0x10] sm:$0xe]
  %v1161 = vld [vmem:[#allocation2 + $0x18] sm:$0xe]
  %v1162 = vld [vmem:[#allocation2 + $0x20] sm:$0xe]
  %v1163 = vld [vmem:[#allocation2 + $0x28] sm:$0xe]
  %v1164 = vld [vmem:[#allocation2 + $0x30] sm:$0xe]
  %v1165 = vld [vmem:[#allocation2 + $0x38] sm:$0xe]
  %v1166 = vld [vmem:[#allocation2 + $0x50] sm:$0xe]
  %v1167 = vld [vmem:[#allocation2 + $0x58] sm:$0xe]
  %v1168 = vld [vmem:[#allocation2 + $0x60] sm:$0xe]
  %v1169 = vld [vmem:[#allocation2 + $0x68] sm:$0xe]
  %v1170 = vld [vmem:[#allocation2 + $0x70] sm:$0xe]
  %v1171 = vld [vmem:[#allocation2 + $0x78] sm:$0xe]
  %v1172 = vld [vmem:[#allocation2 + $0x80] sm:$0xe]
  %v1173 = vld [vmem:[#allocation2 + $0x88] sm:$0xe]
  %vm1206 = vcmask 1042432
  %vm1207 = vcmask 1046532
  %vm1208 = vmor %vm1206, %vm1207
  %v1209 = vrot.slane %v1158, 5
  %v1210 = vrot.slane %v1209, 4
  %v1211 = vrot.slane %v599, 5
  %v1212 = vsel %vm1208, %v1210, %v1211
  %v1213 = vrot.slane %v1159, 5
  %v1214 = vrot.slane %v1213, 4
  %v1215 = vrot.slane %v600, 5
  %v1216 = vsel %vm1208, %v1214, %v1215
  %v1217 = vrot.slane %v1160, 5
  %v1218 = vrot.slane %v1217, 4
  %v1219 = vrot.slane %v601, 5
  %v1220 = vsel %vm1208, %v1218, %v1219
  %v1221 = vrot.slane %v1161, 5
  %v1222 = vrot.slane %v1221, 4
  %v1223 = vrot.slane %v602, 5
  %v1224 = vsel %vm1208, %v1222, %v1223
  %v1225 = vrot.slane %v1162, 5
  %v1226 = vrot.slane %v1225, 4
  %v1227 = vrot.slane %v603, 5
  %v1228 = vsel %vm1208, %v1226, %v1227
  %v1229 = vrot.slane %v1163, 5
  %v1230 = vrot.slane %v1229, 4
  %v1231 = vrot.slane %v604, 5
  %v1232 = vsel %vm1208, %v1230, %v1231
  %v1233 = vrot.slane %v1164, 5
  %v1234 = vrot.slane %v1233, 4
  %v1235 = vrot.slane %v605, 5
  %v1236 = vsel %vm1208, %v1234, %v1235
  %v1237 = vrot.slane %v1165, 5
  %v1238 = vrot.slane %v1237, 4
  %v1239 = vrot.slane %v606, 5
  %v1240 = vsel %vm1208, %v1238, %v1239
  %v1241 = vrot.slane %v1166, 5
  %v1242 = vrot.slane %v1241, 4
  %v1243 = vrot.slane %v607, 5
  %v1244 = vsel %vm1208, %v1242, %v1243
  %v1245 = vrot.slane %v1167, 5
  %v1246 = vrot.slane %v1245, 4
  %v1247 = vrot.slane %v608, 5
  %v1248 = vsel %vm1208, %v1246, %v1247
  %v1249 = vrot.slane %v1168, 5
  %v1250 = vrot.slane %v1249, 4
  %v1251 = vrot.slane %v609, 5
  %v1252 = vsel %vm1208, %v1250, %v1251
  %v1253 = vrot.slane %v1169, 5
  %v1254 = vrot.slane %v1253, 4
  %v1255 = vrot.slane %v610, 5
  %v1256 = vsel %vm1208, %v1254, %v1255
  %v1257 = vrot.slane %v1170, 5
  %v1258 = vrot.slane %v1257, 4
  %v1259 = vrot.slane %v611, 5
  %v1260 = vsel %vm1208, %v1258, %v1259
  %v1261 = vrot.slane %v1171, 5
  %v1262 = vrot.slane %v1261, 4
  %v1263 = vrot.slane %v612, 5
  %v1264 = vsel %vm1208, %v1262, %v1263
  %v1265 = vrot.slane %v1172, 5
  %v1266 = vrot.slane %v1265, 4
  %v1267 = vrot.slane %v613, 5
  %v1268 = vsel %vm1208, %v1266, %v1267
  %v1269 = vrot.slane %v1173, 5
  %v1270 = vrot.slane %v1269, 4
  %v1271 = vrot.slane %v614, 5
  %v1272 = vsel %vm1208, %v1270, %v1271
  %s1273 = scalar_lea.vmem %s1, 4
  %v1274 = vld [vmem:[%s1273] sm:$0x3]
  %v1275 = vunpack.c.l.b16 %v1212
  %v1276 = vunpack.c.l.b16 %v1216
  %v1277 = vunpack.c.l.b16 %v1220
  %v1278 = vunpack.c.l.b16 %v1224
  %v1279 = vunpack.c.l.b16 %v1228
  %v1280 = vunpack.c.l.b16 %v1232
  %v1281 = vunpack.c.l.b16 %v1236
  %v1282 = vunpack.c.l.b16 %v1240
  %v1283 = vunpack.c.l.b16 %v1244
  %v1284 = vunpack.c.l.b16 %v1248
  %v1285 = vunpack.c.l.b16 %v1252
  %v1286 = vunpack.c.l.b16 %v1256
  %v1287 = vunpack.c.l.b16 %v1260
  %v1288 = vunpack.c.l.b16 %v1264
  %v1289 = vunpack.c.l.b16 %v1268
  %v1290 = vunpack.c.l.b16 %v1272
  %v1291 = vpack.c.b16 %v1276, %v1275
  %v1292 = vpack.c.b16 %v1278, %v1277
  %v1293 = vpack.c.b16 %v1280, %v1279
  %v1294 = vpack.c.b16 %v1282, %v1281
  %v1295 = vpack.c.b16 %v1284, %v1283
  %v1296 = vpack.c.b16 %v1286, %v1285
  %v1297 = vpack.c.b16 %v1288, %v1287
  %v1298 = vpack.c.b16 %v1290, %v1289
  %v1300 = vsel %vm868, %v1291, 0
  %v1303 = vsel %vm868, %v1292, 0
  %v1306 = vsel %vm868, %v1293, 0
  %v1309 = vsel %vm868, %v1294, 0
  %v1312 = vsel %vm868, %v1295, 0
  %v1315 = vsel %vm868, %v1296, 0
  %v1318 = vsel %vm868, %v1297, 0
  %v1321 = vsel %vm868, %v1298, 0
  %v1324 = vsel %vm893, %v1274, 0
  %1326 = vmatprep.subr.bf16.mxu0 0
  %1327 = vmatpush1.bf16.msra.mxu0 %v1324
  %1328 = vmatprep.subr.bf16.mxu0 0
  %1329 = vmatpush1.bf16.msra.mxu0 0
  %1330 = vmatprep.subr.bf16.mxu0 0
  %1331 = vmatpush1.bf16.msra.mxu0 0
  %1332 = vmatprep.subr.bf16.mxu0 0
  %1333 = vmatpush1.bf16.msra.mxu0 0
  %1334 = vmatprep.subr.bf16.mxu0 0
  %1335 = vmatpush1.bf16.msra.mxu0 0
  %1336 = vmatprep.subr.bf16.mxu0 0
  %1337 = vmatpush1.bf16.msra.mxu0 0
  %1338 = vmatprep.subr.bf16.mxu0 0
  %1339 = vmatpush1.bf16.msra.mxu0 0
  %1340 = vmatprep.subr.bf16.mxu0 0
  %1341 = vmatpush1.bf16.msra.mxu0 0
  %1342 = vmatprep.subr.bf16.mxu0 0
  %1343 = vmatpush1.bf16.msra.mxu0 0
  %1344 = vmatprep.subr.bf16.mxu0 0
  %1345 = vmatpush1.bf16.msra.mxu0 0
  %1346 = vmatprep.subr.bf16.mxu0 0
  %1347 = vmatpush1.bf16.msra.mxu0 0
  %1348 = vmatprep.subr.bf16.mxu0 0
  %1349 = vmatpush1.bf16.msra.mxu0 0
  %1350 = vmatprep.subr.bf16.mxu0 0
  %1351 = vmatpush1.bf16.msra.mxu0 0
  %1352 = vmatprep.subr.bf16.mxu0 0
  %1353 = vmatpush1.bf16.msra.mxu0 0
  %1354 = vmatprep.subr.bf16.mxu0 0
  %1355 = vmatpush1.bf16.msra.mxu0 0
  %1356 = vmatprep.subr.bf16.mxu0 0
  %1357 = vmatpush1.bf16.msra.mxu0 0
  %1358 = vmatprep.mubr.bf16.mxu0 0
  %1359 = vmatmul.mubr.bf16.gmra.mrb[0].mxu0 %v1300
  %v1360 = vpop.f32.mrb[0].mxu0
  %v1361 = vadd.f32 0.0, %v1360
  %v1362 = vpop.f32.mrb[0].mxu0
  %v1363 = vpop.f32.mrb[0].mxu0
  %v1364 = vadd.f32 0.0, %v1363
  %v1365 = vpop.f32.mrb[0].mxu0
  %1366 = vmatprep.mubr.bf16.mxu0 0
  %1367 = vmatmul.mubr.bf16.gmra.mrb[0].mxu0 %v1303
  %v1368 = vpop.f32.mrb[0].mxu0
  %v1369 = vadd.f32 0.0, %v1368
  %v1370 = vpop.f32.mrb[0].mxu0
  %v1371 = vpop.f32.mrb[0].mxu0
  %v1372 = vadd.f32 0.0, %v1371
  %v1373 = vpop.f32.mrb[0].mxu0
  %1374 = vmatprep.mubr.bf16.mxu0 0
  %1375 = vmatmul.mubr.bf16.gmra.mrb[0].mxu0 %v1306
  %v1376 = vpop.f32.mrb[0].mxu0
  %v1377 = vadd.f32 0.0, %v1376
  %v1378 = vpop.f32.mrb[0].mxu0
  %v1379 = vpop.f32.mrb[0].mxu0
  %v1380 = vadd.f32 0.0, %v1379
  %v1381 = vpop.f32.mrb[0].mxu0
  %1382 = vmatprep.mubr.bf16.mxu0 0
  %1383 = vmatmul.mubr.bf16.gmra.mrb[0].mxu0 %v1309
  %v1384 = vpop.f32.mrb[0].mxu0
  %v1385 = vadd.f32 0.0, %v1384
  %v1386 = vpop.f32.mrb[0].mxu0
  %v1387 = vpop.f32.mrb[0].mxu0
  %v1388 = vadd.f32 0.0, %v1387
  %v1389 = vpop.f32.mrb[0].mxu0
  %1390 = vmatprep.mubr.bf16.mxu0 0
  %1391 = vmatmul.mubr.bf16.gmra.mrb[0].mxu0 %v1312
  %v1392 = vpop.f32.mrb[0].mxu0
  %v1393 = vadd.f32 0.0, %v1392
  %v1394 = vpop.f32.mrb[0].mxu0
  %v1395 = vpop.f32.mrb[0].mxu0
  %v1396 = vadd.f32 0.0, %v1395
  %v1397 = vpop.f32.mrb[0].mxu0
  %1398 = vmatprep.mubr.bf16.mxu0 0
  %1399 = vmatmul.mubr.bf16.gmra.mrb[0].mxu0 %v1315
  %v1400 = vpop.f32.mrb[0].mxu0
  %v1401 = vadd.f32 0.0, %v1400
  %v1402 = vpop.f32.mrb[0].mxu0
  %v1403 = vpop.f32.mrb[0].mxu0
  %v1404 = vadd.f32 0.0, %v1403
  %v1405 = vpop.f32.mrb[0].mxu0
  %1406 = vmatprep.mubr.bf16.mxu0 0
  %1407 = vmatmul.mubr.bf16.gmra.mrb[0].mxu0 %v1318
  %v1408 = vpop.f32.mrb[0].mxu0
  %v1409 = vadd.f32 0.0, %v1408
  %v1410 = vpop.f32.mrb[0].mxu0
  %v1411 = vpop.f32.mrb[0].mxu0
  %v1412 = vadd.f32 0.0, %v1411
  %v1413 = vpop.f32.mrb[0].mxu0
  %1414 = vmatprep.mubr.bf16.mxu0 0
  %1415 = vmatmul.mubr.bf16.gmra.mrb[0].mxu0 %v1321
  %v1416 = vpop.f32.mrb[0].mxu0
  %v1417 = vadd.f32 0.0, %v1416
  %v1418 = vpop.f32.mrb[0].mxu0
  %v1419 = vpop.f32.mrb[0].mxu0
  %v1420 = vadd.f32 0.0, %v1419
  %v1421 = vpop.f32.mrb[0].mxu0
  %1422 = vdwg.mxu0
  %v1423 = vadd.f32 %v1096, %v1361
  %v1424 = vadd.f32 %v1099, %v1364
  %v1425 = vadd.f32 %v1104, %v1369
  %v1426 = vadd.f32 %v1107, %v1372
  %v1427 = vadd.f32 %v1112, %v1377
  %v1428 = vadd.f32 %v1115, %v1380
  %v1429 = vadd.f32 %v1120, %v1385
  %v1430 = vadd.f32 %v1123, %v1388
  %v1431 = vadd.f32 %v1128, %v1393
  %v1432 = vadd.f32 %v1131, %v1396
  %v1433 = vadd.f32 %v1136, %v1401
  %v1434 = vadd.f32 %v1139, %v1404
  %v1435 = vadd.f32 %v1144, %v1409
  %v1436 = vadd.f32 %v1147, %v1412
  %v1437 = vadd.f32 %v1152, %v1417
  %v1438 = vadd.f32 %v1155, %v1420
  %v1439 = vld [vmem:[%s293] sm:$0xf]
  %v1440 = vld [vmem:[%s293 + $0x8] sm:$0xf]
  %v1441 = vld [vmem:[%s293 + $0x10] sm:$0xf]
  %v1442 = vld [vmem:[%s293 + $0x18] sm:$0xf]
  %v1443 = vld [vmem:[%s293 + $0x20] sm:$0xf]
  %v1444 = vld [vmem:[%s293 + $0x28] sm:$0xf]
  %v1445 = vld [vmem:[%s293 + $0x30] sm:$0xf]
  %v1446 = vld [vmem:[%s293 + $0x38] sm:$0xf]
  %v1447 = vld [vmem:[%s293 + $0x50] sm:$0xf]
  %v1448 = vld [vmem:[%s293 + $0x58] sm:$0xf]
  %v1449 = vld [vmem:[%s293 + $0x60] sm:$0xf]
  %v1450 = vld [vmem:[%s293 + $0x68] sm:$0xf]
  %v1451 = vld [vmem:[%s293 + $0x70] sm:$0xf]
  %v1452 = vld [vmem:[%s293 + $0x78] sm:$0xf]
  %v1453 = vld [vmem:[%s293 + $0x80] sm:$0xf]
  %v1454 = vld [vmem:[%s293 + $0x88] sm:$0xf]
  %s1455 = scalar_lea.vmem %s1, 6
  %v1456 = vld [vmem:[%s1455] sm:$0x3]
  %v1473 = vunpack.c.l.b16 %v1439
  %v1474 = vunpack.c.l.b16 %v1440
  %v1475 = vunpack.c.l.b16 %v1441
  %v1476 = vunpack.c.l.b16 %v1442
  %v1477 = vunpack.c.l.b16 %v1443
  %v1478 = vunpack.c.l.b16 %v1444
  %v1479 = vunpack.c.l.b16 %v1445
  %v1480 = vunpack.c.l.b16 %v1446
  %v1481 = vunpack.c.l.b16 %v1447
  %v1482 = vunpack.c.l.b16 %v1448
  %v1483 = vunpack.c.l.b16 %v1449
  %v1484 = vunpack.c.l.b16 %v1450
  %v1485 = vunpack.c.l.b16 %v1451
  %v1486 = vunpack.c.l.b16 %v1452
  %v1487 = vunpack.c.l.b16 %v1453
  %v1488 = vunpack.c.l.b16 %v1454
  %v1489 = vpack.c.b16 %v1474, %v1473
  %v1490 = vpack.c.b16 %v1476, %v1475
  %v1491 = vpack.c.b16 %v1478, %v1477
  %v1492 = vpack.c.b16 %v1480, %v1479
  %v1493 = vpack.c.b16 %v1482, %v1481
  %v1494 = vpack.c.b16 %v1484, %v1483
  %v1495 = vpack.c.b16 %v1486, %v1485
  %v1496 = vpack.c.b16 %v1488, %v1487
  %v1498 = vsel %vm868, %v1489, 0
  %v1501 = vsel %vm868, %v1490, 0
  %v1504 = vsel %vm868, %v1491, 0
  %v1507 = vsel %vm868, %v1492, 0
  %v1510 = vsel %vm868, %v1493, 0
  %v1513 = vsel %vm868, %v1494, 0
  %v1516 = vsel %vm868, %v1495, 0
  %v1519 = vsel %vm868, %v1496, 0
  %v1522 = vsel %vm893, %v1456, 0
  %1524 = vmatprep.subr.bf16.mxu0 0
  %1525 = vmatpush1.bf16.msra.mxu0 %v1522
  %1526 = vmatprep.subr.bf16.mxu0 0
  %1527 = vmatpush1.bf16.msra.mxu0 0
  %1528 = vmatprep.subr.bf16.mxu0 0
  %1529 = vmatpush1.bf16.msra.mxu0 0
  %1530 = vmatprep.subr.bf16.mxu0 0
  %1531 = vmatpush1.bf16.msra.mxu0 0
  %1532 = vmatprep.subr.bf16.mxu0 0
  %1533 = vmatpush1.bf16.msra.mxu0 0
  %1534 = vmatprep.subr.bf16.mxu0 0
  %1535 = vmatpush1.bf16.msra.mxu0 0
  %1536 = vmatprep.subr.bf16.mxu0 0
  %1537 = vmatpush1.bf16.msra.mxu0 0
  %1538 = vmatprep.subr.bf16.mxu0 0
  %1539 = vmatpush1.bf16.msra.mxu0 0
  %1540 = vmatprep.subr.bf16.mxu0 0
  %1541 = vmatpush1.bf16.msra.mxu0 0
  %1542 = vmatprep.subr.bf16.mxu0 0
  %1543 = vmatpush1.bf16.msra.mxu0 0
  %1544 = vmatprep.subr.bf16.mxu0 0
  %1545 = vmatpush1.bf16.msra.mxu0 0
  %1546 = vmatprep.subr.bf16.mxu0 0
  %1547 = vmatpush1.bf16.msra.mxu0 0
  %1548 = vmatprep.subr.bf16.mxu0 0
  %1549 = vmatpush1.bf16.msra.mxu0 0
  %1550 = vmatprep.subr.bf16.mxu0 0
  %1551 = vmatpush1.bf16.msra.mxu0 0
  %1552 = vmatprep.subr.bf16.mxu0 0
  %1553 = vmatpush1.bf16.msra.mxu0 0
  %1554 = vmatprep.subr.bf16.mxu0 0
  %1555 = vmatpush1.bf16.msra.mxu0 0
  %1556 = vmatprep.mubr.bf16.mxu0 0
  %1557 = vmatmul.mubr.bf16.gmra.mrb[0].mxu0 %v1498
  %v1558 = vpop.f32.mrb[0].mxu0
  %v1559 = vadd.f32 0.0, %v1558
  %v1560 = vpop.f32.mrb[0].mxu0
  %v1561 = vpop.f32.mrb[0].mxu0
  %v1562 = vadd.f32 0.0, %v1561
  %v1563 = vpop.f32.mrb[0].mxu0
  %1564 = vmatprep.mubr.bf16.mxu0 0
  %1565 = vmatmul.mubr.bf16.gmra.mrb[0].mxu0 %v1501
  %v1566 = vpop.f32.mrb[0].mxu0
  %v1567 = vadd.f32 0.0, %v1566
  %v1568 = vpop.f32.mrb[0].mxu0
  %v1569 = vpop.f32.mrb[0].mxu0
  %v1570 = vadd.f32 0.0, %v1569
  %v1571 = vpop.f32.mrb[0].mxu0
  %1572 = vmatprep.mubr.bf16.mxu0 0
  %1573 = vmatmul.mubr.bf16.gmra.mrb[0].mxu0 %v1504
  %v1574 = vpop.f32.mrb[0].mxu0
  %v1575 = vadd.f32 0.0, %v1574
  %v1576 = vpop.f32.mrb[0].mxu0
  %v1577 = vpop.f32.mrb[0].mxu0
  %v1578 = vadd.f32 0.0, %v1577
  %v1579 = vpop.f32.mrb[0].mxu0
  %1580 = vmatprep.mubr.bf16.mxu0 0
  %1581 = vmatmul.mubr.bf16.gmra.mrb[0].mxu0 %v1507
  %v1582 = vpop.f32.mrb[0].mxu0
  %v1583 = vadd.f32 0.0, %v1582
  %v1584 = vpop.f32.mrb[0].mxu0
  %v1585 = vpop.f32.mrb[0].mxu0
  %v1586 = vadd.f32 0.0, %v1585
  %v1587 = vpop.f32.mrb[0].mxu0
  %1588 = vmatprep.mubr.bf16.mxu0 0
  %1589 = vmatmul.mubr.bf16.gmra.mrb[0].mxu0 %v1510
  %v1590 = vpop.f32.mrb[0].mxu0
  %v1591 = vadd.f32 0.0, %v1590
  %v1592 = vpop.f32.mrb[0].mxu0
  %v1593 = vpop.f32.mrb[0].mxu0
  %v1594 = vadd.f32 0.0, %v1593
  %v1595 = vpop.f32.mrb[0].mxu0
  %1596 = vmatprep.mubr.bf16.mxu0 0
  %1597 = vmatmul.mubr.bf16.gmra.mrb[0].mxu0 %v1513
  %v1598 = vpop.f32.mrb[0].mxu0
  %v1599 = vadd.f32 0.0, %v1598
  %v1600 = vpop.f32.mrb[0].mxu0
  %v1601 = vpop.f32.mrb[0].mxu0
  %v1602 = vadd.f32 0.0, %v1601
  %v1603 = vpop.f32.mrb[0].mxu0
  %1604 = vmatprep.mubr.bf16.mxu0 0
  %1605 = vmatmul.mubr.bf16.gmra.mrb[0].mxu0 %v1516
  %v1606 = vpop.f32.mrb[0].mxu0
  %v1607 = vadd.f32 0.0, %v1606
  %v1608 = vpop.f32.mrb[0].mxu0
  %v1609 = vpop.f32.mrb[0].mxu0
  %v1610 = vadd.f32 0.0, %v1609
  %v1611 = vpop.f32.mrb[0].mxu0
  %1612 = vmatprep.mubr.bf16.mxu0 0
  %1613 = vmatmul.mubr.bf16.gmra.mrb[0].mxu0 %v1519
  %v1614 = vpop.f32.mrb[0].mxu0
  %v1615 = vadd.f32 0.0, %v1614
  %v1616 = vpop.f32.mrb[0].mxu0
  %v1617 = vpop.f32.mrb[0].mxu0
  %v1618 = vadd.f32 0.0, %v1617
  %v1619 = vpop.f32.mrb[0].mxu0
  %1620 = vdwg.mxu0
  %v1621 = vadd.f32 %v1423, %v1559
  %v1622 = vadd.f32 %v1424, %v1562
  %v1623 = vadd.f32 %v1425, %v1567
  %v1624 = vadd.f32 %v1426, %v1570
  %v1625 = vadd.f32 %v1427, %v1575
  %v1626 = vadd.f32 %v1428, %v1578
  %v1627 = vadd.f32 %v1429, %v1583
  %v1628 = vadd.f32 %v1430, %v1586
  %v1629 = vadd.f32 %v1431, %v1591
  %v1630 = vadd.f32 %v1432, %v1594
  %v1631 = vadd.f32 %v1433, %v1599
  %v1632 = vadd.f32 %v1434, %v1602
  %v1633 = vadd.f32 %v1435, %v1607
  %v1634 = vadd.f32 %v1436, %v1610
  %v1635 = vadd.f32 %v1437, %v1615
  %v1636 = vadd.f32 %v1438, %v1618
  %v1637 = vld [vmem:[%s293] sm:$0xf]
  %v1638 = vld [vmem:[%s293 + $0x4] sm:$0x1]
  %v1639 = vld [vmem:[%s293 + $0x8] sm:$0xf]
  %v1640 = vld [vmem:[%s293 + $0xc] sm:$0x1]
  %v1641 = vld [vmem:[%s293 + $0x10] sm:$0xf]
  %v1642 = vld [vmem:[%s293 + $0x14] sm:$0x1]
  %v1643 = vld [vmem:[%s293 + $0x18] sm:$0xf]
  %v1644 = vld [vmem:[%s293 + $0x1c] sm:$0x1]
  %v1645 = vld [vmem:[%s293 + $0x20] sm:$0xf]
  %v1646 = vld [vmem:[%s293 + $0x24] sm:$0x1]
  %v1647 = vld [vmem:[%s293 + $0x28] sm:$0xf]
  %v1648 = vld [vmem:[%s293 + $0x2c] sm:$0x1]
  %v1649 = vld [vmem:[%s293 + $0x30] sm:$0xf]
  %v1650 = vld [vmem:[%s293 + $0x34] sm:$0x1]
  %v1651 = vld [vmem:[%s293 + $0x38] sm:$0xf]
  %v1652 = vld [vmem:[%s293 + $0x3c] sm:$0x1]
  %v1653 = vld [vmem:[%s293 + $0x50] sm:$0xf]
  %v1654 = vld [vmem:[%s293 + $0x54] sm:$0x1]
  %v1655 = vld [vmem:[%s293 + $0x58] sm:$0xf]
  %v1656 = vld [vmem:[%s293 + $0x5c] sm:$0x1]
  %v1657 = vld [vmem:[%s293 + $0x60] sm:$0xf]
  %v1658 = vld [vmem:[%s293 + $0x64] sm:$0x1]
  %v1659 = vld [vmem:[%s293 + $0x68] sm:$0xf]
  %v1660 = vld [vmem:[%s293 + $0x6c] sm:$0x1]
  %v1661 = vld [vmem:[%s293 + $0x70] sm:$0xf]
  %v1662 = vld [vmem:[%s293 + $0x74] sm:$0x1]
  %v1663 = vld [vmem:[%s293 + $0x78] sm:$0xf]
  %v1664 = vld [vmem:[%s293 + $0x7c] sm:$0x1]
  %v1665 = vld [vmem:[%s293 + $0x80] sm:$0xf]
  %v1666 = vld [vmem:[%s293 + $0x84] sm:$0x1]
  %v1667 = vld [vmem:[%s293 + $0x88] sm:$0xf]
  %v1668 = vld [vmem:[%s293 + $0x8c] sm:$0x1]
  %v1670 = vshrl.u32 %v1637, 16
  %v1672 = vrot.slane %v1670, 4
  %v1673 = vshll.u32 %v1637, 16
  %v1675 = vrot.slane %v1673, 5
  %v1676 = vor.u32 %v1672, %v1675
  %v1677 = vrot.slane %v1676, 4
  %v1679 = vshll.u32 %v1638, 16
  %v1681 = vrot.slane %v1679, 5
  %v1682 = vsel %vm617, %v1677, %v1681
  %v1684 = vshrl.u32 %v1639, 16
  %v1686 = vrot.slane %v1684, 4
  %v1687 = vshll.u32 %v1639, 16
  %v1689 = vrot.slane %v1687, 5
  %v1690 = vor.u32 %v1686, %v1689
  %v1691 = vrot.slane %v1690, 4
  %v1693 = vshll.u32 %v1640, 16
  %v1695 = vrot.slane %v1693, 5
  %v1696 = vsel %vm617, %v1691, %v1695
  %v1698 = vshrl.u32 %v1641, 16
  %v1700 = vrot.slane %v1698, 4
  %v1701 = vshll.u32 %v1641, 16
  %v1703 = vrot.slane %v1701, 5
  %v1704 = vor.u32 %v1700, %v1703
  %v1705 = vrot.slane %v1704, 4
  %v1707 = vshll.u32 %v1642, 16
  %v1709 = vrot.slane %v1707, 5
  %v1710 = vsel %vm617, %v1705, %v1709
  %v1712 = vshrl.u32 %v1643, 16
  %v1714 = vrot.slane %v1712, 4
  %v1715 = vshll.u32 %v1643, 16
  %v1717 = vrot.slane %v1715, 5
  %v1718 = vor.u32 %v1714, %v1717
  %v1719 = vrot.slane %v1718, 4
  %v1721 = vshll.u32 %v1644, 16
  %v1723 = vrot.slane %v1721, 5
  %v1724 = vsel %vm617, %v1719, %v1723
  %v1726 = vshrl.u32 %v1645, 16
  %v1728 = vrot.slane %v1726, 4
  %v1729 = vshll.u32 %v1645, 16
  %v1731 = vrot.slane %v1729, 5
  %v1732 = vor.u32 %v1728, %v1731
  %v1733 = vrot.slane %v1732, 4
  %v1735 = vshll.u32 %v1646, 16
  %v1737 = vrot.slane %v1735, 5
  %v1738 = vsel %vm617, %v1733, %v1737
  %v1740 = vshrl.u32 %v1647, 16
  %v1742 = vrot.slane %v1740, 4
  %v1743 = vshll.u32 %v1647, 16
  %v1745 = vrot.slane %v1743, 5
  %v1746 = vor.u32 %v1742, %v1745
  %v1747 = vrot.slane %v1746, 4
  %v1749 = vshll.u32 %v1648, 16
  %v1751 = vrot.slane %v1749, 5
  %v1752 = vsel %vm617, %v1747, %v1751
  %v1754 = vshrl.u32 %v1649, 16
  %v1756 = vrot.slane %v1754, 4
  %v1757 = vshll.u32 %v1649, 16
  %v1759 = vrot.slane %v1757, 5
  %v1760 = vor.u32 %v1756, %v1759
  %v1761 = vrot.slane %v1760, 4
  %v1763 = vshll.u32 %v1650, 16
  %v1765 = vrot.slane %v1763, 5
  %v1766 = vsel %vm617, %v1761, %v1765
  %v1768 = vshrl.u32 %v1651, 16
  %v1770 = vrot.slane %v1768, 4
  %v1771 = vshll.u32 %v1651, 16
  %v1773 = vrot.slane %v1771, 5
  %v1774 = vor.u32 %v1770, %v1773
  %v1775 = vrot.slane %v1774, 4
  %v1777 = vshll.u32 %v1652, 16
  %v1779 = vrot.slane %v1777, 5
  %v1780 = vsel %vm617, %v1775, %v1779
  %v1782 = vshrl.u32 %v1653, 16
  %v1784 = vrot.slane %v1782, 4
  %v1785 = vshll.u32 %v1653, 16
  %v1787 = vrot.slane %v1785, 5
  %v1788 = vor.u32 %v1784, %v1787
  %v1789 = vrot.slane %v1788, 4
  %v1791 = vshll.u32 %v1654, 16
  %v1793 = vrot.slane %v1791, 5
  %v1794 = vsel %vm617, %v1789, %v1793
  %v1796 = vshrl.u32 %v1655, 16
  %v1798 = vrot.slane %v1796, 4
  %v1799 = vshll.u32 %v1655, 16
  %v1801 = vrot.slane %v1799, 5
  %v1802 = vor.u32 %v1798, %v1801
  %v1803 = vrot.slane %v1802, 4
  %v1805 = vshll.u32 %v1656, 16
  %v1807 = vrot.slane %v1805, 5
  %v1808 = vsel %vm617, %v1803, %v1807
  %v1810 = vshrl.u32 %v1657, 16
  %v1812 = vrot.slane %v1810, 4
  %v1813 = vshll.u32 %v1657, 16
  %v1815 = vrot.slane %v1813, 5
  %v1816 = vor.u32 %v1812, %v1815
  %v1817 = vrot.slane %v1816, 4
  %v1819 = vshll.u32 %v1658, 16
  %v1821 = vrot.slane %v1819, 5
  %v1822 = vsel %vm617, %v1817, %v1821
  %v1824 = vshrl.u32 %v1659, 16
  %v1826 = vrot.slane %v1824, 4
  %v1827 = vshll.u32 %v1659, 16
  %v1829 = vrot.slane %v1827, 5
  %v1830 = vor.u32 %v1826, %v1829
  %v1831 = vrot.slane %v1830, 4
  %v1833 = vshll.u32 %v1660, 16
  %v1835 = vrot.slane %v1833, 5
  %v1836 = vsel %vm617, %v1831, %v1835
  %v1838 = vshrl.u32 %v1661, 16
  %v1840 = vrot.slane %v1838, 4
  %v1841 = vshll.u32 %v1661, 16
  %v1843 = vrot.slane %v1841, 5
  %v1844 = vor.u32 %v1840, %v1843
  %v1845 = vrot.slane %v1844, 4
  %v1847 = vshll.u32 %v1662, 16
  %v1849 = vrot.slane %v1847, 5
  %v1850 = vsel %vm617, %v1845, %v1849
  %v1852 = vshrl.u32 %v1663, 16
  %v1854 = vrot.slane %v1852, 4
  %v1855 = vshll.u32 %v1663, 16
  %v1857 = vrot.slane %v1855, 5
  %v1858 = vor.u32 %v1854, %v1857
  %v1859 = vrot.slane %v1858, 4
  %v1861 = vshll.u32 %v1664, 16
  %v1863 = vrot.slane %v1861, 5
  %v1864 = vsel %vm617, %v1859, %v1863
  %v1866 = vshrl.u32 %v1665, 16
  %v1868 = vrot.slane %v1866, 4
  %v1869 = vshll.u32 %v1665, 16
  %v1871 = vrot.slane %v1869, 5
  %v1872 = vor.u32 %v1868, %v1871
  %v1873 = vrot.slane %v1872, 4
  %v1875 = vshll.u32 %v1666, 16
  %v1877 = vrot.slane %v1875, 5
  %v1878 = vsel %vm617, %v1873, %v1877
  %v1880 = vshrl.u32 %v1667, 16
  %v1882 = vrot.slane %v1880, 4
  %v1883 = vshll.u32 %v1667, 16
  %v1885 = vrot.slane %v1883, 5
  %v1886 = vor.u32 %v1882, %v1885
  %v1887 = vrot.slane %v1886, 4
  %v1889 = vshll.u32 %v1668, 16
  %v1891 = vrot.slane %v1889, 5
  %v1892 = vsel %vm617, %v1887, %v1891
  %s1893 = scalar_lea.vmem %s1, 8
  %v1894 = vld [vmem:[%s1893] sm:$0x3]
  %v1895 = vunpack.c.l.b16 %v1682
  %v1896 = vunpack.c.l.b16 %v1696
  %v1897 = vunpack.c.l.b16 %v1710
  %v1898 = vunpack.c.l.b16 %v1724
  %v1899 = vunpack.c.l.b16 %v1738
  %v1900 = vunpack.c.l.b16 %v1752
  %v1901 = vunpack.c.l.b16 %v1766
  %v1902 = vunpack.c.l.b16 %v1780
  %v1903 = vunpack.c.l.b16 %v1794
  %v1904 = vunpack.c.l.b16 %v1808
  %v1905 = vunpack.c.l.b16 %v1822
  %v1906 = vunpack.c.l.b16 %v1836
  %v1907 = vunpack.c.l.b16 %v1850
  %v1908 = vunpack.c.l.b16 %v1864
  %v1909 = vunpack.c.l.b16 %v1878
  %v1910 = vunpack.c.l.b16 %v1892
  %v1911 = vpack.c.b16 %v1896, %v1895
  %v1912 = vpack.c.b16 %v1898, %v1897
  %v1913 = vpack.c.b16 %v1900, %v1899
  %v1914 = vpack.c.b16 %v1902, %v1901
  %v1915 = vpack.c.b16 %v1904, %v1903
  %v1916 = vpack.c.b16 %v1906, %v1905
  %v1917 = vpack.c.b16 %v1908, %v1907
  %v1918 = vpack.c.b16 %v1910, %v1909
  %v1920 = vsel %vm868, %v1911, 0
  %v1923 = vsel %vm868, %v1912, 0
  %v1926 = vsel %vm868, %v1913, 0
  %v1929 = vsel %vm868, %v1914, 0
  %v1932 = vsel %vm868, %v1915, 0
  %v1935 = vsel %vm868, %v1916, 0
  %v1938 = vsel %vm868, %v1917, 0
  %v1941 = vsel %vm868, %v1918, 0
  %v1944 = vsel %vm893, %v1894, 0
  %1946 = vmatprep.subr.bf16.mxu0 0
  %1947 = vmatpush1.bf16.msra.mxu0 %v1944
  %1948 = vmatprep.subr.bf16.mxu0 0
  %1949 = vmatpush1.bf16.msra.mxu0 0
  %1950 = vmatprep.subr.bf16.mxu0 0
  %1951 = vmatpush1.bf16.msra.mxu0 0
  %1952 = vmatprep.subr.bf16.mxu0 0
  %1953 = vmatpush1.bf16.msra.mxu0 0
  %1954 = vmatprep.subr.bf16.mxu0 0
  %1955 = vmatpush1.bf16.msra.mxu0 0
  %1956 = vmatprep.subr.bf16.mxu0 0
  %1957 = vmatpush1.bf16.msra.mxu0 0
  %1958 = vmatprep.subr.bf16.mxu0 0
  %1959 = vmatpush1.bf16.msra.mxu0 0
  %1960 = vmatprep.subr.bf16.mxu0 0
  %1961 = vmatpush1.bf16.msra.mxu0 0
  %1962 = vmatprep.subr.bf16.mxu0 0
  %1963 = vmatpush1.bf16.msra.mxu0 0
  %1964 = vmatprep.subr.bf16.mxu0 0
  %1965 = vmatpush1.bf16.msra.mxu0 0
  %1966 = vmatprep.subr.bf16.mxu0 0
  %1967 = vmatpush1.bf16.msra.mxu0 0
  %1968 = vmatprep.subr.bf16.mxu0 0
  %1969 = vmatpush1.bf16.msra.mxu0 0
  %1970 = vmatprep.subr.bf16.mxu0 0
  %1971 = vmatpush1.bf16.msra.mxu0 0
  %1972 = vmatprep.subr.bf16.mxu0 0
  %1973 = vmatpush1.bf16.msra.mxu0 0
  %1974 = vmatprep.subr.bf16.mxu0 0
  %1975 = vmatpush1.bf16.msra.mxu0 0
  %1976 = vmatprep.subr.bf16.mxu0 0
  %1977 = vmatpush1.bf16.msra.mxu0 0
  %1978 = vmatprep.mubr.bf16.mxu0 0
  %1979 = vmatmul.mubr.bf16.gmra.mrb[0].mxu0 %v1920
  %v1980 = vpop.f32.mrb[0].mxu0
  %v1981 = vadd.f32 0.0, %v1980
  %v1982 = vpop.f32.mrb[0].mxu0
  %v1983 = vpop.f32.mrb[0].mxu0
  %v1984 = vadd.f32 0.0, %v1983
  %v1985 = vpop.f32.mrb[0].mxu0
  %1986 = vmatprep.mubr.bf16.mxu0 0
  %1987 = vmatmul.mubr.bf16.gmra.mrb[0].mxu0 %v1923
  %v1988 = vpop.f32.mrb[0].mxu0
  %v1989 = vadd.f32 0.0, %v1988
  %v1990 = vpop.f32.mrb[0].mxu0
  %v1991 = vpop.f32.mrb[0].mxu0
  %v1992 = vadd.f32 0.0, %v1991
  %v1993 = vpop.f32.mrb[0].mxu0
  %1994 = vmatprep.mubr.bf16.mxu0 0
  %1995 = vmatmul.mubr.bf16.gmra.mrb[0].mxu0 %v1926
  %v1996 = vpop.f32.mrb[0].mxu0
  %v1997 = vadd.f32 0.0, %v1996
  %v1998 = vpop.f32.mrb[0].mxu0
  %v1999 = vpop.f32.mrb[0].mxu0
  %v2000 = vadd.f32 0.0, %v1999
  %v2001 = vpop.f32.mrb[0].mxu0
  %2002 = vmatprep.mubr.bf16.mxu0 0
  %2003 = vmatmul.mubr.bf16.gmra.mrb[0].mxu0 %v1929
  %v2004 = vpop.f32.mrb[0].mxu0
  %v2005 = vadd.f32 0.0, %v2004
  %v2006 = vpop.f32.mrb[0].mxu0
  %v2007 = vpop.f32.mrb[0].mxu0
  %v2008 = vadd.f32 0.0, %v2007
  %v2009 = vpop.f32.mrb[0].mxu0
  %2010 = vmatprep.mubr.bf16.mxu0 0
  %2011 = vmatmul.mubr.bf16.gmra.mrb[0].mxu0 %v1932
  %v2012 = vpop.f32.mrb[0].mxu0
  %v2013 = vadd.f32 0.0, %v2012
  %v2014 = vpop.f32.mrb[0].mxu0
  %v2015 = vpop.f32.mrb[0].mxu0
  %v2016 = vadd.f32 0.0, %v2015
  %v2017 = vpop.f32.mrb[0].mxu0
  %2018 = vmatprep.mubr.bf16.mxu0 0
  %2019 = vmatmul.mubr.bf16.gmra.mrb[0].mxu0 %v1935
  %v2020 = vpop.f32.mrb[0].mxu0
  %v2021 = vadd.f32 0.0, %v2020
  %v2022 = vpop.f32.mrb[0].mxu0
  %v2023 = vpop.f32.mrb[0].mxu0
  %v2024 = vadd.f32 0.0, %v2023
  %v2025 = vpop.f32.mrb[0].mxu0
  %2026 = vmatprep.mubr.bf16.mxu0 0
  %2027 = vmatmul.mubr.bf16.gmra.mrb[0].mxu0 %v1938
  %v2028 = vpop.f32.mrb[0].mxu0
  %v2029 = vadd.f32 0.0, %v2028
  %v2030 = vpop.f32.mrb[0].mxu0
  %v2031 = vpop.f32.mrb[0].mxu0
  %v2032 = vadd.f32 0.0, %v2031
  %v2033 = vpop.f32.mrb[0].mxu0
  %2034 = vmatprep.mubr.bf16.mxu0 0
  %2035 = vmatmul.mubr.bf16.gmra.mrb[0].mxu0 %v1941
  %v2036 = vpop.f32.mrb[0].mxu0
  %v2037 = vadd.f32 0.0, %v2036
  %v2038 = vpop.f32.mrb[0].mxu0
  %v2039 = vpop.f32.mrb[0].mxu0
  %v2040 = vadd.f32 0.0, %v2039
  %v2041 = vpop.f32.mrb[0].mxu0
  %2042 = vdwg.mxu0
  %v2043 = vadd.f32 %v1621, %v1981
  %v2044 = vadd.f32 %v1622, %v1984
  %v2045 = vadd.f32 %v1623, %v1989
  %v2046 = vadd.f32 %v1624, %v1992
  %v2047 = vadd.f32 %v1625, %v1997
  %v2048 = vadd.f32 %v1626, %v2000
  %v2049 = vadd.f32 %v1627, %v2005
  %v2050 = vadd.f32 %v1628, %v2008
  %v2051 = vadd.f32 %v1629, %v2013
  %v2052 = vadd.f32 %v1630, %v2016
  %v2053 = vadd.f32 %v1631, %v2021
  %v2054 = vadd.f32 %v1632, %v2024
  %v2055 = vadd.f32 %v1633, %v2029
  %v2056 = vadd.f32 %v1634, %v2032
  %v2057 = vadd.f32 %v1635, %v2037
  %v2058 = vadd.f32 %v1636, %v2040
  %v2059 = vld [vmem:[%s293] sm:$0xe]
  %v2060 = vld [vmem:[%s293 + $0x8] sm:$0xe]
  %v2061 = vld [vmem:[%s293 + $0x10] sm:$0xe]
  %v2062 = vld [vmem:[%s293 + $0x18] sm:$0xe]
  %v2063 = vld [vmem:[%s293 + $0x20] sm:$0xe]
  %v2064 = vld [vmem:[%s293 + $0x28] sm:$0xe]
  %v2065 = vld [vmem:[%s293 + $0x30] sm:$0xe]
  %v2066 = vld [vmem:[%s293 + $0x38] sm:$0xe]
  %v2067 = vld [vmem:[%s293 + $0x50] sm:$0xe]
  %v2068 = vld [vmem:[%s293 + $0x58] sm:$0xe]
  %v2069 = vld [vmem:[%s293 + $0x60] sm:$0xe]
  %v2070 = vld [vmem:[%s293 + $0x68] sm:$0xe]
  %v2071 = vld [vmem:[%s293 + $0x70] sm:$0xe]
  %v2072 = vld [vmem:[%s293 + $0x78] sm:$0xe]
  %v2073 = vld [vmem:[%s293 + $0x80] sm:$0xe]
  %v2074 = vld [vmem:[%s293 + $0x88] sm:$0xe]
  %v2107 = vrot.slane %v2059, 5
  %v2108 = vrot.slane %v2107, 4
  %v2109 = vrot.slane %v1638, 5
  %v2110 = vsel %vm1208, %v2108, %v2109
  %v2111 = vrot.slane %v2060, 5
  %v2112 = vrot.slane %v2111, 4
  %v2113 = vrot.slane %v1640, 5
  %v2114 = vsel %vm1208, %v2112, %v2113
  %v2115 = vrot.slane %v2061, 5
  %v2116 = vrot.slane %v2115, 4
  %v2117 = vrot.slane %v1642, 5
  %v2118 = vsel %vm1208, %v2116, %v2117
  %v2119 = vrot.slane %v2062, 5
  %v2120 = vrot.slane %v2119, 4
  %v2121 = vrot.slane %v1644, 5
  %v2122 = vsel %vm1208, %v2120, %v2121
  %v2123 = vrot.slane %v2063, 5
  %v2124 = vrot.slane %v2123, 4
  %v2125 = vrot.slane %v1646, 5
  %v2126 = vsel %vm1208, %v2124, %v2125
  %v2127 = vrot.slane %v2064, 5
  %v2128 = vrot.slane %v2127, 4
  %v2129 = vrot.slane %v1648, 5
  %v2130 = vsel %vm1208, %v2128, %v2129
  %v2131 = vrot.slane %v2065, 5
  %v2132 = vrot.slane %v2131, 4
  %v2133 = vrot.slane %v1650, 5
  %v2134 = vsel %vm1208, %v2132, %v2133
  %v2135 = vrot.slane %v2066, 5
  %v2136 = vrot.slane %v2135, 4
  %v2137 = vrot.slane %v1652, 5
  %v2138 = vsel %vm1208, %v2136, %v2137
  %v2139 = vrot.slane %v2067, 5
  %v2140 = vrot.slane %v2139, 4
  %v2141 = vrot.slane %v1654, 5
  %v2142 = vsel %vm1208, %v2140, %v2141
  %v2143 = vrot.slane %v2068, 5
  %v2144 = vrot.slane %v2143, 4
  %v2145 = vrot.slane %v1656, 5
  %v2146 = vsel %vm1208, %v2144, %v2145
  %v2147 = vrot.slane %v2069, 5
  %v2148 = vrot.slane %v2147, 4
  %v2149 = vrot.slane %v1658, 5
  %v2150 = vsel %vm1208, %v2148, %v2149
  %v2151 = vrot.slane %v2070, 5
  %v2152 = vrot.slane %v2151, 4
  %v2153 = vrot.slane %v1660, 5
  %v2154 = vsel %vm1208, %v2152, %v2153
  %v2155 = vrot.slane %v2071, 5
  %v2156 = vrot.slane %v2155, 4
  %v2157 = vrot.slane %v1662, 5
  %v2158 = vsel %vm1208, %v2156, %v2157
  %v2159 = vrot.slane %v2072, 5
  %v2160 = vrot.slane %v2159, 4
  %v2161 = vrot.slane %v1664, 5
  %v2162 = vsel %vm1208, %v2160, %v2161
  %v2163 = vrot.slane %v2073, 5
  %v2164 = vrot.slane %v2163, 4
  %v2165 = vrot.slane %v1666, 5
  %v2166 = vsel %vm1208, %v2164, %v2165
  %v2167 = vrot.slane %v2074, 5
  %v2168 = vrot.slane %v2167, 4
  %v2169 = vrot.slane %v1668, 5
  %v2170 = vsel %vm1208, %v2168, %v2169
  %s2171 = scalar_lea.vmem %s1, 10
  %v2172 = vld [vmem:[%s2171] sm:$0x3]
  %v2173 = vunpack.c.l.b16 %v2110
  %v2174 = vunpack.c.l.b16 %v2114
  %v2175 = vunpack.c.l.b16 %v2118
  %v2176 = vunpack.c.l.b16 %v2122
  %v2177 = vunpack.c.l.b16 %v2126
  %v2178 = vunpack.c.l.b16 %v2130
  %v2179 = vunpack.c.l.b16 %v2134
  %v2180 = vunpack.c.l.b16 %v2138
  %v2181 = vunpack.c.l.b16 %v2142
  %v2182 = vunpack.c.l.b16 %v2146
  %v2183 = vunpack.c.l.b16 %v2150
  %v2184 = vunpack.c.l.b16 %v2154
  %v2185 = vunpack.c.l.b16 %v2158
  %v2186 = vunpack.c.l.b16 %v2162
  %v2187 = vunpack.c.l.b16 %v2166
  %v2188 = vunpack.c.l.b16 %v2170
  %v2189 = vpack.c.b16 %v2174, %v2173
  %v2190 = vpack.c.b16 %v2176, %v2175
  %v2191 = vpack.c.b16 %v2178, %v2177
  %v2192 = vpack.c.b16 %v2180, %v2179
  %v2193 = vpack.c.b16 %v2182, %v2181
  %v2194 = vpack.c.b16 %v2184, %v2183
  %v2195 = vpack.c.b16 %v2186, %v2185
  %v2196 = vpack.c.b16 %v2188, %v2187
  %v2198 = vsel %vm868, %v2189, 0
  %v2201 = vsel %vm868, %v2190, 0
  %v2204 = vsel %vm868, %v2191, 0
  %v2207 = vsel %vm868, %v2192, 0
  %v2210 = vsel %vm868, %v2193, 0
  %v2213 = vsel %vm868, %v2194, 0
  %v2216 = vsel %vm868, %v2195, 0
  %v2219 = vsel %vm868, %v2196, 0
  %v2222 = vsel %vm893, %v2172, 0
  %2224 = vmatprep.subr.bf16.mxu0 0
  %2225 = vmatpush1.bf16.msra.mxu0 %v2222
  %2226 = vmatprep.subr.bf16.mxu0 0
  %2227 = vmatpush1.bf16.msra.mxu0 0
  %2228 = vmatprep.subr.bf16.mxu0 0
  %2229 = vmatpush1.bf16.msra.mxu0 0
  %2230 = vmatprep.subr.bf16.mxu0 0
  %2231 = vmatpush1.bf16.msra.mxu0 0
  %2232 = vmatprep.subr.bf16.mxu0 0
  %2233 = vmatpush1.bf16.msra.mxu0 0
  %2234 = vmatprep.subr.bf16.mxu0 0
  %2235 = vmatpush1.bf16.msra.mxu0 0
  %2236 = vmatprep.subr.bf16.mxu0 0
  %2237 = vmatpush1.bf16.msra.mxu0 0
  %2238 = vmatprep.subr.bf16.mxu0 0
  %2239 = vmatpush1.bf16.msra.mxu0 0
  %2240 = vmatprep.subr.bf16.mxu0 0
  %2241 = vmatpush1.bf16.msra.mxu0 0
  %2242 = vmatprep.subr.bf16.mxu0 0
  %2243 = vmatpush1.bf16.msra.mxu0 0
  %2244 = vmatprep.subr.bf16.mxu0 0
  %2245 = vmatpush1.bf16.msra.mxu0 0
  %2246 = vmatprep.subr.bf16.mxu0 0
  %2247 = vmatpush1.bf16.msra.mxu0 0
  %2248 = vmatprep.subr.bf16.mxu0 0
  %2249 = vmatpush1.bf16.msra.mxu0 0
  %2250 = vmatprep.subr.bf16.mxu0 0
  %2251 = vmatpush1.bf16.msra.mxu0 0
  %2252 = vmatprep.subr.bf16.mxu0 0
  %2253 = vmatpush1.bf16.msra.mxu0 0
  %2254 = vmatprep.subr.bf16.mxu0 0
  %2255 = vmatpush1.bf16.msra.mxu0 0
  %2256 = vmatprep.mubr.bf16.mxu0 0
  %2257 = vmatmul.mubr.bf16.gmra.mrb[0].mxu0 %v2198
  %v2258 = vpop.f32.mrb[0].mxu0
  %v2259 = vadd.f32 0.0, %v2258
  %v2260 = vpop.f32.mrb[0].mxu0
  %v2261 = vpop.f32.mrb[0].mxu0
  %v2262 = vadd.f32 0.0, %v2261
  %v2263 = vpop.f32.mrb[0].mxu0
  %2264 = vmatprep.mubr.bf16.mxu0 0
  %2265 = vmatmul.mubr.bf16.gmra.mrb[0].mxu0 %v2201
  %v2266 = vpop.f32.mrb[0].mxu0
  %v2267 = vadd.f32 0.0, %v2266
  %v2268 = vpop.f32.mrb[0].mxu0
  %v2269 = vpop.f32.mrb[0].mxu0
  %v2270 = vadd.f32 0.0, %v2269
  %v2271 = vpop.f32.mrb[0].mxu0
  %2272 = vmatprep.mubr.bf16.mxu0 0
  %2273 = vmatmul.mubr.bf16.gmra.mrb[0].mxu0 %v2204
  %v2274 = vpop.f32.mrb[0].mxu0
  %v2275 = vadd.f32 0.0, %v2274
  %v2276 = vpop.f32.mrb[0].mxu0
  %v2277 = vpop.f32.mrb[0].mxu0
  %v2278 = vadd.f32 0.0, %v2277
  %v2279 = vpop.f32.mrb[0].mxu0
  %2280 = vmatprep.mubr.bf16.mxu0 0
  %2281 = vmatmul.mubr.bf16.gmra.mrb[0].mxu0 %v2207
  %v2282 = vpop.f32.mrb[0].mxu0
  %v2283 = vadd.f32 0.0, %v2282
  %v2284 = vpop.f32.mrb[0].mxu0
  %v2285 = vpop.f32.mrb[0].mxu0
  %v2286 = vadd.f32 0.0, %v2285
  %v2287 = vpop.f32.mrb[0].mxu0
  %2288 = vmatprep.mubr.bf16.mxu0 0
  %2289 = vmatmul.mubr.bf16.gmra.mrb[0].mxu0 %v2210
  %v2290 = vpop.f32.mrb[0].mxu0
  %v2291 = vadd.f32 0.0, %v2290
  %v2292 = vpop.f32.mrb[0].mxu0
  %v2293 = vpop.f32.mrb[0].mxu0
  %v2294 = vadd.f32 0.0, %v2293
  %v2295 = vpop.f32.mrb[0].mxu0
  %2296 = vmatprep.mubr.bf16.mxu0 0
  %2297 = vmatmul.mubr.bf16.gmra.mrb[0].mxu0 %v2213
  %v2298 = vpop.f32.mrb[0].mxu0
  %v2299 = vadd.f32 0.0, %v2298
  %v2300 = vpop.f32.mrb[0].mxu0
  %v2301 = vpop.f32.mrb[0].mxu0
  %v2302 = vadd.f32 0.0, %v2301
  %v2303 = vpop.f32.mrb[0].mxu0
  %2304 = vmatprep.mubr.bf16.mxu0 0
  %2305 = vmatmul.mubr.bf16.gmra.mrb[0].mxu0 %v2216
  %v2306 = vpop.f32.mrb[0].mxu0
  %v2307 = vadd.f32 0.0, %v2306
  %v2308 = vpop.f32.mrb[0].mxu0
  %v2309 = vpop.f32.mrb[0].mxu0
  %v2310 = vadd.f32 0.0, %v2309
  %v2311 = vpop.f32.mrb[0].mxu0
  %2312 = vmatprep.mubr.bf16.mxu0 0
  %2313 = vmatmul.mubr.bf16.gmra.mrb[0].mxu0 %v2219
  %v2314 = vpop.f32.mrb[0].mxu0
  %v2315 = vadd.f32 0.0, %v2314
  %v2316 = vpop.f32.mrb[0].mxu0
  %v2317 = vpop.f32.mrb[0].mxu0
  %v2318 = vadd.f32 0.0, %v2317
  %v2319 = vpop.f32.mrb[0].mxu0
  %2320 = vdwg.mxu0
  %v2321 = vadd.f32 %v2043, %v2259
  %v2322 = vadd.f32 %v2044, %v2262
  %v2323 = vadd.f32 %v2045, %v2267
  %v2324 = vadd.f32 %v2046, %v2270
  %v2325 = vadd.f32 %v2047, %v2275
  %v2326 = vadd.f32 %v2048, %v2278
  %v2327 = vadd.f32 %v2049, %v2283
  %v2328 = vadd.f32 %v2050, %v2286
  %v2329 = vadd.f32 %v2051, %v2291
  %v2330 = vadd.f32 %v2052, %v2294
  %v2331 = vadd.f32 %v2053, %v2299
  %v2332 = vadd.f32 %v2054, %v2302
  %v2333 = vadd.f32 %v2055, %v2307
  %v2334 = vadd.f32 %v2056, %v2310
  %v2335 = vadd.f32 %v2057, %v2315
  %v2336 = vadd.f32 %v2058, %v2318
  %s2337 = scalar_lea.vmem [#allocation2], 16
  %v2338 = vld [vmem:[%s2337] sm:$0xf]
  %v2339 = vld [vmem:[%s2337 + $0x8] sm:$0xf]
  %v2340 = vld [vmem:[%s2337 + $0x10] sm:$0xf]
  %v2341 = vld [vmem:[%s2337 + $0x18] sm:$0xf]
  %v2342 = vld [vmem:[%s2337 + $0x20] sm:$0xf]
  %v2343 = vld [vmem:[%s2337 + $0x28] sm:$0xf]
  %v2344 = vld [vmem:[%s2337 + $0x30] sm:$0xf]
  %v2345 = vld [vmem:[%s2337 + $0x38] sm:$0xf]
  %v2346 = vld [vmem:[%s2337 + $0x50] sm:$0xf]
  %v2347 = vld [vmem:[%s2337 + $0x58] sm:$0xf]
  %v2348 = vld [vmem:[%s2337 + $0x60] sm:$0xf]
  %v2349 = vld [vmem:[%s2337 + $0x68] sm:$0xf]
  %v2350 = vld [vmem:[%s2337 + $0x70] sm:$0xf]
  %v2351 = vld [vmem:[%s2337 + $0x78] sm:$0xf]
  %v2352 = vld [vmem:[%s2337 + $0x80] sm:$0xf]
  %v2353 = vld [vmem:[%s2337 + $0x88] sm:$0xf]
  %s2354 = scalar_lea.vmem %s1, 12
  %v2355 = vld [vmem:[%s2354] sm:$0x3]
  %v2372 = vunpack.c.l.b16 %v2338
  %v2373 = vunpack.c.l.b16 %v2339
  %v2374 = vunpack.c.l.b16 %v2340
  %v2375 = vunpack.c.l.b16 %v2341
  %v2376 = vunpack.c.l.b16 %v2342
  %v2377 = vunpack.c.l.b16 %v2343
  %v2378 = vunpack.c.l.b16 %v2344
  %v2379 = vunpack.c.l.b16 %v2345
  %v2380 = vunpack.c.l.b16 %v2346
  %v2381 = vunpack.c.l.b16 %v2347
  %v2382 = vunpack.c.l.b16 %v2348
  %v2383 = vunpack.c.l.b16 %v2349
  %v2384 = vunpack.c.l.b16 %v2350
  %v2385 = vunpack.c.l.b16 %v2351
  %v2386 = vunpack.c.l.b16 %v2352
  %v2387 = vunpack.c.l.b16 %v2353
  %v2388 = vpack.c.b16 %v2373, %v2372
  %v2389 = vpack.c.b16 %v2375, %v2374
  %v2390 = vpack.c.b16 %v2377, %v2376
  %v2391 = vpack.c.b16 %v2379, %v2378
  %v2392 = vpack.c.b16 %v2381, %v2380
  %v2393 = vpack.c.b16 %v2383, %v2382
  %v2394 = vpack.c.b16 %v2385, %v2384
  %v2395 = vpack.c.b16 %v2387, %v2386
  %v2397 = vsel %vm868, %v2388, 0
  %v2400 = vsel %vm868, %v2389, 0
  %v2403 = vsel %vm868, %v2390, 0
  %v2406 = vsel %vm868, %v2391, 0
  %v2409 = vsel %vm868, %v2392, 0
  %v2412 = vsel %vm868, %v2393, 0
  %v2415 = vsel %vm868, %v2394, 0
  %v2418 = vsel %vm868, %v2395, 0
  %v2421 = vsel %vm893, %v2355, 0
  %2423 = vmatprep.subr.bf16.mxu0 0
  %2424 = vmatpush1.bf16.msra.mxu0 %v2421
  %2425 = vmatprep.subr.bf16.mxu0 0
  %2426 = vmatpush1.bf16.msra.mxu0 0
  %2427 = vmatprep.subr.bf16.mxu0 0
  %2428 = vmatpush1.bf16.msra.mxu0 0
  %2429 = vmatprep.subr.bf16.mxu0 0
  %2430 = vmatpush1.bf16.msra.mxu0 0
  %2431 = vmatprep.subr.bf16.mxu0 0
  %2432 = vmatpush1.bf16.msra.mxu0 0
  %2433 = vmatprep.subr.bf16.mxu0 0
  %2434 = vmatpush1.bf16.msra.mxu0 0
  %2435 = vmatprep.subr.bf16.mxu0 0
  %2436 = vmatpush1.bf16.msra.mxu0 0
  %2437 = vmatprep.subr.bf16.mxu0 0
  %2438 = vmatpush1.bf16.msra.mxu0 0
  %2439 = vmatprep.subr.bf16.mxu0 0
  %2440 = vmatpush1.bf16.msra.mxu0 0
  %2441 = vmatprep.subr.bf16.mxu0 0
  %2442 = vmatpush1.bf16.msra.mxu0 0
  %2443 = vmatprep.subr.bf16.mxu0 0
  %2444 = vmatpush1.bf16.msra.mxu0 0
  %2445 = vmatprep.subr.bf16.mxu0 0
  %2446 = vmatpush1.bf16.msra.mxu0 0
  %2447 = vmatprep.subr.bf16.mxu0 0
  %2448 = vmatpush1.bf16.msra.mxu0 0
  %2449 = vmatprep.subr.bf16.mxu0 0
  %2450 = vmatpush1.bf16.msra.mxu0 0
  %2451 = vmatprep.subr.bf16.mxu0 0
  %2452 = vmatpush1.bf16.msra.mxu0 0
  %2453 = vmatprep.subr.bf16.mxu0 0
  %2454 = vmatpush1.bf16.msra.mxu0 0
  %2455 = vmatprep.mubr.bf16.mxu0 0
  %2456 = vmatmul.mubr.bf16.gmra.mrb[0].mxu0 %v2397
  %v2457 = vpop.f32.mrb[0].mxu0
  %v2458 = vadd.f32 0.0, %v2457
  %v2459 = vpop.f32.mrb[0].mxu0
  %v2460 = vpop.f32.mrb[0].mxu0
  %v2461 = vadd.f32 0.0, %v2460
  %v2462 = vpop.f32.mrb[0].mxu0
  %2463 = vmatprep.mubr.bf16.mxu0 0
  %2464 = vmatmul.mubr.bf16.gmra.mrb[0].mxu0 %v2400
  %v2465 = vpop.f32.mrb[0].mxu0
  %v2466 = vadd.f32 0.0, %v2465
  %v2467 = vpop.f32.mrb[0].mxu0
  %v2468 = vpop.f32.mrb[0].mxu0
  %v2469 = vadd.f32 0.0, %v2468
  %v2470 = vpop.f32.mrb[0].mxu0
  %2471 = vmatprep.mubr.bf16.mxu0 0
  %2472 = vmatmul.mubr.bf16.gmra.mrb[0].mxu0 %v2403
  %v2473 = vpop.f32.mrb[0].mxu0
  %v2474 = vadd.f32 0.0, %v2473
  %v2475 = vpop.f32.mrb[0].mxu0
  %v2476 = vpop.f32.mrb[0].mxu0
  %v2477 = vadd.f32 0.0, %v2476
  %v2478 = vpop.f32.mrb[0].mxu0
  %2479 = vmatprep.mubr.bf16.mxu0 0
  %2480 = vmatmul.mubr.bf16.gmra.mrb[0].mxu0 %v2406
  %v2481 = vpop.f32.mrb[0].mxu0
  %v2482 = vadd.f32 0.0, %v2481
  %v2483 = vpop.f32.mrb[0].mxu0
  %v2484 = vpop.f32.mrb[0].mxu0
  %v2485 = vadd.f32 0.0, %v2484
  %v2486 = vpop.f32.mrb[0].mxu0
  %2487 = vmatprep.mubr.bf16.mxu0 0
  %2488 = vmatmul.mubr.bf16.gmra.mrb[0].mxu0 %v2409
  %v2489 = vpop.f32.mrb[0].mxu0
  %v2490 = vadd.f32 0.0, %v2489
  %v2491 = vpop.f32.mrb[0].mxu0
  %v2492 = vpop.f32.mrb[0].mxu0
  %v2493 = vadd.f32 0.0, %v2492
  %v2494 = vpop.f32.mrb[0].mxu0
  %2495 = vmatprep.mubr.bf16.mxu0 0
  %2496 = vmatmul.mubr.bf16.gmra.mrb[0].mxu0 %v2412
  %v2497 = vpop.f32.mrb[0].mxu0
  %v2498 = vadd.f32 0.0, %v2497
  %v2499 = vpop.f32.mrb[0].mxu0
  %v2500 = vpop.f32.mrb[0].mxu0
  %v2501 = vadd.f32 0.0, %v2500
  %v2502 = vpop.f32.mrb[0].mxu0
  %2503 = vmatprep.mubr.bf16.mxu0 0
  %2504 = vmatmul.mubr.bf16.gmra.mrb[0].mxu0 %v2415
  %v2505 = vpop.f32.mrb[0].mxu0
  %v2506 = vadd.f32 0.0, %v2505
  %v2507 = vpop.f32.mrb[0].mxu0
  %v2508 = vpop.f32.mrb[0].mxu0
  %v2509 = vadd.f32 0.0, %v2508
  %v2510 = vpop.f32.mrb[0].mxu0
  %2511 = vmatprep.mubr.bf16.mxu0 0
  %2512 = vmatmul.mubr.bf16.gmra.mrb[0].mxu0 %v2418
  %v2513 = vpop.f32.mrb[0].mxu0
  %v2514 = vadd.f32 0.0, %v2513
  %v2515 = vpop.f32.mrb[0].mxu0
  %v2516 = vpop.f32.mrb[0].mxu0
  %v2517 = vadd.f32 0.0, %v2516
  %v2518 = vpop.f32.mrb[0].mxu0
  %2519 = vdwg.mxu0
  %v2520 = vadd.f32 %v2321, %v2458
  %v2521 = vadd.f32 %v2322, %v2461
  %v2522 = vadd.f32 %v2323, %v2466
  %v2523 = vadd.f32 %v2324, %v2469
  %v2524 = vadd.f32 %v2325, %v2474
  %v2525 = vadd.f32 %v2326, %v2477
  %v2526 = vadd.f32 %v2327, %v2482
  %v2527 = vadd.f32 %v2328, %v2485
  %v2528 = vadd.f32 %v2329, %v2490
  %v2529 = vadd.f32 %v2330, %v2493
  %v2530 = vadd.f32 %v2331, %v2498
  %v2531 = vadd.f32 %v2332, %v2501
  %v2532 = vadd.f32 %v2333, %v2506
  %v2533 = vadd.f32 %v2334, %v2509
  %v2534 = vadd.f32 %v2335, %v2514
  %v2535 = vadd.f32 %v2336, %v2517
  %v2536 = vld [vmem:[%s2337] sm:$0xf]
  %v2537 = vld [vmem:[%s2337 + $0x4] sm:$0x1]
  %v2538 = vld [vmem:[%s2337 + $0x8] sm:$0xf]
  %v2539 = vld [vmem:[%s2337 + $0xc] sm:$0x1]
  %v2540 = vld [vmem:[%s2337 + $0x10] sm:$0xf]
  %v2541 = vld [vmem:[%s2337 + $0x14] sm:$0x1]
  %v2542 = vld [vmem:[%s2337 + $0x18] sm:$0xf]
  %v2543 = vld [vmem:[%s2337 + $0x1c] sm:$0x1]
  %v2544 = vld [vmem:[%s2337 + $0x20] sm:$0xf]
  %v2545 = vld [vmem:[%s2337 + $0x24] sm:$0x1]
  %v2546 = vld [vmem:[%s2337 + $0x28] sm:$0xf]
  %v2547 = vld [vmem:[%s2337 + $0x2c] sm:$0x1]
  %v2548 = vld [vmem:[%s2337 + $0x30] sm:$0xf]
  %v2549 = vld [vmem:[%s2337 + $0x34] sm:$0x1]
  %v2550 = vld [vmem:[%s2337 + $0x38] sm:$0xf]
  %v2551 = vld [vmem:[%s2337 + $0x3c] sm:$0x1]
  %v2552 = vld [vmem:[%s2337 + $0x50] sm:$0xf]
  %v2553 = vld [vmem:[%s2337 + $0x54] sm:$0x1]
  %v2554 = vld [vmem:[%s2337 + $0x58] sm:$0xf]
  %v2555 = vld [vmem:[%s2337 + $0x5c] sm:$0x1]
  %v2556 = vld [vmem:[%s2337 + $0x60] sm:$0xf]
  %v2557 = vld [vmem:[%s2337 + $0x64] sm:$0x1]
  %v2558 = vld [vmem:[%s2337 + $0x68] sm:$0xf]
  %v2559 = vld [vmem:[%s2337 + $0x6c] sm:$0x1]
  %v2560 = vld [vmem:[%s2337 + $0x70] sm:$0xf]
  %v2561 = vld [vmem:[%s2337 + $0x74] sm:$0x1]
  %v2562 = vld [vmem:[%s2337 + $0x78] sm:$0xf]
  %v2563 = vld [vmem:[%s2337 + $0x7c] sm:$0x1]
  %v2564 = vld [vmem:[%s2337 + $0x80] sm:$0xf]
  %v2565 = vld [vmem:[%s2337 + $0x84] sm:$0x1]
  %v2566 = vld [vmem:[%s2337 + $0x88] sm:$0xf]
  %v2567 = vld [vmem:[%s2337 + $0x8c] sm:$0x1]
  %v2569 = vshrl.u32 %v2536, 16
  %v2571 = vrot.slane %v2569, 4
  %v2572 = vshll.u32 %v2536, 16
  %v2574 = vrot.slane %v2572, 5
  %v2575 = vor.u32 %v2571, %v2574
  %v2576 = vrot.slane %v2575, 4
  %v2578 = vshll.u32 %v2537, 16
  %v2580 = vrot.slane %v2578, 5
  %v2581 = vsel %vm617, %v2576, %v2580
  %v2583 = vshrl.u32 %v2538, 16
  %v2585 = vrot.slane %v2583, 4
  %v2586 = vshll.u32 %v2538, 16
  %v2588 = vrot.slane %v2586, 5
  %v2589 = vor.u32 %v2585, %v2588
  %v2590 = vrot.slane %v2589, 4
  %v2592 = vshll.u32 %v2539, 16
  %v2594 = vrot.slane %v2592, 5
  %v2595 = vsel %vm617, %v2590, %v2594
  %v2597 = vshrl.u32 %v2540, 16
  %v2599 = vrot.slane %v2597, 4
  %v2600 = vshll.u32 %v2540, 16
  %v2602 = vrot.slane %v2600, 5
  %v2603 = vor.u32 %v2599, %v2602
  %v2604 = vrot.slane %v2603, 4
  %v2606 = vshll.u32 %v2541, 16
  %v2608 = vrot.slane %v2606, 5
  %v2609 = vsel %vm617, %v2604, %v2608
  %v2611 = vshrl.u32 %v2542, 16
  %v2613 = vrot.slane %v2611, 4
  %v2614 = vshll.u32 %v2542, 16
  %v2616 = vrot.slane %v2614, 5
  %v2617 = vor.u32 %v2613, %v2616
  %v2618 = vrot.slane %v2617, 4
  %v2620 = vshll.u32 %v2543, 16
  %v2622 = vrot.slane %v2620, 5
  %v2623 = vsel %vm617, %v2618, %v2622
  %v2625 = vshrl.u32 %v2544, 16
  %v2627 = vrot.slane %v2625, 4
  %v2628 = vshll.u32 %v2544, 16
  %v2630 = vrot.slane %v2628, 5
  %v2631 = vor.u32 %v2627, %v2630
  %v2632 = vrot.slane %v2631, 4
  %v2634 = vshll.u32 %v2545, 16
  %v2636 = vrot.slane %v2634, 5
  %v2637 = vsel %vm617, %v2632, %v2636
  %v2639 = vshrl.u32 %v2546, 16
  %v2641 = vrot.slane %v2639, 4
  %v2642 = vshll.u32 %v2546, 16
  %v2644 = vrot.slane %v2642, 5
  %v2645 = vor.u32 %v2641, %v2644
  %v2646 = vrot.slane %v2645, 4
  %v2648 = vshll.u32 %v2547, 16
  %v2650 = vrot.slane %v2648, 5
  %v2651 = vsel %vm617, %v2646, %v2650
  %v2653 = vshrl.u32 %v2548, 16
  %v2655 = vrot.slane %v2653, 4
  %v2656 = vshll.u32 %v2548, 16
  %v2658 = vrot.slane %v2656, 5
  %v2659 = vor.u32 %v2655, %v2658
  %v2660 = vrot.slane %v2659, 4
  %v2662 = vshll.u32 %v2549, 16
  %v2664 = vrot.slane %v2662, 5
  %v2665 = vsel %vm617, %v2660, %v2664
  %v2667 = vshrl.u32 %v2550, 16
  %v2669 = vrot.slane %v2667, 4
  %v2670 = vshll.u32 %v2550, 16
  %v2672 = vrot.slane %v2670, 5
  %v2673 = vor.u32 %v2669, %v2672
  %v2674 = vrot.slane %v2673, 4
  %v2676 = vshll.u32 %v2551, 16
  %v2678 = vrot.slane %v2676, 5
  %v2679 = vsel %vm617, %v2674, %v2678
  %v2681 = vshrl.u32 %v2552, 16
  %v2683 = vrot.slane %v2681, 4
  %v2684 = vshll.u32 %v2552, 16
  %v2686 = vrot.slane %v2684, 5
  %v2687 = vor.u32 %v2683, %v2686
  %v2688 = vrot.slane %v2687, 4
  %v2690 = vshll.u32 %v2553, 16
  %v2692 = vrot.slane %v2690, 5
  %v2693 = vsel %vm617, %v2688, %v2692
  %v2695 = vshrl.u32 %v2554, 16
  %v2697 = vrot.slane %v2695, 4
  %v2698 = vshll.u32 %v2554, 16
  %v2700 = vrot.slane %v2698, 5
  %v2701 = vor.u32 %v2697, %v2700
  %v2702 = vrot.slane %v2701, 4
  %v2704 = vshll.u32 %v2555, 16
  %v2706 = vrot.slane %v2704, 5
  %v2707 = vsel %vm617, %v2702, %v2706
  %v2709 = vshrl.u32 %v2556, 16
  %v2711 = vrot.slane %v2709, 4
  %v2712 = vshll.u32 %v2556, 16
  %v2714 = vrot.slane %v2712, 5
  %v2715 = vor.u32 %v2711, %v2714
  %v2716 = vrot.slane %v2715, 4
  %v2718 = vshll.u32 %v2557, 16
  %v2720 = vrot.slane %v2718, 5
  %v2721 = vsel %vm617, %v2716, %v2720
  %v2723 = vshrl.u32 %v2558, 16
  %v2725 = vrot.slane %v2723, 4
  %v2726 = vshll.u32 %v2558, 16
  %v2728 = vrot.slane %v2726, 5
  %v2729 = vor.u32 %v2725, %v2728
  %v2730 = vrot.slane %v2729, 4
  %v2732 = vshll.u32 %v2559, 16
  %v2734 = vrot.slane %v2732, 5
  %v2735 = vsel %vm617, %v2730, %v2734
  %v2737 = vshrl.u32 %v2560, 16
  %v2739 = vrot.slane %v2737, 4
  %v2740 = vshll.u32 %v2560, 16
  %v2742 = vrot.slane %v2740, 5
  %v2743 = vor.u32 %v2739, %v2742
  %v2744 = vrot.slane %v2743, 4
  %v2746 = vshll.u32 %v2561, 16
  %v2748 = vrot.slane %v2746, 5
  %v2749 = vsel %vm617, %v2744, %v2748
  %v2751 = vshrl.u32 %v2562, 16
  %v2753 = vrot.slane %v2751, 4
  %v2754 = vshll.u32 %v2562, 16
  %v2756 = vrot.slane %v2754, 5
  %v2757 = vor.u32 %v2753, %v2756
  %v2758 = vrot.slane %v2757, 4
  %v2760 = vshll.u32 %v2563, 16
  %v2762 = vrot.slane %v2760, 5
  %v2763 = vsel %vm617, %v2758, %v2762
  %v2765 = vshrl.u32 %v2564, 16
  %v2767 = vrot.slane %v2765, 4
  %v2768 = vshll.u32 %v2564, 16
  %v2770 = vrot.slane %v2768, 5
  %v2771 = vor.u32 %v2767, %v2770
  %v2772 = vrot.slane %v2771, 4
  %v2774 = vshll.u32 %v2565, 16
  %v2776 = vrot.slane %v2774, 5
  %v2777 = vsel %vm617, %v2772, %v2776
  %v2779 = vshrl.u32 %v2566, 16
  %v2781 = vrot.slane %v2779, 4
  %v2782 = vshll.u32 %v2566, 16
  %v2784 = vrot.slane %v2782, 5
  %v2785 = vor.u32 %v2781, %v2784
  %v2786 = vrot.slane %v2785, 4
  %v2788 = vshll.u32 %v2567, 16
  %v2790 = vrot.slane %v2788, 5
  %v2791 = vsel %vm617, %v2786, %v2790
  %s2792 = scalar_lea.vmem %s1, 14
  %v2793 = vld [vmem:[%s2792] sm:$0x3]
  %v2794 = vunpack.c.l.b16 %v2581
  %v2795 = vunpack.c.l.b16 %v2595
  %v2796 = vunpack.c.l.b16 %v2609
  %v2797 = vunpack.c.l.b16 %v2623
  %v2798 = vunpack.c.l.b16 %v2637
  %v2799 = vunpack.c.l.b16 %v2651
  %v2800 = vunpack.c.l.b16 %v2665
  %v2801 = vunpack.c.l.b16 %v2679
  %v2802 = vunpack.c.l.b16 %v2693
  %v2803 = vunpack.c.l.b16 %v2707
  %v2804 = vunpack.c.l.b16 %v2721
  %v2805 = vunpack.c.l.b16 %v2735
  %v2806 = vunpack.c.l.b16 %v2749
  %v2807 = vunpack.c.l.b16 %v2763
  %v2808 = vunpack.c.l.b16 %v2777
  %v2809 = vunpack.c.l.b16 %v2791
  %v2810 = vpack.c.b16 %v2795, %v2794
  %v2811 = vpack.c.b16 %v2797, %v2796
  %v2812 = vpack.c.b16 %v2799, %v2798
  %v2813 = vpack.c.b16 %v2801, %v2800
  %v2814 = vpack.c.b16 %v2803, %v2802
  %v2815 = vpack.c.b16 %v2805, %v2804
  %v2816 = vpack.c.b16 %v2807, %v2806
  %v2817 = vpack.c.b16 %v2809, %v2808
  %v2819 = vsel %vm868, %v2810, 0
  %v2822 = vsel %vm868, %v2811, 0
  %v2825 = vsel %vm868, %v2812, 0
  %v2828 = vsel %vm868, %v2813, 0
  %v2831 = vsel %vm868, %v2814, 0
  %v2834 = vsel %vm868, %v2815, 0
  %v2837 = vsel %vm868, %v2816, 0
  %v2840 = vsel %vm868, %v2817, 0
  %v2843 = vsel %vm893, %v2793, 0
  %2845 = vmatprep.subr.bf16.mxu0 0
  %2846 = vmatpush1.bf16.msra.mxu0 %v2843
  %2847 = vmatprep.subr.bf16.mxu0 0
  %2848 = vmatpush1.bf16.msra.mxu0 0
  %2849 = vmatprep.subr.bf16.mxu0 0
  %2850 = vmatpush1.bf16.msra.mxu0 0
  %2851 = vmatprep.subr.bf16.mxu0 0
  %2852 = vmatpush1.bf16.msra.mxu0 0
  %2853 = vmatprep.subr.bf16.mxu0 0
  %2854 = vmatpush1.bf16.msra.mxu0 0
  %2855 = vmatprep.subr.bf16.mxu0 0
  %2856 = vmatpush1.bf16.msra.mxu0 0
  %2857 = vmatprep.subr.bf16.mxu0 0
  %2858 = vmatpush1.bf16.msra.mxu0 0
  %2859 = vmatprep.subr.bf16.mxu0 0
  %2860 = vmatpush1.bf16.msra.mxu0 0
  %2861 = vmatprep.subr.bf16.mxu0 0
  %2862 = vmatpush1.bf16.msra.mxu0 0
  %2863 = vmatprep.subr.bf16.mxu0 0
  %2864 = vmatpush1.bf16.msra.mxu0 0
  %2865 = vmatprep.subr.bf16.mxu0 0
  %2866 = vmatpush1.bf16.msra.mxu0 0
  %2867 = vmatprep.subr.bf16.mxu0 0
  %2868 = vmatpush1.bf16.msra.mxu0 0
  %2869 = vmatprep.subr.bf16.mxu0 0
  %2870 = vmatpush1.bf16.msra.mxu0 0
  %2871 = vmatprep.subr.bf16.mxu0 0
  %2872 = vmatpush1.bf16.msra.mxu0 0
  %2873 = vmatprep.subr.bf16.mxu0 0
  %2874 = vmatpush1.bf16.msra.mxu0 0
  %2875 = vmatprep.subr.bf16.mxu0 0
  %2876 = vmatpush1.bf16.msra.mxu0 0
  %2877 = vmatprep.mubr.bf16.mxu0 0
  %2878 = vmatmul.mubr.bf16.gmra.mrb[0].mxu0 %v2819
  %v2879 = vpop.f32.mrb[0].mxu0
  %v2880 = vadd.f32 0.0, %v2879
  %v2881 = vpop.f32.mrb[0].mxu0
  %v2882 = vpop.f32.mrb[0].mxu0
  %v2883 = vadd.f32 0.0, %v2882
  %v2884 = vpop.f32.mrb[0].mxu0
  %2885 = vmatprep.mubr.bf16.mxu0 0
  %2886 = vmatmul.mubr.bf16.gmra.mrb[0].mxu0 %v2822
  %v2887 = vpop.f32.mrb[0].mxu0
  %v2888 = vadd.f32 0.0, %v2887
  %v2889 = vpop.f32.mrb[0].mxu0
  %v2890 = vpop.f32.mrb[0].mxu0
  %v2891 = vadd.f32 0.0, %v2890
  %v2892 = vpop.f32.mrb[0].mxu0
  %2893 = vmatprep.mubr.bf16.mxu0 0
  %2894 = vmatmul.mubr.bf16.gmra.mrb[0].mxu0 %v2825
  %v2895 = vpop.f32.mrb[0].mxu0
  %v2896 = vadd.f32 0.0, %v2895
  %v2897 = vpop.f32.mrb[0].mxu0
  %v2898 = vpop.f32.mrb[0].mxu0
  %v2899 = vadd.f32 0.0, %v2898
  %v2900 = vpop.f32.mrb[0].mxu0
  %2901 = vmatprep.mubr.bf16.mxu0 0
  %2902 = vmatmul.mubr.bf16.gmra.mrb[0].mxu0 %v2828
  %v2903 = vpop.f32.mrb[0].mxu0
  %v2904 = vadd.f32 0.0, %v2903
  %v2905 = vpop.f32.mrb[0].mxu0
  %v2906 = vpop.f32.mrb[0].mxu0
  %v2907 = vadd.f32 0.0, %v2906
  %v2908 = vpop.f32.mrb[0].mxu0
  %2909 = vmatprep.mubr.bf16.mxu0 0
  %2910 = vmatmul.mubr.bf16.gmra.mrb[0].mxu0 %v2831
  %v2911 = vpop.f32.mrb[0].mxu0
  %v2912 = vadd.f32 0.0, %v2911
  %v2913 = vpop.f32.mrb[0].mxu0
  %v2914 = vpop.f32.mrb[0].mxu0
  %v2915 = vadd.f32 0.0, %v2914
  %v2916 = vpop.f32.mrb[0].mxu0
  %2917 = vmatprep.mubr.bf16.mxu0 0
  %2918 = vmatmul.mubr.bf16.gmra.mrb[0].mxu0 %v2834
  %v2919 = vpop.f32.mrb[0].mxu0
  %v2920 = vadd.f32 0.0, %v2919
  %v2921 = vpop.f32.mrb[0].mxu0
  %v2922 = vpop.f32.mrb[0].mxu0
  %v2923 = vadd.f32 0.0, %v2922
  %v2924 = vpop.f32.mrb[0].mxu0
  %2925 = vmatprep.mubr.bf16.mxu0 0
  %2926 = vmatmul.mubr.bf16.gmra.mrb[0].mxu0 %v2837
  %v2927 = vpop.f32.mrb[0].mxu0
  %v2928 = vadd.f32 0.0, %v2927
  %v2929 = vpop.f32.mrb[0].mxu0
  %v2930 = vpop.f32.mrb[0].mxu0
  %v2931 = vadd.f32 0.0, %v2930
  %v2932 = vpop.f32.mrb[0].mxu0
  %2933 = vmatprep.mubr.bf16.mxu0 0
  %2934 = vmatmul.mubr.bf16.gmra.mrb[0].mxu0 %v2840
  %v2935 = vpop.f32.mrb[0].mxu0
  %v2936 = vadd.f32 0.0, %v2935
  %v2937 = vpop.f32.mrb[0].mxu0
  %v2938 = vpop.f32.mrb[0].mxu0
  %v2939 = vadd.f32 0.0, %v2938
  %v2940 = vpop.f32.mrb[0].mxu0
  %2941 = vdwg.mxu0
  %v2942 = vadd.f32 %v2520, %v2880
  %v2943 = vadd.f32 %v2521, %v2883
  %v2944 = vadd.f32 %v2522, %v2888
  %v2945 = vadd.f32 %v2523, %v2891
  %v2946 = vadd.f32 %v2524, %v2896
  %v2947 = vadd.f32 %v2525, %v2899
  %v2948 = vadd.f32 %v2526, %v2904
  %v2949 = vadd.f32 %v2527, %v2907
  %v2950 = vadd.f32 %v2528, %v2912
  %v2951 = vadd.f32 %v2529, %v2915
  %v2952 = vadd.f32 %v2530, %v2920
  %v2953 = vadd.f32 %v2531, %v2923
  %v2954 = vadd.f32 %v2532, %v2928
  %v2955 = vadd.f32 %v2533, %v2931
  %v2956 = vadd.f32 %v2534, %v2936
  %v2957 = vadd.f32 %v2535, %v2939
  %v2958 = vld [vmem:[%s2337] sm:$0xe]
  %v2959 = vld [vmem:[%s2337 + $0x8] sm:$0xe]
  %v2960 = vld [vmem:[%s2337 + $0x10] sm:$0xe]
  %v2961 = vld [vmem:[%s2337 + $0x18] sm:$0xe]
  %v2962 = vld [vmem:[%s2337 + $0x20] sm:$0xe]
  %v2963 = vld [vmem:[%s2337 + $0x28] sm:$0xe]
  %v2964 = vld [vmem:[%s2337 + $0x30] sm:$0xe]
  %v2965 = vld [vmem:[%s2337 + $0x38] sm:$0xe]
  %v2966 = vld [vmem:[%s2337 + $0x50] sm:$0xe]
  %v2967 = vld [vmem:[%s2337 + $0x58] sm:$0xe]
  %v2968 = vld [vmem:[%s2337 + $0x60] sm:$0xe]
  %v2969 = vld [vmem:[%s2337 + $0x68] sm:$0xe]
  %v2970 = vld [vmem:[%s2337 + $0x70] sm:$0xe]
  %v2971 = vld [vmem:[%s2337 + $0x78] sm:$0xe]
  %v2972 = vld [vmem:[%s2337 + $0x80] sm:$0xe]
  %v2973 = vld [vmem:[%s2337 + $0x88] sm:$0xe]
  %v3006 = vrot.slane %v2958, 5
  %v3007 = vrot.slane %v3006, 4
  %v3008 = vrot.slane %v2537, 5
  %v3009 = vsel %vm1208, %v3007, %v3008
  %v3010 = vrot.slane %v2959, 5
  %v3011 = vrot.slane %v3010, 4
  %v3012 = vrot.slane %v2539, 5
  %v3013 = vsel %vm1208, %v3011, %v3012
  %v3014 = vrot.slane %v2960, 5
  %v3015 = vrot.slane %v3014, 4
  %v3016 = vrot.slane %v2541, 5
  %v3017 = vsel %vm1208, %v3015, %v3016
  %v3018 = vrot.slane %v2961, 5
  %v3019 = vrot.slane %v3018, 4
  %v3020 = vrot.slane %v2543, 5
  %v3021 = vsel %vm1208, %v3019, %v3020
  %v3022 = vrot.slane %v2962, 5
  %v3023 = vrot.slane %v3022, 4
  %v3024 = vrot.slane %v2545, 5
  %v3025 = vsel %vm1208, %v3023, %v3024
  %v3026 = vrot.slane %v2963, 5
  %v3027 = vrot.slane %v3026, 4
  %v3028 = vrot.slane %v2547, 5
  %v3029 = vsel %vm1208, %v3027, %v3028
  %v3030 = vrot.slane %v2964, 5
  %v3031 = vrot.slane %v3030, 4
  %v3032 = vrot.slane %v2549, 5
  %v3033 = vsel %vm1208, %v3031, %v3032
  %v3034 = vrot.slane %v2965, 5
  %v3035 = vrot.slane %v3034, 4
  %v3036 = vrot.slane %v2551, 5
  %v3037 = vsel %vm1208, %v3035, %v3036
  %v3038 = vrot.slane %v2966, 5
  %v3039 = vrot.slane %v3038, 4
  %v3040 = vrot.slane %v2553, 5
  %v3041 = vsel %vm1208, %v3039, %v3040
  %v3042 = vrot.slane %v2967, 5
  %v3043 = vrot.slane %v3042, 4
  %v3044 = vrot.slane %v2555, 5
  %v3045 = vsel %vm1208, %v3043, %v3044
  %v3046 = vrot.slane %v2968, 5
  %v3047 = vrot.slane %v3046, 4
  %v3048 = vrot.slane %v2557, 5
  %v3049 = vsel %vm1208, %v3047, %v3048
  %v3050 = vrot.slane %v2969, 5
  %v3051 = vrot.slane %v3050, 4
  %v3052 = vrot.slane %v2559, 5
  %v3053 = vsel %vm1208, %v3051, %v3052
  %v3054 = vrot.slane %v2970, 5
  %v3055 = vrot.slane %v3054, 4
  %v3056 = vrot.slane %v2561, 5
  %v3057 = vsel %vm1208, %v3055, %v3056
  %v3058 = vrot.slane %v2971, 5
  %v3059 = vrot.slane %v3058, 4
  %v3060 = vrot.slane %v2563, 5
  %v3061 = vsel %vm1208, %v3059, %v3060
  %v3062 = vrot.slane %v2972, 5
  %v3063 = vrot.slane %v3062, 4
  %v3064 = vrot.slane %v2565, 5
  %v3065 = vsel %vm1208, %v3063, %v3064
  %v3066 = vrot.slane %v2973, 5
  %v3067 = vrot.slane %v3066, 4
  %v3068 = vrot.slane %v2567, 5
  %v3069 = vsel %vm1208, %v3067, %v3068
  %s3070 = scalar_lea.vmem %s1, 16
  %v3071 = vld [vmem:[%s3070] sm:$0x3]
  %v3072 = vunpack.c.l.b16 %v3009
  %v3073 = vunpack.c.l.b16 %v3013
  %v3074 = vunpack.c.l.b16 %v3017
  %v3075 = vunpack.c.l.b16 %v3021
  %v3076 = vunpack.c.l.b16 %v3025
  %v3077 = vunpack.c.l.b16 %v3029
  %v3078 = vunpack.c.l.b16 %v3033
  %v3079 = vunpack.c.l.b16 %v3037
  %v3080 = vunpack.c.l.b16 %v3041
  %v3081 = vunpack.c.l.b16 %v3045
  %v3082 = vunpack.c.l.b16 %v3049
  %v3083 = vunpack.c.l.b16 %v3053
  %v3084 = vunpack.c.l.b16 %v3057
  %v3085 = vunpack.c.l.b16 %v3061
  %v3086 = vunpack.c.l.b16 %v3065
  %v3087 = vunpack.c.l.b16 %v3069
  %v3088 = vpack.c.b16 %v3073, %v3072
  %v3089 = vpack.c.b16 %v3075, %v3074
  %v3090 = vpack.c.b16 %v3077, %v3076
  %v3091 = vpack.c.b16 %v3079, %v3078
  %v3092 = vpack.c.b16 %v3081, %v3080
  %v3093 = vpack.c.b16 %v3083, %v3082
  %v3094 = vpack.c.b16 %v3085, %v3084
  %v3095 = vpack.c.b16 %v3087, %v3086
  %v3097 = vsel %vm868, %v3088, 0
  %v3100 = vsel %vm868, %v3089, 0
  %v3103 = vsel %vm868, %v3090, 0
  %v3106 = vsel %vm868, %v3091, 0
  %v3109 = vsel %vm868, %v3092, 0
  %v3112 = vsel %vm868, %v3093, 0
  %v3115 = vsel %vm868, %v3094, 0
  %v3118 = vsel %vm868, %v3095, 0
  %v3121 = vsel %vm893, %v3071, 0
  %3123 = vmatprep.subr.bf16.mxu0 0
  %3124 = vmatpush1.bf16.msra.mxu0 %v3121
  %3125 = vmatprep.subr.bf16.mxu0 0
  %3126 = vmatpush1.bf16.msra.mxu0 0
  %3127 = vmatprep.subr.bf16.mxu0 0
  %3128 = vmatpush1.bf16.msra.mxu0 0
  %3129 = vmatprep.subr.bf16.mxu0 0
  %3130 = vmatpush1.bf16.msra.mxu0 0
  %3131 = vmatprep.subr.bf16.mxu0 0
  %3132 = vmatpush1.bf16.msra.mxu0 0
  %3133 = vmatprep.subr.bf16.mxu0 0
  %3134 = vmatpush1.bf16.msra.mxu0 0
  %3135 = vmatprep.subr.bf16.mxu0 0
  %3136 = vmatpush1.bf16.msra.mxu0 0
  %3137 = vmatprep.subr.bf16.mxu0 0
  %3138 = vmatpush1.bf16.msra.mxu0 0
  %3139 = vmatprep.subr.bf16.mxu0 0
  %3140 = vmatpush1.bf16.msra.mxu0 0
  %3141 = vmatprep.subr.bf16.mxu0 0
  %3142 = vmatpush1.bf16.msra.mxu0 0
  %3143 = vmatprep.subr.bf16.mxu0 0
  %3144 = vmatpush1.bf16.msra.mxu0 0
  %3145 = vmatprep.subr.bf16.mxu0 0
  %3146 = vmatpush1.bf16.msra.mxu0 0
  %3147 = vmatprep.subr.bf16.mxu0 0
  %3148 = vmatpush1.bf16.msra.mxu0 0
  %3149 = vmatprep.subr.bf16.mxu0 0
  %3150 = vmatpush1.bf16.msra.mxu0 0
  %3151 = vmatprep.subr.bf16.mxu0 0
  %3152 = vmatpush1.bf16.msra.mxu0 0
  %3153 = vmatprep.subr.bf16.mxu0 0
  %3154 = vmatpush1.bf16.msra.mxu0 0
  %3155 = vmatprep.mubr.bf16.mxu0 0
  %3156 = vmatmul.mubr.bf16.gmra.mrb[0].mxu0 %v3097
  %v3157 = vpop.f32.mrb[0].mxu0
  %v3158 = vadd.f32 0.0, %v3157
  %v3159 = vpop.f32.mrb[0].mxu0
  %v3160 = vpop.f32.mrb[0].mxu0
  %v3161 = vadd.f32 0.0, %v3160
  %v3162 = vpop.f32.mrb[0].mxu0
  %3163 = vmatprep.mubr.bf16.mxu0 0
  %3164 = vmatmul.mubr.bf16.gmra.mrb[0].mxu0 %v3100
  %v3165 = vpop.f32.mrb[0].mxu0
  %v3166 = vadd.f32 0.0, %v3165
  %v3167 = vpop.f32.mrb[0].mxu0
  %v3168 = vpop.f32.mrb[0].mxu0
  %v3169 = vadd.f32 0.0, %v3168
  %v3170 = vpop.f32.mrb[0].mxu0
  %3171 = vmatprep.mubr.bf16.mxu0 0
  %3172 = vmatmul.mubr.bf16.gmra.mrb[0].mxu0 %v3103
  %v3173 = vpop.f32.mrb[0].mxu0
  %v3174 = vadd.f32 0.0, %v3173
  %v3175 = vpop.f32.mrb[0].mxu0
  %v3176 = vpop.f32.mrb[0].mxu0
  %v3177 = vadd.f32 0.0, %v3176
  %v3178 = vpop.f32.mrb[0].mxu0
  %3179 = vmatprep.mubr.bf16.mxu0 0
  %3180 = vmatmul.mubr.bf16.gmra.mrb[0].mxu0 %v3106
  %v3181 = vpop.f32.mrb[0].mxu0
  %v3182 = vadd.f32 0.0, %v3181
  %v3183 = vpop.f32.mrb[0].mxu0
  %v3184 = vpop.f32.mrb[0].mxu0
  %v3185 = vadd.f32 0.0, %v3184
  %v3186 = vpop.f32.mrb[0].mxu0
  %3187 = vmatprep.mubr.bf16.mxu0 0
  %3188 = vmatmul.mubr.bf16.gmra.mrb[0].mxu0 %v3109
  %v3189 = vpop.f32.mrb[0].mxu0
  %v3190 = vadd.f32 0.0, %v3189
  %v3191 = vpop.f32.mrb[0].mxu0
  %v3192 = vpop.f32.mrb[0].mxu0
  %v3193 = vadd.f32 0.0, %v3192
  %v3194 = vpop.f32.mrb[0].mxu0
  %3195 = vmatprep.mubr.bf16.mxu0 0
  %3196 = vmatmul.mubr.bf16.gmra.mrb[0].mxu0 %v3112
  %v3197 = vpop.f32.mrb[0].mxu0
  %v3198 = vadd.f32 0.0, %v3197
  %v3199 = vpop.f32.mrb[0].mxu0
  %v3200 = vpop.f32.mrb[0].mxu0
  %v3201 = vadd.f32 0.0, %v3200
  %v3202 = vpop.f32.mrb[0].mxu0
  %3203 = vmatprep.mubr.bf16.mxu0 0
  %3204 = vmatmul.mubr.bf16.gmra.mrb[0].mxu0 %v3115
  %v3205 = vpop.f32.mrb[0].mxu0
  %v3206 = vadd.f32 0.0, %v3205
  %v3207 = vpop.f32.mrb[0].mxu0
  %v3208 = vpop.f32.mrb[0].mxu0
  %v3209 = vadd.f32 0.0, %v3208
  %v3210 = vpop.f32.mrb[0].mxu0
  %3211 = vmatprep.mubr.bf16.mxu0 0
  %3212 = vmatmul.mubr.bf16.gmra.mrb[0].mxu0 %v3118
  %v3213 = vpop.f32.mrb[0].mxu0
  %v3214 = vadd.f32 0.0, %v3213
  %v3215 = vpop.f32.mrb[0].mxu0
  %v3216 = vpop.f32.mrb[0].mxu0
  %v3217 = vadd.f32 0.0, %v3216
  %v3218 = vpop.f32.mrb[0].mxu0
  %3219 = vdwg.mxu0
  %v3220 = vadd.f32 %v2942, %v3158
  %v3221 = vadd.f32 %v2943, %v3161
  %v3222 = vadd.f32 %v2944, %v3166
  %v3223 = vadd.f32 %v2945, %v3169
  %v3224 = vadd.f32 %v2946, %v3174
  %v3225 = vadd.f32 %v2947, %v3177
  %v3226 = vadd.f32 %v2948, %v3182
  %v3227 = vadd.f32 %v2949, %v3185
  %v3228 = vadd.f32 %v2950, %v3190
  %v3229 = vadd.f32 %v2951, %v3193
  %v3230 = vadd.f32 %v2952, %v3198
  %v3231 = vadd.f32 %v2953, %v3201
  %v3232 = vadd.f32 %v2954, %v3206
  %v3233 = vadd.f32 %v2955, %v3209
  %v3234 = vadd.f32 %v2956, %v3214
  %v3235 = vadd.f32 %v2957, %v3217
  %v3236 = vld [vmem:[%s2] sm:$0x1]
  %v3238 = vlaneseq
  %v3239 = vshrl.u32 %v3238, 7
  %v3240 = vsub.s32 0, %v3239
  %v3241 = vrot.slane %v3236, %v3240
  %v3243 = vadd.f32 %v3220, %v3241
  %v3244 = vadd.f32 %v3221, %v3241
  %v3245 = vadd.f32 %v3222, %v3241
  %v3246 = vadd.f32 %v3223, %v3241
  %v3247 = vadd.f32 %v3224, %v3241
  %v3248 = vadd.f32 %v3225, %v3241
  %v3249 = vadd.f32 %v3226, %v3241
  %v3250 = vadd.f32 %v3227, %v3241
  %v3251 = vadd.f32 %v3228, %v3241
  %v3252 = vadd.f32 %v3229, %v3241
  %v3253 = vadd.f32 %v3230, %v3241
  %v3254 = vadd.f32 %v3231, %v3241
  %v3255 = vadd.f32 %v3232, %v3241
  %v3256 = vadd.f32 %v3233, %v3241
  %v3257 = vadd.f32 %v3234, %v3241
  %v3258 = vadd.f32 %v3235, %v3241
  %v3259 = vmax.f32 %v3243, 0.0
  %v3260 = vmax.f32 %v3244, 0.0
  %v3261 = vmax.f32 %v3245, 0.0
  %v3262 = vmax.f32 %v3246, 0.0
  %v3263 = vmax.f32 %v3247, 0.0
  %v3264 = vmax.f32 %v3248, 0.0
  %v3265 = vmax.f32 %v3249, 0.0
  %v3266 = vmax.f32 %v3250, 0.0
  %v3267 = vmax.f32 %v3251, 0.0
  %v3268 = vmax.f32 %v3252, 0.0
  %v3269 = vmax.f32 %v3253, 0.0
  %v3270 = vmax.f32 %v3254, 0.0
  %v3271 = vmax.f32 %v3255, 0.0
  %v3272 = vmax.f32 %v3256, 0.0
  %v3273 = vmax.f32 %v3257, 0.0
  %v3274 = vmax.f32 %v3258, 0.0
  %v3275 = vpack.c.bf16 %v3259, %v3259
  %v3276 = vpack.c.bf16 %v3260, %v3260
  %v3277 = vpack.c.bf16 %v3261, %v3261
  %v3278 = vpack.c.bf16 %v3262, %v3262
  %v3279 = vpack.c.bf16 %v3263, %v3263
  %v3280 = vpack.c.bf16 %v3264, %v3264
  %v3281 = vpack.c.bf16 %v3265, %v3265
  %v3282 = vpack.c.bf16 %v3266, %v3266
  %v3283 = vpack.c.bf16 %v3267, %v3267
  %v3284 = vpack.c.bf16 %v3268, %v3268
  %v3285 = vpack.c.bf16 %v3269, %v3269
  %v3286 = vpack.c.bf16 %v3270, %v3270
  %v3287 = vpack.c.bf16 %v3271, %v3271
  %v3288 = vpack.c.bf16 %v3272, %v3272
  %v3289 = vpack.c.bf16 %v3273, %v3273
  %v3290 = vpack.c.bf16 %v3274, %v3274
  %v3307 = vunpack.c.l.b16 %v3275
  %v3308 = vunpack.c.l.b16 %v3276
  %v3309 = vunpack.c.l.b16 %v3277
  %v3310 = vunpack.c.l.b16 %v3278
  %v3311 = vunpack.c.l.b16 %v3279
  %v3312 = vunpack.c.l.b16 %v3280
  %v3313 = vunpack.c.l.b16 %v3281
  %v3314 = vunpack.c.l.b16 %v3282
  %v3315 = vunpack.c.l.b16 %v3283
  %v3316 = vunpack.c.l.b16 %v3284
  %v3317 = vunpack.c.l.b16 %v3285
  %v3318 = vunpack.c.l.b16 %v3286
  %v3319 = vunpack.c.l.b16 %v3287
  %v3320 = vunpack.c.l.b16 %v3288
  %v3321 = vunpack.c.l.b16 %v3289
  %v3322 = vunpack.c.l.b16 %v3290
  %v3323 = vpack.c.b16 %v3307, %v3307
  %v3324 = vpack.c.b16 %v3308, %v3308
  %v3325 = vpack.c.b16 %v3309, %v3309
  %v3326 = vpack.c.b16 %v3310, %v3310
  %v3327 = vpack.c.b16 %v3311, %v3311
  %v3328 = vpack.c.b16 %v3312, %v3312
  %v3329 = vpack.c.b16 %v3313, %v3313
  %v3330 = vpack.c.b16 %v3314, %v3314
  %v3331 = vpack.c.b16 %v3315, %v3315
  %v3332 = vpack.c.b16 %v3316, %v3316
  %v3333 = vpack.c.b16 %v3317, %v3317
  %v3334 = vpack.c.b16 %v3318, %v3318
  %v3335 = vpack.c.b16 %v3319, %v3319
  %v3336 = vpack.c.b16 %v3320, %v3320
  %v3337 = vpack.c.b16 %v3321, %v3321
  %v3338 = vpack.c.b16 %v3322, %v3322
  %v3340 = vshrl.u32 %v3323, 16
  %v3342 = vrot.slane %v3340, 7
  %v3343 = vshll.u32 %v3323, 16
  %v3345 = vor.u32 %v3342, %v3343
  %v3346 = vrot.slane %v3342, 4
  %v3348 = vshrl.u32 %v3324, 16
  %v3350 = vrot.slane %v3348, 7
  %v3351 = vshll.u32 %v3324, 16
  %v3353 = vor.u32 %v3350, %v3351
  %v3354 = vrot.slane %v3350, 4
  %v3356 = vshrl.u32 %v3325, 16
  %v3358 = vrot.slane %v3356, 7
  %v3359 = vshll.u32 %v3325, 16
  %v3361 = vor.u32 %v3358, %v3359
  %v3362 = vrot.slane %v3358, 4
  %v3364 = vshrl.u32 %v3326, 16
  %v3366 = vrot.slane %v3364, 7
  %v3367 = vshll.u32 %v3326, 16
  %v3369 = vor.u32 %v3366, %v3367
  %v3370 = vrot.slane %v3366, 4
  %v3372 = vshrl.u32 %v3327, 16
  %v3374 = vrot.slane %v3372, 7
  %v3375 = vshll.u32 %v3327, 16
  %v3377 = vor.u32 %v3374, %v3375
  %v3378 = vrot.slane %v3374, 4
  %v3380 = vshrl.u32 %v3328, 16
  %v3382 = vrot.slane %v3380, 7
  %v3383 = vshll.u32 %v3328, 16
  %v3385 = vor.u32 %v3382, %v3383
  %v3386 = vrot.slane %v3382, 4
  %v3388 = vshrl.u32 %v3329, 16
  %v3390 = vrot.slane %v3388, 7
  %v3391 = vshll.u32 %v3329, 16
  %v3393 = vor.u32 %v3390, %v3391
  %v3394 = vrot.slane %v3390, 4
  %v3396 = vshrl.u32 %v3330, 16
  %v3398 = vrot.slane %v3396, 7
  %v3399 = vshll.u32 %v3330, 16
  %v3401 = vor.u32 %v3398, %v3399
  %v3402 = vrot.slane %v3398, 4
  %v3404 = vshrl.u32 %v3331, 16
  %v3406 = vrot.slane %v3404, 7
  %v3407 = vshll.u32 %v3331, 16
  %v3409 = vor.u32 %v3406, %v3407
  %v3410 = vrot.slane %v3406, 4
  %v3412 = vshrl.u32 %v3332, 16
  %v3414 = vrot.slane %v3412, 7
  %v3415 = vshll.u32 %v3332, 16
  %v3417 = vor.u32 %v3414, %v3415
  %v3418 = vrot.slane %v3414, 4
  %v3420 = vshrl.u32 %v3333, 16
  %v3422 = vrot.slane %v3420, 7
  %v3423 = vshll.u32 %v3333, 16
  %v3425 = vor.u32 %v3422, %v3423
  %v3426 = vrot.slane %v3422, 4
  %v3428 = vshrl.u32 %v3334, 16
  %v3430 = vrot.slane %v3428, 7
  %v3431 = vshll.u32 %v3334, 16
  %v3433 = vor.u32 %v3430, %v3431
  %v3434 = vrot.slane %v3430, 4
  %v3436 = vshrl.u32 %v3335, 16
  %v3438 = vrot.slane %v3436, 7
  %v3439 = vshll.u32 %v3335, 16
  %v3441 = vor.u32 %v3438, %v3439
  %v3442 = vrot.slane %v3438, 4
  %v3444 = vshrl.u32 %v3336, 16
  %v3446 = vrot.slane %v3444, 7
  %v3447 = vshll.u32 %v3336, 16
  %v3449 = vor.u32 %v3446, %v3447
  %v3450 = vrot.slane %v3446, 4
  %v3452 = vshrl.u32 %v3337, 16
  %v3454 = vrot.slane %v3452, 7
  %v3455 = vshll.u32 %v3337, 16
  %v3457 = vor.u32 %v3454, %v3455
  %v3458 = vrot.slane %v3454, 4
  %v3460 = vshrl.u32 %v3338, 16
  %v3462 = vrot.slane %v3460, 7
  %v3463 = vshll.u32 %v3338, 16
  %v3465 = vor.u32 %v3462, %v3463
  %v3466 = vrot.slane %v3462, 4
  %s3499 = scalar_lea.vmem [#allocation3], 8
  %vm3500 = vcmask 60416
  %vm3501 = vmand %vm3500, %vm295
  %v3502 = vld [vmem:[%s3499] sm:$0xf]
  %v3503 = vsel %vm3501, %v3345, %v3502
  %3504 = vst [vmem:[%s3499] sm:$0xf] %v3503
  %vm3505 = vcmask 57344
  %vm3506 = vmand %vm3505, %vm301
  %v3507 = vld [vmem:[%s3499 + $0x4] sm:$0x1]
  %v3508 = vsel %vm3506, %v3346, %v3507
  %3509 = vst [vmem:[%s3499 + $0x4] sm:$0x1] %v3508
  %v3510 = vld [vmem:[%s3499 + $0x8] sm:$0xf]
  %v3511 = vsel %vm3501, %v3353, %v3510
  %3512 = vst [vmem:[%s3499 + $0x8] sm:$0xf] %v3511
  %v3513 = vld [vmem:[%s3499 + $0xc] sm:$0x1]
  %v3514 = vsel %vm3506, %v3354, %v3513
  %3515 = vst [vmem:[%s3499 + $0xc] sm:$0x1] %v3514
  %v3516 = vld [vmem:[%s3499 + $0x10] sm:$0xf]
  %v3517 = vsel %vm3501, %v3361, %v3516
  %3518 = vst [vmem:[%s3499 + $0x10] sm:$0xf] %v3517
  %v3519 = vld [vmem:[%s3499 + $0x14] sm:$0x1]
  %v3520 = vsel %vm3506, %v3362, %v3519
  %3521 = vst [vmem:[%s3499 + $0x14] sm:$0x1] %v3520
  %v3522 = vld [vmem:[%s3499 + $0x18] sm:$0xf]
  %v3523 = vsel %vm3501, %v3369, %v3522
  %3524 = vst [vmem:[%s3499 + $0x18] sm:$0xf] %v3523
  %v3525 = vld [vmem:[%s3499 + $0x1c] sm:$0x1]
  %v3526 = vsel %vm3506, %v3370, %v3525
  %3527 = vst [vmem:[%s3499 + $0x1c] sm:$0x1] %v3526
  %v3528 = vld [vmem:[%s3499 + $0x20] sm:$0xf]
  %v3529 = vsel %vm3501, %v3377, %v3528
  %3530 = vst [vmem:[%s3499 + $0x20] sm:$0xf] %v3529
  %v3531 = vld [vmem:[%s3499 + $0x24] sm:$0x1]
  %v3532 = vsel %vm3506, %v3378, %v3531
  %3533 = vst [vmem:[%s3499 + $0x24] sm:$0x1] %v3532
  %v3534 = vld [vmem:[%s3499 + $0x28] sm:$0xf]
  %v3535 = vsel %vm3501, %v3385, %v3534
  %3536 = vst [vmem:[%s3499 + $0x28] sm:$0xf] %v3535
  %v3537 = vld [vmem:[%s3499 + $0x2c] sm:$0x1]
  %v3538 = vsel %vm3506, %v3386, %v3537
  %3539 = vst [vmem:[%s3499 + $0x2c] sm:$0x1] %v3538
  %v3540 = vld [vmem:[%s3499 + $0x30] sm:$0xf]
  %v3541 = vsel %vm3501, %v3393, %v3540
  %3542 = vst [vmem:[%s3499 + $0x30] sm:$0xf] %v3541
  %v3543 = vld [vmem:[%s3499 + $0x34] sm:$0x1]
  %v3544 = vsel %vm3506, %v3394, %v3543
  %3545 = vst [vmem:[%s3499 + $0x34] sm:$0x1] %v3544
  %v3546 = vld [vmem:[%s3499 + $0x38] sm:$0xf]
  %v3547 = vsel %vm3501, %v3401, %v3546
  %3548 = vst [vmem:[%s3499 + $0x38] sm:$0xf] %v3547
  %v3549 = vld [vmem:[%s3499 + $0x3c] sm:$0x1]
  %v3550 = vsel %vm3506, %v3402, %v3549
  %3551 = vst [vmem:[%s3499 + $0x3c] sm:$0x1] %v3550
  %v3552 = vld [vmem:[%s3499 + $0x50] sm:$0xf]
  %v3553 = vsel %vm3501, %v3409, %v3552
  %3554 = vst [vmem:[%s3499 + $0x50] sm:$0xf] %v3553
  %v3555 = vld [vmem:[%s3499 + $0x54] sm:$0x1]
  %v3556 = vsel %vm3506, %v3410, %v3555
  %3557 = vst [vmem:[%s3499 + $0x54] sm:$0x1] %v3556
  %v3558 = vld [vmem:[%s3499 + $0x58] sm:$0xf]
  %v3559 = vsel %vm3501, %v3417, %v3558
  %3560 = vst [vmem:[%s3499 + $0x58] sm:$0xf] %v3559
  %v3561 = vld [vmem:[%s3499 + $0x5c] sm:$0x1]
  %v3562 = vsel %vm3506, %v3418, %v3561
  %3563 = vst [vmem:[%s3499 + $0x5c] sm:$0x1] %v3562
  %v3564 = vld [vmem:[%s3499 + $0x60] sm:$0xf]
  %v3565 = vsel %vm3501, %v3425, %v3564
  %3566 = vst [vmem:[%s3499 + $0x60] sm:$0xf] %v3565
  %v3567 = vld [vmem:[%s3499 + $0x64] sm:$0x1]
  %v3568 = vsel %vm3506, %v3426, %v3567
  %3569 = vst [vmem:[%s3499 + $0x64] sm:$0x1] %v3568
  %v3570 = vld [vmem:[%s3499 + $0x68] sm:$0xf]
  %v3571 = vsel %vm3501, %v3433, %v3570
  %3572 = vst [vmem:[%s3499 + $0x68] sm:$0xf] %v3571
  %v3573 = vld [vmem:[%s3499 + $0x6c] sm:$0x1]
  %v3574 = vsel %vm3506, %v3434, %v3573
  %3575 = vst [vmem:[%s3499 + $0x6c] sm:$0x1] %v3574
  %v3576 = vld [vmem:[%s3499 + $0x70] sm:$0xf]
  %v3577 = vsel %vm3501, %v3441, %v3576
  %3578 = vst [vmem:[%s3499 + $0x70] sm:$0xf] %v3577
  %v3579 = vld [vmem:[%s3499 + $0x74] sm:$0x1]
  %v3580 = vsel %vm3506, %v3442, %v3579
  %3581 = vst [vmem:[%s3499 + $0x74] sm:$0x1] %v3580
  %v3582 = vld [vmem:[%s3499 + $0x78] sm:$0xf]
  %v3583 = vsel %vm3501, %v3449, %v3582
  %3584 = vst [vmem:[%s3499 + $0x78] sm:$0xf] %v3583
  %v3585 = vld [vmem:[%s3499 + $0x7c] sm:$0x1]
  %v3586 = vsel %vm3506, %v3450, %v3585
  %3587 = vst [vmem:[%s3499 + $0x7c] sm:$0x1] %v3586
  %v3588 = vld [vmem:[%s3499 + $0x80] sm:$0xf]
  %v3589 = vsel %vm3501, %v3457, %v3588
  %3590 = vst [vmem:[%s3499 + $0x80] sm:$0xf] %v3589
  %v3591 = vld [vmem:[%s3499 + $0x84] sm:$0x1]
  %v3592 = vsel %vm3506, %v3458, %v3591
  %3593 = vst [vmem:[%s3499 + $0x84] sm:$0x1] %v3592
  %v3594 = vld [vmem:[%s3499 + $0x88] sm:$0xf]
  %v3595 = vsel %vm3501, %v3465, %v3594
  %3596 = vst [vmem:[%s3499 + $0x88] sm:$0xf] %v3595
  %v3597 = vld [vmem:[%s3499 + $0x8c] sm:$0x1]
  %v3598 = vsel %vm3506, %v3466, %v3597
  %3599 = vst [vmem:[%s3499 + $0x8c] sm:$0x1] %v3598
  %v3600 = vld [vmem:[#allocation3] sm:$0xf]
  %v3601 = vld [vmem:[#allocation3 + $0x8] sm:$0xf]
  %v3602 = vld [vmem:[#allocation3 + $0x10] sm:$0xf]
  %v3603 = vld [vmem:[#allocation3 + $0x18] sm:$0xf]
  %v3604 = vld [vmem:[#allocation3 + $0x20] sm:$0xf]
  %v3605 = vld [vmem:[#allocation3 + $0x28] sm:$0xf]
  %v3606 = vld [vmem:[#allocation3 + $0x30] sm:$0xf]
  %v3607 = vld [vmem:[#allocation3 + $0x38] sm:$0xf]
  %v3608 = vld [vmem:[#allocation3 + $0x50] sm:$0xf]
  %v3609 = vld [vmem:[#allocation3 + $0x58] sm:$0xf]
  %v3610 = vld [vmem:[#allocation3 + $0x60] sm:$0xf]
  %v3611 = vld [vmem:[#allocation3 + $0x68] sm:$0xf]
  %v3612 = vld [vmem:[#allocation3 + $0x70] sm:$0xf]
  %v3613 = vld [vmem:[#allocation3 + $0x78] sm:$0xf]
  %v3614 = vld [vmem:[#allocation3 + $0x80] sm:$0xf]
  %v3615 = vld [vmem:[#allocation3 + $0x88] sm:$0xf]
  %v3616 = vld [vmem:[%s3] sm:$0xf]
  %v3617 = vld [vmem:[#allocation3 + $0x4] sm:$0x1]
  %v3618 = vld [vmem:[#allocation3 + $0xc] sm:$0x1]
  %v3619 = vld [vmem:[#allocation3 + $0x14] sm:$0x1]
  %v3620 = vld [vmem:[#allocation3 + $0x1c] sm:$0x1]
  %v3621 = vld [vmem:[#allocation3 + $0x24] sm:$0x1]
  %v3622 = vld [vmem:[#allocation3 + $0x2c] sm:$0x1]
  %v3623 = vld [vmem:[#allocation3 + $0x34] sm:$0x1]
  %v3624 = vld [vmem:[#allocation3 + $0x3c] sm:$0x1]
  %v3625 = vld [vmem:[#allocation3 + $0x54] sm:$0x1]
  %v3626 = vld [vmem:[#allocation3 + $0x5c] sm:$0x1]
  %v3627 = vld [vmem:[#allocation3 + $0x64] sm:$0x1]
  %v3628 = vld [vmem:[#allocation3 + $0x6c] sm:$0x1]
  %v3629 = vld [vmem:[#allocation3 + $0x74] sm:$0x1]
  %v3630 = vld [vmem:[#allocation3 + $0x7c] sm:$0x1]
  %v3631 = vld [vmem:[#allocation3 + $0x84] sm:$0x1]
  %v3632 = vld [vmem:[#allocation3 + $0x8c] sm:$0x1]
  %v3634 = vshrl.u32 %v3600, 16
  %v3636 = vrot.slane %v3634, 4
  %v3637 = vshll.u32 %v3600, 16
  %v3639 = vrot.slane %v3637, 5
  %v3640 = vor.u32 %v3636, %v3639
  %v3641 = vrot.slane %v3640, 4
  %v3643 = vshll.u32 %v3617, 16
  %v3645 = vrot.slane %v3643, 5
  %v3646 = vsel %vm617, %v3641, %v3645
  %v3648 = vshrl.u32 %v3601, 16
  %v3650 = vrot.slane %v3648, 4
  %v3651 = vshll.u32 %v3601, 16
  %v3653 = vrot.slane %v3651, 5
  %v3654 = vor.u32 %v3650, %v3653
  %v3655 = vrot.slane %v3654, 4
  %v3657 = vshll.u32 %v3618, 16
  %v3659 = vrot.slane %v3657, 5
  %v3660 = vsel %vm617, %v3655, %v3659
  %v3662 = vshrl.u32 %v3602, 16
  %v3664 = vrot.slane %v3662, 4
  %v3665 = vshll.u32 %v3602, 16
  %v3667 = vrot.slane %v3665, 5
  %v3668 = vor.u32 %v3664, %v3667
  %v3669 = vrot.slane %v3668, 4
  %v3671 = vshll.u32 %v3619, 16
  %v3673 = vrot.slane %v3671, 5
  %v3674 = vsel %vm617, %v3669, %v3673
  %v3676 = vshrl.u32 %v3603, 16
  %v3678 = vrot.slane %v3676, 4
  %v3679 = vshll.u32 %v3603, 16
  %v3681 = vrot.slane %v3679, 5
  %v3682 = vor.u32 %v3678, %v3681
  %v3683 = vrot.slane %v3682, 4
  %v3685 = vshll.u32 %v3620, 16
  %v3687 = vrot.slane %v3685, 5
  %v3688 = vsel %vm617, %v3683, %v3687
  %v3690 = vshrl.u32 %v3604, 16
  %v3692 = vrot.slane %v3690, 4
  %v3693 = vshll.u32 %v3604, 16
  %v3695 = vrot.slane %v3693, 5
  %v3696 = vor.u32 %v3692, %v3695
  %v3697 = vrot.slane %v3696, 4
  %v3699 = vshll.u32 %v3621, 16
  %v3701 = vrot.slane %v3699, 5
  %v3702 = vsel %vm617, %v3697, %v3701
  %v3704 = vshrl.u32 %v3605, 16
  %v3706 = vrot.slane %v3704, 4
  %v3707 = vshll.u32 %v3605, 16
  %v3709 = vrot.slane %v3707, 5
  %v3710 = vor.u32 %v3706, %v3709
  %v3711 = vrot.slane %v3710, 4
  %v3713 = vshll.u32 %v3622, 16
  %v3715 = vrot.slane %v3713, 5
  %v3716 = vsel %vm617, %v3711, %v3715
  %v3718 = vshrl.u32 %v3606, 16
  %v3720 = vrot.slane %v3718, 4
  %v3721 = vshll.u32 %v3606, 16
  %v3723 = vrot.slane %v3721, 5
  %v3724 = vor.u32 %v3720, %v3723
  %v3725 = vrot.slane %v3724, 4
  %v3727 = vshll.u32 %v3623, 16
  %v3729 = vrot.slane %v3727, 5
  %v3730 = vsel %vm617, %v3725, %v3729
  %v3732 = vshrl.u32 %v3607, 16
  %v3734 = vrot.slane %v3732, 4
  %v3735 = vshll.u32 %v3607, 16
  %v3737 = vrot.slane %v3735, 5
  %v3738 = vor.u32 %v3734, %v3737
  %v3739 = vrot.slane %v3738, 4
  %v3741 = vshll.u32 %v3624, 16
  %v3743 = vrot.slane %v3741, 5
  %v3744 = vsel %vm617, %v3739, %v3743
  %v3746 = vshrl.u32 %v3608, 16
  %v3748 = vrot.slane %v3746, 4
  %v3749 = vshll.u32 %v3608, 16
  %v3751 = vrot.slane %v3749, 5
  %v3752 = vor.u32 %v3748, %v3751
  %v3753 = vrot.slane %v3752, 4
  %v3755 = vshll.u32 %v3625, 16
  %v3757 = vrot.slane %v3755, 5
  %v3758 = vsel %vm617, %v3753, %v3757
  %v3760 = vshrl.u32 %v3609, 16
  %v3762 = vrot.slane %v3760, 4
  %v3763 = vshll.u32 %v3609, 16
  %v3765 = vrot.slane %v3763, 5
  %v3766 = vor.u32 %v3762, %v3765
  %v3767 = vrot.slane %v3766, 4
  %v3769 = vshll.u32 %v3626, 16
  %v3771 = vrot.slane %v3769, 5
  %v3772 = vsel %vm617, %v3767, %v3771
  %v3774 = vshrl.u32 %v3610, 16
  %v3776 = vrot.slane %v3774, 4
  %v3777 = vshll.u32 %v3610, 16
  %v3779 = vrot.slane %v3777, 5
  %v3780 = vor.u32 %v3776, %v3779
  %v3781 = vrot.slane %v3780, 4
  %v3783 = vshll.u32 %v3627, 16
  %v3785 = vrot.slane %v3783, 5
  %v3786 = vsel %vm617, %v3781, %v3785
  %v3788 = vshrl.u32 %v3611, 16
  %v3790 = vrot.slane %v3788, 4
  %v3791 = vshll.u32 %v3611, 16
  %v3793 = vrot.slane %v3791, 5
  %v3794 = vor.u32 %v3790, %v3793
  %v3795 = vrot.slane %v3794, 4
  %v3797 = vshll.u32 %v3628, 16
  %v3799 = vrot.slane %v3797, 5
  %v3800 = vsel %vm617, %v3795, %v3799
  %v3802 = vshrl.u32 %v3612, 16
  %v3804 = vrot.slane %v3802, 4
  %v3805 = vshll.u32 %v3612, 16
  %v3807 = vrot.slane %v3805, 5
  %v3808 = vor.u32 %v3804, %v3807
  %v3809 = vrot.slane %v3808, 4
  %v3811 = vshll.u32 %v3629, 16
  %v3813 = vrot.slane %v3811, 5
  %v3814 = vsel %vm617, %v3809, %v3813
  %v3816 = vshrl.u32 %v3613, 16
  %v3818 = vrot.slane %v3816, 4
  %v3819 = vshll.u32 %v3613, 16
  %v3821 = vrot.slane %v3819, 5
  %v3822 = vor.u32 %v3818, %v3821
  %v3823 = vrot.slane %v3822, 4
  %v3825 = vshll.u32 %v3630, 16
  %v3827 = vrot.slane %v3825, 5
  %v3828 = vsel %vm617, %v3823, %v3827
  %v3830 = vshrl.u32 %v3614, 16
  %v3832 = vrot.slane %v3830, 4
  %v3833 = vshll.u32 %v3614, 16
  %v3835 = vrot.slane %v3833, 5
  %v3836 = vor.u32 %v3832, %v3835
  %v3837 = vrot.slane %v3836, 4
  %v3839 = vshll.u32 %v3631, 16
  %v3841 = vrot.slane %v3839, 5
  %v3842 = vsel %vm617, %v3837, %v3841
  %v3844 = vshrl.u32 %v3615, 16
  %v3846 = vrot.slane %v3844, 4
  %v3847 = vshll.u32 %v3615, 16
  %v3849 = vrot.slane %v3847, 5
  %v3850 = vor.u32 %v3846, %v3849
  %v3851 = vrot.slane %v3850, 4
  %v3853 = vshll.u32 %v3632, 16
  %v3855 = vrot.slane %v3853, 5
  %v3856 = vsel %vm617, %v3851, %v3855
  %s3857 = scalar_lea.vmem %s3, 4
  %v3858 = vld [vmem:[%s3857] sm:$0xf]
  %v3859 = vunpack.c.l.b16 %v3646
  %v3860 = vunpack.c.l.b16 %v3660
  %v3861 = vunpack.c.l.b16 %v3674
  %v3862 = vunpack.c.l.b16 %v3688
  %v3863 = vunpack.c.l.b16 %v3702
  %v3864 = vunpack.c.l.b16 %v3716
  %v3865 = vunpack.c.l.b16 %v3730
  %v3866 = vunpack.c.l.b16 %v3744
  %v3867 = vunpack.c.l.b16 %v3758
  %v3868 = vunpack.c.l.b16 %v3772
  %v3869 = vunpack.c.l.b16 %v3786
  %v3870 = vunpack.c.l.b16 %v3800
  %v3871 = vunpack.c.l.b16 %v3814
  %v3872 = vunpack.c.l.b16 %v3828
  %v3873 = vunpack.c.l.b16 %v3842
  %v3874 = vunpack.c.l.b16 %v3856
  %v3875 = vpack.c.b16 %v3860, %v3859
  %v3876 = vpack.c.b16 %v3862, %v3861
  %v3877 = vpack.c.b16 %v3864, %v3863
  %v3878 = vpack.c.b16 %v3866, %v3865
  %v3879 = vpack.c.b16 %v3868, %v3867
  %v3880 = vpack.c.b16 %v3870, %v3869
  %v3881 = vpack.c.b16 %v3872, %v3871
  %v3882 = vpack.c.b16 %v3874, %v3873
  %vm3883 = vcmask 64512
  %v3885 = vsel %vm3883, %v3875, 0
  %v3888 = vsel %vm3883, %v3876, 0
  %v3891 = vsel %vm3883, %v3877, 0
  %v3894 = vsel %vm3883, %v3878, 0
  %v3897 = vsel %vm3883, %v3879, 0
  %v3900 = vsel %vm3883, %v3880, 0
  %v3903 = vsel %vm3883, %v3881, 0
  %v3906 = vsel %vm3883, %v3882, 0
  %vm3908 = vcmask 1043456
  %v3910 = vsel %vm3908, %v3858, 0
  %3912 = vmatprep.subr.bf16.mxu0 0
  %3913 = vmatpush1.bf16.msra.mxu0 %v3910
  %3914 = vmatprep.subr.bf16.mxu0 0
  %3915 = vmatpush1.bf16.msra.mxu0 0
  %3916 = vmatprep.subr.bf16.mxu0 0
  %3917 = vmatpush1.bf16.msra.mxu0 0
  %3918 = vmatprep.subr.bf16.mxu0 0
  %3919 = vmatpush1.bf16.msra.mxu0 0
  %3920 = vmatprep.subr.bf16.mxu0 0
  %3921 = vmatpush1.bf16.msra.mxu0 0
  %3922 = vmatprep.subr.bf16.mxu0 0
  %3923 = vmatpush1.bf16.msra.mxu0 0
  %3924 = vmatprep.subr.bf16.mxu0 0
  %3925 = vmatpush1.bf16.msra.mxu0 0
  %3926 = vmatprep.subr.bf16.mxu0 0
  %3927 = vmatpush1.bf16.msra.mxu0 0
  %3928 = vmatprep.subr.bf16.mxu0 0
  %3929 = vmatpush1.bf16.msra.mxu0 0
  %3930 = vmatprep.subr.bf16.mxu0 0
  %3931 = vmatpush1.bf16.msra.mxu0 0
  %3932 = vmatprep.subr.bf16.mxu0 0
  %3933 = vmatpush1.bf16.msra.mxu0 0
  %3934 = vmatprep.subr.bf16.mxu0 0
  %3935 = vmatpush1.bf16.msra.mxu0 0
  %3936 = vmatprep.subr.bf16.mxu0 0
  %3937 = vmatpush1.bf16.msra.mxu0 0
  %3938 = vmatprep.subr.bf16.mxu0 0
  %3939 = vmatpush1.bf16.msra.mxu0 0
  %3940 = vmatprep.subr.bf16.mxu0 0
  %3941 = vmatpush1.bf16.msra.mxu0 0
  %3942 = vmatprep.subr.bf16.mxu0 0
  %3943 = vmatpush1.bf16.msra.mxu0 0
  %3944 = vmatprep.mubr.bf16.mxu0 0
  %3945 = vmatmul.mubr.bf16.gmra.mrb[0].mxu0 %v3885
  %v3946 = vpop.f32.mrb[0].mxu0
  %v3947 = vadd.f32 0.0, %v3946
  %v3948 = vpop.f32.mrb[0].mxu0
  %v3949 = vpop.f32.mrb[0].mxu0
  %v3950 = vadd.f32 0.0, %v3949
  %v3951 = vpop.f32.mrb[0].mxu0
  %3952 = vmatprep.mubr.bf16.mxu0 0
  %3953 = vmatmul.mubr.bf16.gmra.mrb[0].mxu0 %v3888
  %v3954 = vpop.f32.mrb[0].mxu0
  %v3955 = vadd.f32 0.0, %v3954
  %v3956 = vpop.f32.mrb[0].mxu0
  %v3957 = vpop.f32.mrb[0].mxu0
  %v3958 = vadd.f32 0.0, %v3957
  %v3959 = vpop.f32.mrb[0].mxu0
  %3960 = vmatprep.mubr.bf16.mxu0 0
  %3961 = vmatmul.mubr.bf16.gmra.mrb[0].mxu0 %v3891
  %v3962 = vpop.f32.mrb[0].mxu0
  %v3963 = vadd.f32 0.0, %v3962
  %v3964 = vpop.f32.mrb[0].mxu0
  %v3965 = vpop.f32.mrb[0].mxu0
  %v3966 = vadd.f32 0.0, %v3965
  %v3967 = vpop.f32.mrb[0].mxu0
  %3968 = vmatprep.mubr.bf16.mxu0 0
  %3969 = vmatmul.mubr.bf16.gmra.mrb[0].mxu0 %v3894
  %v3970 = vpop.f32.mrb[0].mxu0
  %v3971 = vadd.f32 0.0, %v3970
  %v3972 = vpop.f32.mrb[0].mxu0
  %v3973 = vpop.f32.mrb[0].mxu0
  %v3974 = vadd.f32 0.0, %v3973
  %v3975 = vpop.f32.mrb[0].mxu0
  %3976 = vmatprep.mubr.bf16.mxu0 0
  %3977 = vmatmul.mubr.bf16.gmra.mrb[0].mxu0 %v3897
  %v3978 = vpop.f32.mrb[0].mxu0
  %v3979 = vadd.f32 0.0, %v3978
  %v3980 = vpop.f32.mrb[0].mxu0
  %v3981 = vpop.f32.mrb[0].mxu0
  %v3982 = vadd.f32 0.0, %v3981
  %v3983 = vpop.f32.mrb[0].mxu0
  %3984 = vmatprep.mubr.bf16.mxu0 0
  %3985 = vmatmul.mubr.bf16.gmra.mrb[0].mxu0 %v3900
  %v3986 = vpop.f32.mrb[0].mxu0
  %v3987 = vadd.f32 0.0, %v3986
  %v3988 = vpop.f32.mrb[0].mxu0
  %v3989 = vpop.f32.mrb[0].mxu0
  %v3990 = vadd.f32 0.0, %v3989
  %v3991 = vpop.f32.mrb[0].mxu0
  %3992 = vmatprep.mubr.bf16.mxu0 0
  %3993 = vmatmul.mubr.bf16.gmra.mrb[0].mxu0 %v3903
  %v3994 = vpop.f32.mrb[0].mxu0
  %v3995 = vadd.f32 0.0, %v3994
  %v3996 = vpop.f32.mrb[0].mxu0
  %v3997 = vpop.f32.mrb[0].mxu0
  %v3998 = vadd.f32 0.0, %v3997
  %v3999 = vpop.f32.mrb[0].mxu0
  %4000 = vmatprep.mubr.bf16.mxu0 0
  %4001 = vmatmul.mubr.bf16.gmra.mrb[0].mxu0 %v3906
  %v4002 = vpop.f32.mrb[0].mxu0
  %v4003 = vadd.f32 0.0, %v4002
  %v4004 = vpop.f32.mrb[0].mxu0
  %v4005 = vpop.f32.mrb[0].mxu0
  %v4006 = vadd.f32 0.0, %v4005
  %v4007 = vpop.f32.mrb[0].mxu0
  %4008 = vdwg.mxu0
  %v4025 = vunpack.c.l.b16 %v3600
  %v4026 = vunpack.c.l.b16 %v3601
  %v4027 = vunpack.c.l.b16 %v3602
  %v4028 = vunpack.c.l.b16 %v3603
  %v4029 = vunpack.c.l.b16 %v3604
  %v4030 = vunpack.c.l.b16 %v3605
  %v4031 = vunpack.c.l.b16 %v3606
  %v4032 = vunpack.c.l.b16 %v3607
  %v4033 = vunpack.c.l.b16 %v3608
  %v4034 = vunpack.c.l.b16 %v3609
  %v4035 = vunpack.c.l.b16 %v3610
  %v4036 = vunpack.c.l.b16 %v3611
  %v4037 = vunpack.c.l.b16 %v3612
  %v4038 = vunpack.c.l.b16 %v3613
  %v4039 = vunpack.c.l.b16 %v3614
  %v4040 = vunpack.c.l.b16 %v3615
  %v4041 = vpack.c.b16 %v4026, %v4025
  %v4042 = vpack.c.b16 %v4028, %v4027
  %v4043 = vpack.c.b16 %v4030, %v4029
  %v4044 = vpack.c.b16 %v4032, %v4031
  %v4045 = vpack.c.b16 %v4034, %v4033
  %v4046 = vpack.c.b16 %v4036, %v4035
  %v4047 = vpack.c.b16 %v4038, %v4037
  %v4048 = vpack.c.b16 %v4040, %v4039
  %v4050 = vsel %vm3883, %v4041, 0
  %v4053 = vsel %vm3883, %v4042, 0
  %v4056 = vsel %vm3883, %v4043, 0
  %v4059 = vsel %vm3883, %v4044, 0
  %v4062 = vsel %vm3883, %v4045, 0
  %v4065 = vsel %vm3883, %v4046, 0
  %v4068 = vsel %vm3883, %v4047, 0
  %v4071 = vsel %vm3883, %v4048, 0
  %v4074 = vsel %vm3908, %v3616, 0
  %4076 = vmatprep.subr.bf16.mxu0 0
  %4077 = vmatpush1.bf16.msra.mxu0 %v4074
  %4078 = vmatprep.subr.bf16.mxu0 0
  %4079 = vmatpush1.bf16.msra.mxu0 0
  %4080 = vmatprep.subr.bf16.mxu0 0
  %4081 = vmatpush1.bf16.msra.mxu0 0
  %4082 = vmatprep.subr.bf16.mxu0 0
  %4083 = vmatpush1.bf16.msra.mxu0 0
  %4084 = vmatprep.subr.bf16.mxu0 0
  %4085 = vmatpush1.bf16.msra.mxu0 0
  %4086 = vmatprep.subr.bf16.mxu0 0
  %4087 = vmatpush1.bf16.msra.mxu0 0
  %4088 = vmatprep.subr.bf16.mxu0 0
  %4089 = vmatpush1.bf16.msra.mxu0 0
  %4090 = vmatprep.subr.bf16.mxu0 0
  %4091 = vmatpush1.bf16.msra.mxu0 0
  %4092 = vmatprep.subr.bf16.mxu0 0
  %4093 = vmatpush1.bf16.msra.mxu0 0
  %4094 = vmatprep.subr.bf16.mxu0 0
  %4095 = vmatpush1.bf16.msra.mxu0 0
  %4096 = vmatprep.subr.bf16.mxu0 0
  %4097 = vmatpush1.bf16.msra.mxu0 0
  %4098 = vmatprep.subr.bf16.mxu0 0
  %4099 = vmatpush1.bf16.msra.mxu0 0
  %4100 = vmatprep.subr.bf16.mxu0 0
  %4101 = vmatpush1.bf16.msra.mxu0 0
  %4102 = vmatprep.subr.bf16.mxu0 0
  %4103 = vmatpush1.bf16.msra.mxu0 0
  %4104 = vmatprep.subr.bf16.mxu0 0
  %4105 = vmatpush1.bf16.msra.mxu0 0
  %4106 = vmatprep.subr.bf16.mxu0 0
  %4107 = vmatpush1.bf16.msra.mxu0 0
  %4108 = vmatprep.mubr.bf16.mxu0 0
  %4109 = vmatmul.mubr.bf16.gmra.mrb[0].mxu0 %v4050
  %v4110 = vpop.f32.mrb[0].mxu0
  %v4111 = vadd.f32 %v3947, %v4110
  %v4112 = vpop.f32.mrb[0].mxu0
  %v4113 = vpop.f32.mrb[0].mxu0
  %v4114 = vadd.f32 %v3950, %v4113
  %v4115 = vpop.f32.mrb[0].mxu0
  %4116 = vmatprep.mubr.bf16.mxu0 0
  %4117 = vmatmul.mubr.bf16.gmra.mrb[0].mxu0 %v4053
  %v4118 = vpop.f32.mrb[0].mxu0
  %v4119 = vadd.f32 %v3955, %v4118
  %v4120 = vpop.f32.mrb[0].mxu0
  %v4121 = vpop.f32.mrb[0].mxu0
  %v4122 = vadd.f32 %v3958, %v4121
  %v4123 = vpop.f32.mrb[0].mxu0
  %4124 = vmatprep.mubr.bf16.mxu0 0
  %4125 = vmatmul.mubr.bf16.gmra.mrb[0].mxu0 %v4056
  %v4126 = vpop.f32.mrb[0].mxu0
  %v4127 = vadd.f32 %v3963, %v4126
  %v4128 = vpop.f32.mrb[0].mxu0
  %v4129 = vpop.f32.mrb[0].mxu0
  %v4130 = vadd.f32 %v3966, %v4129
  %v4131 = vpop.f32.mrb[0].mxu0
  %4132 = vmatprep.mubr.bf16.mxu0 0
  %4133 = vmatmul.mubr.bf16.gmra.mrb[0].mxu0 %v4059
  %v4134 = vpop.f32.mrb[0].mxu0
  %v4135 = vadd.f32 %v3971, %v4134
  %v4136 = vpop.f32.mrb[0].mxu0
  %v4137 = vpop.f32.mrb[0].mxu0
  %v4138 = vadd.f32 %v3974, %v4137
  %v4139 = vpop.f32.mrb[0].mxu0
  %4140 = vmatprep.mubr.bf16.mxu0 0
  %4141 = vmatmul.mubr.bf16.gmra.mrb[0].mxu0 %v4062
  %v4142 = vpop.f32.mrb[0].mxu0
  %v4143 = vadd.f32 %v3979, %v4142
  %v4144 = vpop.f32.mrb[0].mxu0
  %v4145 = vpop.f32.mrb[0].mxu0
  %v4146 = vadd.f32 %v3982, %v4145
  %v4147 = vpop.f32.mrb[0].mxu0
  %4148 = vmatprep.mubr.bf16.mxu0 0
  %4149 = vmatmul.mubr.bf16.gmra.mrb[0].mxu0 %v4065
  %v4150 = vpop.f32.mrb[0].mxu0
  %v4151 = vadd.f32 %v3987, %v4150
  %v4152 = vpop.f32.mrb[0].mxu0
  %v4153 = vpop.f32.mrb[0].mxu0
  %v4154 = vadd.f32 %v3990, %v4153
  %v4155 = vpop.f32.mrb[0].mxu0
  %4156 = vmatprep.mubr.bf16.mxu0 0
  %4157 = vmatmul.mubr.bf16.gmra.mrb[0].mxu0 %v4068
  %v4158 = vpop.f32.mrb[0].mxu0
  %v4159 = vadd.f32 %v3995, %v4158
  %v4160 = vpop.f32.mrb[0].mxu0
  %v4161 = vpop.f32.mrb[0].mxu0
  %v4162 = vadd.f32 %v3998, %v4161
  %v4163 = vpop.f32.mrb[0].mxu0
  %4164 = vmatprep.mubr.bf16.mxu0 0
  %4165 = vmatmul.mubr.bf16.gmra.mrb[0].mxu0 %v4071
  %v4166 = vpop.f32.mrb[0].mxu0
  %v4167 = vadd.f32 %v4003, %v4166
  %v4168 = vpop.f32.mrb[0].mxu0
  %v4169 = vpop.f32.mrb[0].mxu0
  %v4170 = vadd.f32 %v4006, %v4169
  %v4171 = vpop.f32.mrb[0].mxu0
  %4172 = vdwg.mxu0
  %v4173 = vld [vmem:[#allocation3] sm:$0xe]
  %v4174 = vld [vmem:[#allocation3 + $0x8] sm:$0xe]
  %v4175 = vld [vmem:[#allocation3 + $0x10] sm:$0xe]
  %v4176 = vld [vmem:[#allocation3 + $0x18] sm:$0xe]
  %v4177 = vld [vmem:[#allocation3 + $0x20] sm:$0xe]
  %v4178 = vld [vmem:[#allocation3 + $0x28] sm:$0xe]
  %v4179 = vld [vmem:[#allocation3 + $0x30] sm:$0xe]
  %v4180 = vld [vmem:[#allocation3 + $0x38] sm:$0xe]
  %v4181 = vld [vmem:[#allocation3 + $0x50] sm:$0xe]
  %v4182 = vld [vmem:[#allocation3 + $0x58] sm:$0xe]
  %v4183 = vld [vmem:[#allocation3 + $0x60] sm:$0xe]
  %v4184 = vld [vmem:[#allocation3 + $0x68] sm:$0xe]
  %v4185 = vld [vmem:[#allocation3 + $0x70] sm:$0xe]
  %v4186 = vld [vmem:[#allocation3 + $0x78] sm:$0xe]
  %v4187 = vld [vmem:[#allocation3 + $0x80] sm:$0xe]
  %v4188 = vld [vmem:[#allocation3 + $0x88] sm:$0xe]
  %v4221 = vrot.slane %v4173, 5
  %v4222 = vrot.slane %v4221, 4
  %v4223 = vrot.slane %v3617, 5
  %v4224 = vsel %vm1208, %v4222, %v4223
  %v4225 = vrot.slane %v4174, 5
  %v4226 = vrot.slane %v4225, 4
  %v4227 = vrot.slane %v3618, 5
  %v4228 = vsel %vm1208, %v4226, %v4227
  %v4229 = vrot.slane %v4175, 5
  %v4230 = vrot.slane %v4229, 4
  %v4231 = vrot.slane %v3619, 5
  %v4232 = vsel %vm1208, %v4230, %v4231
  %v4233 = vrot.slane %v4176, 5
  %v4234 = vrot.slane %v4233, 4
  %v4235 = vrot.slane %v3620, 5
  %v4236 = vsel %vm1208, %v4234, %v4235
  %v4237 = vrot.slane %v4177, 5
  %v4238 = vrot.slane %v4237, 4
  %v4239 = vrot.slane %v3621, 5
  %v4240 = vsel %vm1208, %v4238, %v4239
  %v4241 = vrot.slane %v4178, 5
  %v4242 = vrot.slane %v4241, 4
  %v4243 = vrot.slane %v3622, 5
  %v4244 = vsel %vm1208, %v4242, %v4243
  %v4245 = vrot.slane %v4179, 5
  %v4246 = vrot.slane %v4245, 4
  %v4247 = vrot.slane %v3623, 5
  %v4248 = vsel %vm1208, %v4246, %v4247
  %v4249 = vrot.slane %v4180, 5
  %v4250 = vrot.slane %v4249, 4
  %v4251 = vrot.slane %v3624, 5
  %v4252 = vsel %vm1208, %v4250, %v4251
  %v4253 = vrot.slane %v4181, 5
  %v4254 = vrot.slane %v4253, 4
  %v4255 = vrot.slane %v3625, 5
  %v4256 = vsel %vm1208, %v4254, %v4255
  %v4257 = vrot.slane %v4182, 5
  %v4258 = vrot.slane %v4257, 4
  %v4259 = vrot.slane %v3626, 5
  %v4260 = vsel %vm1208, %v4258, %v4259
  %v4261 = vrot.slane %v4183, 5
  %v4262 = vrot.slane %v4261, 4
  %v4263 = vrot.slane %v3627, 5
  %v4264 = vsel %vm1208, %v4262, %v4263
  %v4265 = vrot.slane %v4184, 5
  %v4266 = vrot.slane %v4265, 4
  %v4267 = vrot.slane %v3628, 5
  %v4268 = vsel %vm1208, %v4266, %v4267
  %v4269 = vrot.slane %v4185, 5
  %v4270 = vrot.slane %v4269, 4
  %v4271 = vrot.slane %v3629, 5
  %v4272 = vsel %vm1208, %v4270, %v4271
  %v4273 = vrot.slane %v4186, 5
  %v4274 = vrot.slane %v4273, 4
  %v4275 = vrot.slane %v3630, 5
  %v4276 = vsel %vm1208, %v4274, %v4275
  %v4277 = vrot.slane %v4187, 5
  %v4278 = vrot.slane %v4277, 4
  %v4279 = vrot.slane %v3631, 5
  %v4280 = vsel %vm1208, %v4278, %v4279
  %v4281 = vrot.slane %v4188, 5
  %v4282 = vrot.slane %v4281, 4
  %v4283 = vrot.slane %v3632, 5
  %v4284 = vsel %vm1208, %v4282, %v4283
  %s4285 = scalar_lea.vmem %s3, 8
  %v4286 = vld [vmem:[%s4285] sm:$0xf]
  %v4287 = vunpack.c.l.b16 %v4224
  %v4288 = vunpack.c.l.b16 %v4228
  %v4289 = vunpack.c.l.b16 %v4232
  %v4290 = vunpack.c.l.b16 %v4236
  %v4291 = vunpack.c.l.b16 %v4240
  %v4292 = vunpack.c.l.b16 %v4244
  %v4293 = vunpack.c.l.b16 %v4248
  %v4294 = vunpack.c.l.b16 %v4252
  %v4295 = vunpack.c.l.b16 %v4256
  %v4296 = vunpack.c.l.b16 %v4260
  %v4297 = vunpack.c.l.b16 %v4264
  %v4298 = vunpack.c.l.b16 %v4268
  %v4299 = vunpack.c.l.b16 %v4272
  %v4300 = vunpack.c.l.b16 %v4276
  %v4301 = vunpack.c.l.b16 %v4280
  %v4302 = vunpack.c.l.b16 %v4284
  %v4303 = vpack.c.b16 %v4288, %v4287
  %v4304 = vpack.c.b16 %v4290, %v4289
  %v4305 = vpack.c.b16 %v4292, %v4291
  %v4306 = vpack.c.b16 %v4294, %v4293
  %v4307 = vpack.c.b16 %v4296, %v4295
  %v4308 = vpack.c.b16 %v4298, %v4297
  %v4309 = vpack.c.b16 %v4300, %v4299
  %v4310 = vpack.c.b16 %v4302, %v4301
  %v4312 = vsel %vm3883, %v4303, 0
  %v4315 = vsel %vm3883, %v4304, 0
  %v4318 = vsel %vm3883, %v4305, 0
  %v4321 = vsel %vm3883, %v4306, 0
  %v4324 = vsel %vm3883, %v4307, 0
  %v4327 = vsel %vm3883, %v4308, 0
  %v4330 = vsel %vm3883, %v4309, 0
  %v4333 = vsel %vm3883, %v4310, 0
  %v4336 = vsel %vm3908, %v4286, 0
  %4338 = vmatprep.subr.bf16.mxu0 0
  %4339 = vmatpush1.bf16.msra.mxu0 %v4336
  %4340 = vmatprep.subr.bf16.mxu0 0
  %4341 = vmatpush1.bf16.msra.mxu0 0
  %4342 = vmatprep.subr.bf16.mxu0 0
  %4343 = vmatpush1.bf16.msra.mxu0 0
  %4344 = vmatprep.subr.bf16.mxu0 0
  %4345 = vmatpush1.bf16.msra.mxu0 0
  %4346 = vmatprep.subr.bf16.mxu0 0
  %4347 = vmatpush1.bf16.msra.mxu0 0
  %4348 = vmatprep.subr.bf16.mxu0 0
  %4349 = vmatpush1.bf16.msra.mxu0 0
  %4350 = vmatprep.subr.bf16.mxu0 0
  %4351 = vmatpush1.bf16.msra.mxu0 0
  %4352 = vmatprep.subr.bf16.mxu0 0
  %4353 = vmatpush1.bf16.msra.mxu0 0
  %4354 = vmatprep.subr.bf16.mxu0 0
  %4355 = vmatpush1.bf16.msra.mxu0 0
  %4356 = vmatprep.subr.bf16.mxu0 0
  %4357 = vmatpush1.bf16.msra.mxu0 0
  %4358 = vmatprep.subr.bf16.mxu0 0
  %4359 = vmatpush1.bf16.msra.mxu0 0
  %4360 = vmatprep.subr.bf16.mxu0 0
  %4361 = vmatpush1.bf16.msra.mxu0 0
  %4362 = vmatprep.subr.bf16.mxu0 0
  %4363 = vmatpush1.bf16.msra.mxu0 0
  %4364 = vmatprep.subr.bf16.mxu0 0
  %4365 = vmatpush1.bf16.msra.mxu0 0
  %4366 = vmatprep.subr.bf16.mxu0 0
  %4367 = vmatpush1.bf16.msra.mxu0 0
  %4368 = vmatprep.subr.bf16.mxu0 0
  %4369 = vmatpush1.bf16.msra.mxu0 0
  %4370 = vmatprep.mubr.bf16.mxu0 0
  %4371 = vmatmul.mubr.bf16.gmra.mrb[0].mxu0 %v4312
  %v4372 = vpop.f32.mrb[0].mxu0
  %v4373 = vadd.f32 0.0, %v4372
  %v4374 = vpop.f32.mrb[0].mxu0
  %v4375 = vpop.f32.mrb[0].mxu0
  %v4376 = vadd.f32 0.0, %v4375
  %v4377 = vpop.f32.mrb[0].mxu0
  %4378 = vmatprep.mubr.bf16.mxu0 0
  %4379 = vmatmul.mubr.bf16.gmra.mrb[0].mxu0 %v4315
  %v4380 = vpop.f32.mrb[0].mxu0
  %v4381 = vadd.f32 0.0, %v4380
  %v4382 = vpop.f32.mrb[0].mxu0
  %v4383 = vpop.f32.mrb[0].mxu0
  %v4384 = vadd.f32 0.0, %v4383
  %v4385 = vpop.f32.mrb[0].mxu0
  %4386 = vmatprep.mubr.bf16.mxu0 0
  %4387 = vmatmul.mubr.bf16.gmra.mrb[0].mxu0 %v4318
  %v4388 = vpop.f32.mrb[0].mxu0
  %v4389 = vadd.f32 0.0, %v4388
  %v4390 = vpop.f32.mrb[0].mxu0
  %v4391 = vpop.f32.mrb[0].mxu0
  %v4392 = vadd.f32 0.0, %v4391
  %v4393 = vpop.f32.mrb[0].mxu0
  %4394 = vmatprep.mubr.bf16.mxu0 0
  %4395 = vmatmul.mubr.bf16.gmra.mrb[0].mxu0 %v4321
  %v4396 = vpop.f32.mrb[0].mxu0
  %v4397 = vadd.f32 0.0, %v4396
  %v4398 = vpop.f32.mrb[0].mxu0
  %v4399 = vpop.f32.mrb[0].mxu0
  %v4400 = vadd.f32 0.0, %v4399
  %v4401 = vpop.f32.mrb[0].mxu0
  %4402 = vmatprep.mubr.bf16.mxu0 0
  %4403 = vmatmul.mubr.bf16.gmra.mrb[0].mxu0 %v4324
  %v4404 = vpop.f32.mrb[0].mxu0
  %v4405 = vadd.f32 0.0, %v4404
  %v4406 = vpop.f32.mrb[0].mxu0
  %v4407 = vpop.f32.mrb[0].mxu0
  %v4408 = vadd.f32 0.0, %v4407
  %v4409 = vpop.f32.mrb[0].mxu0
  %4410 = vmatprep.mubr.bf16.mxu0 0
  %4411 = vmatmul.mubr.bf16.gmra.mrb[0].mxu0 %v4327
  %v4412 = vpop.f32.mrb[0].mxu0
  %v4413 = vadd.f32 0.0, %v4412
  %v4414 = vpop.f32.mrb[0].mxu0
  %v4415 = vpop.f32.mrb[0].mxu0
  %v4416 = vadd.f32 0.0, %v4415
  %v4417 = vpop.f32.mrb[0].mxu0
  %4418 = vmatprep.mubr.bf16.mxu0 0
  %4419 = vmatmul.mubr.bf16.gmra.mrb[0].mxu0 %v4330
  %v4420 = vpop.f32.mrb[0].mxu0
  %v4421 = vadd.f32 0.0, %v4420
  %v4422 = vpop.f32.mrb[0].mxu0
  %v4423 = vpop.f32.mrb[0].mxu0
  %v4424 = vadd.f32 0.0, %v4423
  %v4425 = vpop.f32.mrb[0].mxu0
  %4426 = vmatprep.mubr.bf16.mxu0 0
  %4427 = vmatmul.mubr.bf16.gmra.mrb[0].mxu0 %v4333
  %v4428 = vpop.f32.mrb[0].mxu0
  %v4429 = vadd.f32 0.0, %v4428
  %v4430 = vpop.f32.mrb[0].mxu0
  %v4431 = vpop.f32.mrb[0].mxu0
  %v4432 = vadd.f32 0.0, %v4431
  %v4433 = vpop.f32.mrb[0].mxu0
  %4434 = vdwg.mxu0
  %v4435 = vadd.f32 %v4111, %v4373
  %v4436 = vadd.f32 %v4114, %v4376
  %v4437 = vadd.f32 %v4119, %v4381
  %v4438 = vadd.f32 %v4122, %v4384
  %v4439 = vadd.f32 %v4127, %v4389
  %v4440 = vadd.f32 %v4130, %v4392
  %v4441 = vadd.f32 %v4135, %v4397
  %v4442 = vadd.f32 %v4138, %v4400
  %v4443 = vadd.f32 %v4143, %v4405
  %v4444 = vadd.f32 %v4146, %v4408
  %v4445 = vadd.f32 %v4151, %v4413
  %v4446 = vadd.f32 %v4154, %v4416
  %v4447 = vadd.f32 %v4159, %v4421
  %v4448 = vadd.f32 %v4162, %v4424
  %v4449 = vadd.f32 %v4167, %v4429
  %v4450 = vadd.f32 %v4170, %v4432
  %v4451 = vld [vmem:[%s3499] sm:$0xf]
  %v4452 = vld [vmem:[%s3499 + $0x8] sm:$0xf]
  %v4453 = vld [vmem:[%s3499 + $0x10] sm:$0xf]
  %v4454 = vld [vmem:[%s3499 + $0x18] sm:$0xf]
  %v4455 = vld [vmem:[%s3499 + $0x20] sm:$0xf]
  %v4456 = vld [vmem:[%s3499 + $0x28] sm:$0xf]
  %v4457 = vld [vmem:[%s3499 + $0x30] sm:$0xf]
  %v4458 = vld [vmem:[%s3499 + $0x38] sm:$0xf]
  %v4459 = vld [vmem:[%s3499 + $0x50] sm:$0xf]
  %v4460 = vld [vmem:[%s3499 + $0x58] sm:$0xf]
  %v4461 = vld [vmem:[%s3499 + $0x60] sm:$0xf]
  %v4462 = vld [vmem:[%s3499 + $0x68] sm:$0xf]
  %v4463 = vld [vmem:[%s3499 + $0x70] sm:$0xf]
  %v4464 = vld [vmem:[%s3499 + $0x78] sm:$0xf]
  %v4465 = vld [vmem:[%s3499 + $0x80] sm:$0xf]
  %v4466 = vld [vmem:[%s3499 + $0x88] sm:$0xf]
  %s4467 = scalar_lea.vmem %s3, 12
  %v4468 = vld [vmem:[%s4467] sm:$0xf]
  %v4485 = vunpack.c.l.b16 %v4451
  %v4486 = vunpack.c.l.b16 %v4452
  %v4487 = vunpack.c.l.b16 %v4453
  %v4488 = vunpack.c.l.b16 %v4454
  %v4489 = vunpack.c.l.b16 %v4455
  %v4490 = vunpack.c.l.b16 %v4456
  %v4491 = vunpack.c.l.b16 %v4457
  %v4492 = vunpack.c.l.b16 %v4458
  %v4493 = vunpack.c.l.b16 %v4459
  %v4494 = vunpack.c.l.b16 %v4460
  %v4495 = vunpack.c.l.b16 %v4461
  %v4496 = vunpack.c.l.b16 %v4462
  %v4497 = vunpack.c.l.b16 %v4463
  %v4498 = vunpack.c.l.b16 %v4464
  %v4499 = vunpack.c.l.b16 %v4465
  %v4500 = vunpack.c.l.b16 %v4466
  %v4501 = vpack.c.b16 %v4486, %v4485
  %v4502 = vpack.c.b16 %v4488, %v4487
  %v4503 = vpack.c.b16 %v4490, %v4489
  %v4504 = vpack.c.b16 %v4492, %v4491
  %v4505 = vpack.c.b16 %v4494, %v4493
  %v4506 = vpack.c.b16 %v4496, %v4495
  %v4507 = vpack.c.b16 %v4498, %v4497
  %v4508 = vpack.c.b16 %v4500, %v4499
  %v4510 = vsel %vm3883, %v4501, 0
  %v4513 = vsel %vm3883, %v4502, 0
  %v4516 = vsel %vm3883, %v4503, 0
  %v4519 = vsel %vm3883, %v4504, 0
  %v4522 = vsel %vm3883, %v4505, 0
  %v4525 = vsel %vm3883, %v4506, 0
  %v4528 = vsel %vm3883, %v4507, 0
  %v4531 = vsel %vm3883, %v4508, 0
  %v4534 = vsel %vm3908, %v4468, 0
  %4536 = vmatprep.subr.bf16.mxu0 0
  %4537 = vmatpush1.bf16.msra.mxu0 %v4534
  %4538 = vmatprep.subr.bf16.mxu0 0
  %4539 = vmatpush1.bf16.msra.mxu0 0
  %4540 = vmatprep.subr.bf16.mxu0 0
  %4541 = vmatpush1.bf16.msra.mxu0 0
  %4542 = vmatprep.subr.bf16.mxu0 0
  %4543 = vmatpush1.bf16.msra.mxu0 0
  %4544 = vmatprep.subr.bf16.mxu0 0
  %4545 = vmatpush1.bf16.msra.mxu0 0
  %4546 = vmatprep.subr.bf16.mxu0 0
  %4547 = vmatpush1.bf16.msra.mxu0 0
  %4548 = vmatprep.subr.bf16.mxu0 0
  %4549 = vmatpush1.bf16.msra.mxu0 0
  %4550 = vmatprep.subr.bf16.mxu0 0
  %4551 = vmatpush1.bf16.msra.mxu0 0
  %4552 = vmatprep.subr.bf16.mxu0 0
  %4553 = vmatpush1.bf16.msra.mxu0 0
  %4554 = vmatprep.subr.bf16.mxu0 0
  %4555 = vmatpush1.bf16.msra.mxu0 0
  %4556 = vmatprep.subr.bf16.mxu0 0
  %4557 = vmatpush1.bf16.msra.mxu0 0
  %4558 = vmatprep.subr.bf16.mxu0 0
  %4559 = vmatpush1.bf16.msra.mxu0 0
  %4560 = vmatprep.subr.bf16.mxu0 0
  %4561 = vmatpush1.bf16.msra.mxu0 0
  %4562 = vmatprep.subr.bf16.mxu0 0
  %4563 = vmatpush1.bf16.msra.mxu0 0
  %4564 = vmatprep.subr.bf16.mxu0 0
  %4565 = vmatpush1.bf16.msra.mxu0 0
  %4566 = vmatprep.subr.bf16.mxu0 0
  %4567 = vmatpush1.bf16.msra.mxu0 0
  %4568 = vmatprep.mubr.bf16.mxu0 0
  %4569 = vmatmul.mubr.bf16.gmra.mrb[0].mxu0 %v4510
  %v4570 = vpop.f32.mrb[0].mxu0
  %v4571 = vadd.f32 0.0, %v4570
  %v4572 = vpop.f32.mrb[0].mxu0
  %v4573 = vpop.f32.mrb[0].mxu0
  %v4574 = vadd.f32 0.0, %v4573
  %v4575 = vpop.f32.mrb[0].mxu0
  %4576 = vmatprep.mubr.bf16.mxu0 0
  %4577 = vmatmul.mubr.bf16.gmra.mrb[0].mxu0 %v4513
  %v4578 = vpop.f32.mrb[0].mxu0
  %v4579 = vadd.f32 0.0, %v4578
  %v4580 = vpop.f32.mrb[0].mxu0
  %v4581 = vpop.f32.mrb[0].mxu0
  %v4582 = vadd.f32 0.0, %v4581
  %v4583 = vpop.f32.mrb[0].mxu0
  %4584 = vmatprep.mubr.bf16.mxu0 0
  %4585 = vmatmul.mubr.bf16.gmra.mrb[0].mxu0 %v4516
  %v4586 = vpop.f32.mrb[0].mxu0
  %v4587 = vadd.f32 0.0, %v4586
  %v4588 = vpop.f32.mrb[0].mxu0
  %v4589 = vpop.f32.mrb[0].mxu0
  %v4590 = vadd.f32 0.0, %v4589
  %v4591 = vpop.f32.mrb[0].mxu0
  %4592 = vmatprep.mubr.bf16.mxu0 0
  %4593 = vmatmul.mubr.bf16.gmra.mrb[0].mxu0 %v4519
  %v4594 = vpop.f32.mrb[0].mxu0
  %v4595 = vadd.f32 0.0, %v4594
  %v4596 = vpop.f32.mrb[0].mxu0
  %v4597 = vpop.f32.mrb[0].mxu0
  %v4598 = vadd.f32 0.0, %v4597
  %v4599 = vpop.f32.mrb[0].mxu0
  %4600 = vmatprep.mubr.bf16.mxu0 0
  %4601 = vmatmul.mubr.bf16.gmra.mrb[0].mxu0 %v4522
  %v4602 = vpop.f32.mrb[0].mxu0
  %v4603 = vadd.f32 0.0, %v4602
  %v4604 = vpop.f32.mrb[0].mxu0
  %v4605 = vpop.f32.mrb[0].mxu0
  %v4606 = vadd.f32 0.0, %v4605
  %v4607 = vpop.f32.mrb[0].mxu0
  %4608 = vmatprep.mubr.bf16.mxu0 0
  %4609 = vmatmul.mubr.bf16.gmra.mrb[0].mxu0 %v4525
  %v4610 = vpop.f32.mrb[0].mxu0
  %v4611 = vadd.f32 0.0, %v4610
  %v4612 = vpop.f32.mrb[0].mxu0
  %v4613 = vpop.f32.mrb[0].mxu0
  %v4614 = vadd.f32 0.0, %v4613
  %v4615 = vpop.f32.mrb[0].mxu0
  %4616 = vmatprep.mubr.bf16.mxu0 0
  %4617 = vmatmul.mubr.bf16.gmra.mrb[0].mxu0 %v4528
  %v4618 = vpop.f32.mrb[0].mxu0
  %v4619 = vadd.f32 0.0, %v4618
  %v4620 = vpop.f32.mrb[0].mxu0
  %v4621 = vpop.f32.mrb[0].mxu0
  %v4622 = vadd.f32 0.0, %v4621
  %v4623 = vpop.f32.mrb[0].mxu0
  %4624 = vmatprep.mubr.bf16.mxu0 0
  %4625 = vmatmul.mubr.bf16.gmra.mrb[0].mxu0 %v4531
  %v4626 = vpop.f32.mrb[0].mxu0
  %v4627 = vadd.f32 0.0, %v4626
  %v4628 = vpop.f32.mrb[0].mxu0
  %v4629 = vpop.f32.mrb[0].mxu0
  %v4630 = vadd.f32 0.0, %v4629
  %v4631 = vpop.f32.mrb[0].mxu0
  %4632 = vdwg.mxu0
  %v4633 = vadd.f32 %v4435, %v4571
  %v4634 = vadd.f32 %v4436, %v4574
  %v4635 = vadd.f32 %v4437, %v4579
  %v4636 = vadd.f32 %v4438, %v4582
  %v4637 = vadd.f32 %v4439, %v4587
  %v4638 = vadd.f32 %v4440, %v4590
  %v4639 = vadd.f32 %v4441, %v4595
  %v4640 = vadd.f32 %v4442, %v4598
  %v4641 = vadd.f32 %v4443, %v4603
  %v4642 = vadd.f32 %v4444, %v4606
  %v4643 = vadd.f32 %v4445, %v4611
  %v4644 = vadd.f32 %v4446, %v4614
  %v4645 = vadd.f32 %v4447, %v4619
  %v4646 = vadd.f32 %v4448, %v4622
  %v4647 = vadd.f32 %v4449, %v4627
  %v4648 = vadd.f32 %v4450, %v4630
  %v4649 = vld [vmem:[%s3499] sm:$0xf]
  %v4650 = vld [vmem:[%s3499 + $0x4] sm:$0x1]
  %v4651 = vld [vmem:[%s3499 + $0x8] sm:$0xf]
  %v4652 = vld [vmem:[%s3499 + $0xc] sm:$0x1]
  %v4653 = vld [vmem:[%s3499 + $0x10] sm:$0xf]
  %v4654 = vld [vmem:[%s3499 + $0x14] sm:$0x1]
  %v4655 = vld [vmem:[%s3499 + $0x18] sm:$0xf]
  %v4656 = vld [vmem:[%s3499 + $0x1c] sm:$0x1]
  %v4657 = vld [vmem:[%s3499 + $0x20] sm:$0xf]
  %v4658 = vld [vmem:[%s3499 + $0x24] sm:$0x1]
  %v4659 = vld [vmem:[%s3499 + $0x28] sm:$0xf]
  %v4660 = vld [vmem:[%s3499 + $0x2c] sm:$0x1]
  %v4661 = vld [vmem:[%s3499 + $0x30] sm:$0xf]
  %v4662 = vld [vmem:[%s3499 + $0x34] sm:$0x1]
  %v4663 = vld [vmem:[%s3499 + $0x38] sm:$0xf]
  %v4664 = vld [vmem:[%s3499 + $0x3c] sm:$0x1]
  %v4665 = vld [vmem:[%s3499 + $0x50] sm:$0xf]
  %v4666 = vld [vmem:[%s3499 + $0x54] sm:$0x1]
  %v4667 = vld [vmem:[%s3499 + $0x58] sm:$0xf]
  %v4668 = vld [vmem:[%s3499 + $0x5c] sm:$0x1]
  %v4669 = vld [vmem:[%s3499 + $0x60] sm:$0xf]
  %v4670 = vld [vmem:[%s3499 + $0x64] sm:$0x1]
  %v4671 = vld [vmem:[%s3499 + $0x68] sm:$0xf]
  %v4672 = vld [vmem:[%s3499 + $0x6c] sm:$0x1]
  %v4673 = vld [vmem:[%s3499 + $0x70] sm:$0xf]
  %v4674 = vld [vmem:[%s3499 + $0x74] sm:$0x1]
  %v4675 = vld [vmem:[%s3499 + $0x78] sm:$0xf]
  %v4676 = vld [vmem:[%s3499 + $0x7c] sm:$0x1]
  %v4677 = vld [vmem:[%s3499 + $0x80] sm:$0xf]
  %v4678 = vld [vmem:[%s3499 + $0x84] sm:$0x1]
  %v4679 = vld [vmem:[%s3499 + $0x88] sm:$0xf]
  %v4680 = vld [vmem:[%s3499 + $0x8c] sm:$0x1]
  %v4682 = vshrl.u32 %v4649, 16
  %v4684 = vrot.slane %v4682, 4
  %v4685 = vshll.u32 %v4649, 16
  %v4687 = vrot.slane %v4685, 5
  %v4688 = vor.u32 %v4684, %v4687
  %v4689 = vrot.slane %v4688, 4
  %v4691 = vshll.u32 %v4650, 16
  %v4693 = vrot.slane %v4691, 5
  %v4694 = vsel %vm617, %v4689, %v4693
  %v4696 = vshrl.u32 %v4651, 16
  %v4698 = vrot.slane %v4696, 4
  %v4699 = vshll.u32 %v4651, 16
  %v4701 = vrot.slane %v4699, 5
  %v4702 = vor.u32 %v4698, %v4701
  %v4703 = vrot.slane %v4702, 4
  %v4705 = vshll.u32 %v4652, 16
  %v4707 = vrot.slane %v4705, 5
  %v4708 = vsel %vm617, %v4703, %v4707
  %v4710 = vshrl.u32 %v4653, 16
  %v4712 = vrot.slane %v4710, 4
  %v4713 = vshll.u32 %v4653, 16
  %v4715 = vrot.slane %v4713, 5
  %v4716 = vor.u32 %v4712, %v4715
  %v4717 = vrot.slane %v4716, 4
  %v4719 = vshll.u32 %v4654, 16
  %v4721 = vrot.slane %v4719, 5
  %v4722 = vsel %vm617, %v4717, %v4721
  %v4724 = vshrl.u32 %v4655, 16
  %v4726 = vrot.slane %v4724, 4
  %v4727 = vshll.u32 %v4655, 16
  %v4729 = vrot.slane %v4727, 5
  %v4730 = vor.u32 %v4726, %v4729
  %v4731 = vrot.slane %v4730, 4
  %v4733 = vshll.u32 %v4656, 16
  %v4735 = vrot.slane %v4733, 5
  %v4736 = vsel %vm617, %v4731, %v4735
  %v4738 = vshrl.u32 %v4657, 16
  %v4740 = vrot.slane %v4738, 4
  %v4741 = vshll.u32 %v4657, 16
  %v4743 = vrot.slane %v4741, 5
  %v4744 = vor.u32 %v4740, %v4743
  %v4745 = vrot.slane %v4744, 4
  %v4747 = vshll.u32 %v4658, 16
  %v4749 = vrot.slane %v4747, 5
  %v4750 = vsel %vm617, %v4745, %v4749
  %v4752 = vshrl.u32 %v4659, 16
  %v4754 = vrot.slane %v4752, 4
  %v4755 = vshll.u32 %v4659, 16
  %v4757 = vrot.slane %v4755, 5
  %v4758 = vor.u32 %v4754, %v4757
  %v4759 = vrot.slane %v4758, 4
  %v4761 = vshll.u32 %v4660, 16
  %v4763 = vrot.slane %v4761, 5
  %v4764 = vsel %vm617, %v4759, %v4763
  %v4766 = vshrl.u32 %v4661, 16
  %v4768 = vrot.slane %v4766, 4
  %v4769 = vshll.u32 %v4661, 16
  %v4771 = vrot.slane %v4769, 5
  %v4772 = vor.u32 %v4768, %v4771
  %v4773 = vrot.slane %v4772, 4
  %v4775 = vshll.u32 %v4662, 16
  %v4777 = vrot.slane %v4775, 5
  %v4778 = vsel %vm617, %v4773, %v4777
  %v4780 = vshrl.u32 %v4663, 16
  %v4782 = vrot.slane %v4780, 4
  %v4783 = vshll.u32 %v4663, 16
  %v4785 = vrot.slane %v4783, 5
  %v4786 = vor.u32 %v4782, %v4785
  %v4787 = vrot.slane %v4786, 4
  %v4789 = vshll.u32 %v4664, 16
  %v4791 = vrot.slane %v4789, 5
  %v4792 = vsel %vm617, %v4787, %v4791
  %v4794 = vshrl.u32 %v4665, 16
  %v4796 = vrot.slane %v4794, 4
  %v4797 = vshll.u32 %v4665, 16
  %v4799 = vrot.slane %v4797, 5
  %v4800 = vor.u32 %v4796, %v4799
  %v4801 = vrot.slane %v4800, 4
  %v4803 = vshll.u32 %v4666, 16
  %v4805 = vrot.slane %v4803, 5
  %v4806 = vsel %vm617, %v4801, %v4805
  %v4808 = vshrl.u32 %v4667, 16
  %v4810 = vrot.slane %v4808, 4
  %v4811 = vshll.u32 %v4667, 16
  %v4813 = vrot.slane %v4811, 5
  %v4814 = vor.u32 %v4810, %v4813
  %v4815 = vrot.slane %v4814, 4
  %v4817 = vshll.u32 %v4668, 16
  %v4819 = vrot.slane %v4817, 5
  %v4820 = vsel %vm617, %v4815, %v4819
  %v4822 = vshrl.u32 %v4669, 16
  %v4824 = vrot.slane %v4822, 4
  %v4825 = vshll.u32 %v4669, 16
  %v4827 = vrot.slane %v4825, 5
  %v4828 = vor.u32 %v4824, %v4827
  %v4829 = vrot.slane %v4828, 4
  %v4831 = vshll.u32 %v4670, 16
  %v4833 = vrot.slane %v4831, 5
  %v4834 = vsel %vm617, %v4829, %v4833
  %v4836 = vshrl.u32 %v4671, 16
  %v4838 = vrot.slane %v4836, 4
  %v4839 = vshll.u32 %v4671, 16
  %v4841 = vrot.slane %v4839, 5
  %v4842 = vor.u32 %v4838, %v4841
  %v4843 = vrot.slane %v4842, 4
  %v4845 = vshll.u32 %v4672, 16
  %v4847 = vrot.slane %v4845, 5
  %v4848 = vsel %vm617, %v4843, %v4847
  %v4850 = vshrl.u32 %v4673, 16
  %v4852 = vrot.slane %v4850, 4
  %v4853 = vshll.u32 %v4673, 16
  %v4855 = vrot.slane %v4853, 5
  %v4856 = vor.u32 %v4852, %v4855
  %v4857 = vrot.slane %v4856, 4
  %v4859 = vshll.u32 %v4674, 16
  %v4861 = vrot.slane %v4859, 5
  %v4862 = vsel %vm617, %v4857, %v4861
  %v4864 = vshrl.u32 %v4675, 16
  %v4866 = vrot.slane %v4864, 4
  %v4867 = vshll.u32 %v4675, 16
  %v4869 = vrot.slane %v4867, 5
  %v4870 = vor.u32 %v4866, %v4869
  %v4871 = vrot.slane %v4870, 4
  %v4873 = vshll.u32 %v4676, 16
  %v4875 = vrot.slane %v4873, 5
  %v4876 = vsel %vm617, %v4871, %v4875
  %v4878 = vshrl.u32 %v4677, 16
  %v4880 = vrot.slane %v4878, 4
  %v4881 = vshll.u32 %v4677, 16
  %v4883 = vrot.slane %v4881, 5
  %v4884 = vor.u32 %v4880, %v4883
  %v4885 = vrot.slane %v4884, 4
  %v4887 = vshll.u32 %v4678, 16
  %v4889 = vrot.slane %v4887, 5
  %v4890 = vsel %vm617, %v4885, %v4889
  %v4892 = vshrl.u32 %v4679, 16
  %v4894 = vrot.slane %v4892, 4
  %v4895 = vshll.u32 %v4679, 16
  %v4897 = vrot.slane %v4895, 5
  %v4898 = vor.u32 %v4894, %v4897
  %v4899 = vrot.slane %v4898, 4
  %v4901 = vshll.u32 %v4680, 16
  %v4903 = vrot.slane %v4901, 5
  %v4904 = vsel %vm617, %v4899, %v4903
  %s4905 = scalar_lea.vmem %s3, 16
  %v4906 = vld [vmem:[%s4905] sm:$0xf]
  %v4907 = vunpack.c.l.b16 %v4694
  %v4908 = vunpack.c.l.b16 %v4708
  %v4909 = vunpack.c.l.b16 %v4722
  %v4910 = vunpack.c.l.b16 %v4736
  %v4911 = vunpack.c.l.b16 %v4750
  %v4912 = vunpack.c.l.b16 %v4764
  %v4913 = vunpack.c.l.b16 %v4778
  %v4914 = vunpack.c.l.b16 %v4792
  %v4915 = vunpack.c.l.b16 %v4806
  %v4916 = vunpack.c.l.b16 %v4820
  %v4917 = vunpack.c.l.b16 %v4834
  %v4918 = vunpack.c.l.b16 %v4848
  %v4919 = vunpack.c.l.b16 %v4862
  %v4920 = vunpack.c.l.b16 %v4876
  %v4921 = vunpack.c.l.b16 %v4890
  %v4922 = vunpack.c.l.b16 %v4904
  %v4923 = vpack.c.b16 %v4908, %v4907
  %v4924 = vpack.c.b16 %v4910, %v4909
  %v4925 = vpack.c.b16 %v4912, %v4911
  %v4926 = vpack.c.b16 %v4914, %v4913
  %v4927 = vpack.c.b16 %v4916, %v4915
  %v4928 = vpack.c.b16 %v4918, %v4917
  %v4929 = vpack.c.b16 %v4920, %v4919
  %v4930 = vpack.c.b16 %v4922, %v4921
  %v4932 = vsel %vm3883, %v4923, 0
  %v4935 = vsel %vm3883, %v4924, 0
  %v4938 = vsel %vm3883, %v4925, 0
  %v4941 = vsel %vm3883, %v4926, 0
  %v4944 = vsel %vm3883, %v4927, 0
  %v4947 = vsel %vm3883, %v4928, 0
  %v4950 = vsel %vm3883, %v4929, 0
  %v4953 = vsel %vm3883, %v4930, 0
  %v4956 = vsel %vm3908, %v4906, 0
  %4958 = vmatprep.subr.bf16.mxu0 0
  %4959 = vmatpush1.bf16.msra.mxu0 %v4956
  %4960 = vmatprep.subr.bf16.mxu0 0
  %4961 = vmatpush1.bf16.msra.mxu0 0
  %4962 = vmatprep.subr.bf16.mxu0 0
  %4963 = vmatpush1.bf16.msra.mxu0 0
  %4964 = vmatprep.subr.bf16.mxu0 0
  %4965 = vmatpush1.bf16.msra.mxu0 0
  %4966 = vmatprep.subr.bf16.mxu0 0
  %4967 = vmatpush1.bf16.msra.mxu0 0
  %4968 = vmatprep.subr.bf16.mxu0 0
  %4969 = vmatpush1.bf16.msra.mxu0 0
  %4970 = vmatprep.subr.bf16.mxu0 0
  %4971 = vmatpush1.bf16.msra.mxu0 0
  %4972 = vmatprep.subr.bf16.mxu0 0
  %4973 = vmatpush1.bf16.msra.mxu0 0
  %4974 = vmatprep.subr.bf16.mxu0 0
  %4975 = vmatpush1.bf16.msra.mxu0 0
  %4976 = vmatprep.subr.bf16.mxu0 0
  %4977 = vmatpush1.bf16.msra.mxu0 0
  %4978 = vmatprep.subr.bf16.mxu0 0
  %4979 = vmatpush1.bf16.msra.mxu0 0
  %4980 = vmatprep.subr.bf16.mxu0 0
  %4981 = vmatpush1.bf16.msra.mxu0 0
  %4982 = vmatprep.subr.bf16.mxu0 0
  %4983 = vmatpush1.bf16.msra.mxu0 0
  %4984 = vmatprep.subr.bf16.mxu0 0
  %4985 = vmatpush1.bf16.msra.mxu0 0
  %4986 = vmatprep.subr.bf16.mxu0 0
  %4987 = vmatpush1.bf16.msra.mxu0 0
  %4988 = vmatprep.subr.bf16.mxu0 0
  %4989 = vmatpush1.bf16.msra.mxu0 0
  %4990 = vmatprep.mubr.bf16.mxu0 0
  %4991 = vmatmul.mubr.bf16.gmra.mrb[0].mxu0 %v4932
  %v4992 = vpop.f32.mrb[0].mxu0
  %v4993 = vadd.f32 0.0, %v4992
  %v4994 = vpop.f32.mrb[0].mxu0
  %v4995 = vpop.f32.mrb[0].mxu0
  %v4996 = vadd.f32 0.0, %v4995
  %v4997 = vpop.f32.mrb[0].mxu0
  %4998 = vmatprep.mubr.bf16.mxu0 0
  %4999 = vmatmul.mubr.bf16.gmra.mrb[0].mxu0 %v4935
  %v5000 = vpop.f32.mrb[0].mxu0
  %v5001 = vadd.f32 0.0, %v5000
  %v5002 = vpop.f32.mrb[0].mxu0
  %v5003 = vpop.f32.mrb[0].mxu0
  %v5004 = vadd.f32 0.0, %v5003
  %v5005 = vpop.f32.mrb[0].mxu0
  %5006 = vmatprep.mubr.bf16.mxu0 0
  %5007 = vmatmul.mubr.bf16.gmra.mrb[0].mxu0 %v4938
  %v5008 = vpop.f32.mrb[0].mxu0
  %v5009 = vadd.f32 0.0, %v5008
  %v5010 = vpop.f32.mrb[0].mxu0
  %v5011 = vpop.f32.mrb[0].mxu0
  %v5012 = vadd.f32 0.0, %v5011
  %v5013 = vpop.f32.mrb[0].mxu0
  %5014 = vmatprep.mubr.bf16.mxu0 0
  %5015 = vmatmul.mubr.bf16.gmra.mrb[0].mxu0 %v4941
  %v5016 = vpop.f32.mrb[0].mxu0
  %v5017 = vadd.f32 0.0, %v5016
  %v5018 = vpop.f32.mrb[0].mxu0
  %v5019 = vpop.f32.mrb[0].mxu0
  %v5020 = vadd.f32 0.0, %v5019
  %v5021 = vpop.f32.mrb[0].mxu0
  %5022 = vmatprep.mubr.bf16.mxu0 0
  %5023 = vmatmul.mubr.bf16.gmra.mrb[0].mxu0 %v4944
  %v5024 = vpop.f32.mrb[0].mxu0
  %v5025 = vadd.f32 0.0, %v5024
  %v5026 = vpop.f32.mrb[0].mxu0
  %v5027 = vpop.f32.mrb[0].mxu0
  %v5028 = vadd.f32 0.0, %v5027
  %v5029 = vpop.f32.mrb[0].mxu0
  %5030 = vmatprep.mubr.bf16.mxu0 0
  %5031 = vmatmul.mubr.bf16.gmra.mrb[0].mxu0 %v4947
  %v5032 = vpop.f32.mrb[0].mxu0
  %v5033 = vadd.f32 0.0, %v5032
  %v5034 = vpop.f32.mrb[0].mxu0
  %v5035 = vpop.f32.mrb[0].mxu0
  %v5036 = vadd.f32 0.0, %v5035
  %v5037 = vpop.f32.mrb[0].mxu0
  %5038 = vmatprep.mubr.bf16.mxu0 0
  %5039 = vmatmul.mubr.bf16.gmra.mrb[0].mxu0 %v4950
  %v5040 = vpop.f32.mrb[0].mxu0
  %v5041 = vadd.f32 0.0, %v5040
  %v5042 = vpop.f32.mrb[0].mxu0
  %v5043 = vpop.f32.mrb[0].mxu0
  %v5044 = vadd.f32 0.0, %v5043
  %v5045 = vpop.f32.mrb[0].mxu0
  %5046 = vmatprep.mubr.bf16.mxu0 0
  %5047 = vmatmul.mubr.bf16.gmra.mrb[0].mxu0 %v4953
  %v5048 = vpop.f32.mrb[0].mxu0
  %v5049 = vadd.f32 0.0, %v5048
  %v5050 = vpop.f32.mrb[0].mxu0
  %v5051 = vpop.f32.mrb[0].mxu0
  %v5052 = vadd.f32 0.0, %v5051
  %v5053 = vpop.f32.mrb[0].mxu0
  %5054 = vdwg.mxu0
  %v5055 = vadd.f32 %v4633, %v4993
  %v5056 = vadd.f32 %v4634, %v4996
  %v5057 = vadd.f32 %v4635, %v5001
  %v5058 = vadd.f32 %v4636, %v5004
  %v5059 = vadd.f32 %v4637, %v5009
  %v5060 = vadd.f32 %v4638, %v5012
  %v5061 = vadd.f32 %v4639, %v5017
  %v5062 = vadd.f32 %v4640, %v5020
  %v5063 = vadd.f32 %v4641, %v5025
  %v5064 = vadd.f32 %v4642, %v5028
  %v5065 = vadd.f32 %v4643, %v5033
  %v5066 = vadd.f32 %v4644, %v5036
  %v5067 = vadd.f32 %v4645, %v5041
  %v5068 = vadd.f32 %v4646, %v5044
  %v5069 = vadd.f32 %v4647, %v5049
  %v5070 = vadd.f32 %v4648, %v5052
  %v5071 = vld [vmem:[%s3499] sm:$0xe]
  %v5072 = vld [vmem:[%s3499 + $0x8] sm:$0xe]
  %v5073 = vld [vmem:[%s3499 + $0x10] sm:$0xe]
  %v5074 = vld [vmem:[%s3499 + $0x18] sm:$0xe]
  %v5075 = vld [vmem:[%s3499 + $0x20] sm:$0xe]
  %v5076 = vld [vmem:[%s3499 + $0x28] sm:$0xe]
  %v5077 = vld [vmem:[%s3499 + $0x30] sm:$0xe]
  %v5078 = vld [vmem:[%s3499 + $0x38] sm:$0xe]
  %v5079 = vld [vmem:[%s3499 + $0x50] sm:$0xe]
  %v5080 = vld [vmem:[%s3499 + $0x58] sm:$0xe]
  %v5081 = vld [vmem:[%s3499 + $0x60] sm:$0xe]
  %v5082 = vld [vmem:[%s3499 + $0x68] sm:$0xe]
  %v5083 = vld [vmem:[%s3499 + $0x70] sm:$0xe]
  %v5084 = vld [vmem:[%s3499 + $0x78] sm:$0xe]
  %v5085 = vld [vmem:[%s3499 + $0x80] sm:$0xe]
  %v5086 = vld [vmem:[%s3499 + $0x88] sm:$0xe]
  %v5119 = vrot.slane %v5071, 5
  %v5120 = vrot.slane %v5119, 4
  %v5121 = vrot.slane %v4650, 5
  %v5122 = vsel %vm1208, %v5120, %v5121
  %v5123 = vrot.slane %v5072, 5
  %v5124 = vrot.slane %v5123, 4
  %v5125 = vrot.slane %v4652, 5
  %v5126 = vsel %vm1208, %v5124, %v5125
  %v5127 = vrot.slane %v5073, 5
  %v5128 = vrot.slane %v5127, 4
  %v5129 = vrot.slane %v4654, 5
  %v5130 = vsel %vm1208, %v5128, %v5129
  %v5131 = vrot.slane %v5074, 5
  %v5132 = vrot.slane %v5131, 4
  %v5133 = vrot.slane %v4656, 5
  %v5134 = vsel %vm1208, %v5132, %v5133
  %v5135 = vrot.slane %v5075, 5
  %v5136 = vrot.slane %v5135, 4
  %v5137 = vrot.slane %v4658, 5
  %v5138 = vsel %vm1208, %v5136, %v5137
  %v5139 = vrot.slane %v5076, 5
  %v5140 = vrot.slane %v5139, 4
  %v5141 = vrot.slane %v4660, 5
  %v5142 = vsel %vm1208, %v5140, %v5141
  %v5143 = vrot.slane %v5077, 5
  %v5144 = vrot.slane %v5143, 4
  %v5145 = vrot.slane %v4662, 5
  %v5146 = vsel %vm1208, %v5144, %v5145
  %v5147 = vrot.slane %v5078, 5
  %v5148 = vrot.slane %v5147, 4
  %v5149 = vrot.slane %v4664, 5
  %v5150 = vsel %vm1208, %v5148, %v5149
  %v5151 = vrot.slane %v5079, 5
  %v5152 = vrot.slane %v5151, 4
  %v5153 = vrot.slane %v4666, 5
  %v5154 = vsel %vm1208, %v5152, %v5153
  %v5155 = vrot.slane %v5080, 5
  %v5156 = vrot.slane %v5155, 4
  %v5157 = vrot.slane %v4668, 5
  %v5158 = vsel %vm1208, %v5156, %v5157
  %v5159 = vrot.slane %v5081, 5
  %v5160 = vrot.slane %v5159, 4
  %v5161 = vrot.slane %v4670, 5
  %v5162 = vsel %vm1208, %v5160, %v5161
  %v5163 = vrot.slane %v5082, 5
  %v5164 = vrot.slane %v5163, 4
  %v5165 = vrot.slane %v4672, 5
  %v5166 = vsel %vm1208, %v5164, %v5165
  %v5167 = vrot.slane %v5083, 5
  %v5168 = vrot.slane %v5167, 4
  %v5169 = vrot.slane %v4674, 5
  %v5170 = vsel %vm1208, %v5168, %v5169
  %v5171 = vrot.slane %v5084, 5
  %v5172 = vrot.slane %v5171, 4
  %v5173 = vrot.slane %v4676, 5
  %v5174 = vsel %vm1208, %v5172, %v5173
  %v5175 = vrot.slane %v5085, 5
  %v5176 = vrot.slane %v5175, 4
  %v5177 = vrot.slane %v4678, 5
  %v5178 = vsel %vm1208, %v5176, %v5177
  %v5179 = vrot.slane %v5086, 5
  %v5180 = vrot.slane %v5179, 4
  %v5181 = vrot.slane %v4680, 5
  %v5182 = vsel %vm1208, %v5180, %v5181
  %s5183 = scalar_lea.vmem %s3, 20
  %v5184 = vld [vmem:[%s5183] sm:$0xf]
  %v5185 = vunpack.c.l.b16 %v5122
  %v5186 = vunpack.c.l.b16 %v5126
  %v5187 = vunpack.c.l.b16 %v5130
  %v5188 = vunpack.c.l.b16 %v5134
  %v5189 = vunpack.c.l.b16 %v5138
  %v5190 = vunpack.c.l.b16 %v5142
  %v5191 = vunpack.c.l.b16 %v5146
  %v5192 = vunpack.c.l.b16 %v5150
  %v5193 = vunpack.c.l.b16 %v5154
  %v5194 = vunpack.c.l.b16 %v5158
  %v5195 = vunpack.c.l.b16 %v5162
  %v5196 = vunpack.c.l.b16 %v5166
  %v5197 = vunpack.c.l.b16 %v5170
  %v5198 = vunpack.c.l.b16 %v5174
  %v5199 = vunpack.c.l.b16 %v5178
  %v5200 = vunpack.c.l.b16 %v5182
  %v5201 = vpack.c.b16 %v5186, %v5185
  %v5202 = vpack.c.b16 %v5188, %v5187
  %v5203 = vpack.c.b16 %v5190, %v5189
  %v5204 = vpack.c.b16 %v5192, %v5191
  %v5205 = vpack.c.b16 %v5194, %v5193
  %v5206 = vpack.c.b16 %v5196, %v5195
  %v5207 = vpack.c.b16 %v5198, %v5197
  %v5208 = vpack.c.b16 %v5200, %v5199
  %v5210 = vsel %vm3883, %v5201, 0
  %v5213 = vsel %vm3883, %v5202, 0
  %v5216 = vsel %vm3883, %v5203, 0
  %v5219 = vsel %vm3883, %v5204, 0
  %v5222 = vsel %vm3883, %v5205, 0
  %v5225 = vsel %vm3883, %v5206, 0
  %v5228 = vsel %vm3883, %v5207, 0
  %v5231 = vsel %vm3883, %v5208, 0
  %v5234 = vsel %vm3908, %v5184, 0
  %5236 = vmatprep.subr.bf16.mxu0 0
  %5237 = vmatpush1.bf16.msra.mxu0 %v5234
  %5238 = vmatprep.subr.bf16.mxu0 0
  %5239 = vmatpush1.bf16.msra.mxu0 0
  %5240 = vmatprep.subr.bf16.mxu0 0
  %5241 = vmatpush1.bf16.msra.mxu0 0
  %5242 = vmatprep.subr.bf16.mxu0 0
  %5243 = vmatpush1.bf16.msra.mxu0 0
  %5244 = vmatprep.subr.bf16.mxu0 0
  %5245 = vmatpush1.bf16.msra.mxu0 0
  %5246 = vmatprep.subr.bf16.mxu0 0
  %5247 = vmatpush1.bf16.msra.mxu0 0
  %5248 = vmatprep.subr.bf16.mxu0 0
  %5249 = vmatpush1.bf16.msra.mxu0 0
  %5250 = vmatprep.subr.bf16.mxu0 0
  %5251 = vmatpush1.bf16.msra.mxu0 0
  %5252 = vmatprep.subr.bf16.mxu0 0
  %5253 = vmatpush1.bf16.msra.mxu0 0
  %5254 = vmatprep.subr.bf16.mxu0 0
  %5255 = vmatpush1.bf16.msra.mxu0 0
  %5256 = vmatprep.subr.bf16.mxu0 0
  %5257 = vmatpush1.bf16.msra.mxu0 0
  %5258 = vmatprep.subr.bf16.mxu0 0
  %5259 = vmatpush1.bf16.msra.mxu0 0
  %5260 = vmatprep.subr.bf16.mxu0 0
  %5261 = vmatpush1.bf16.msra.mxu0 0
  %5262 = vmatprep.subr.bf16.mxu0 0
  %5263 = vmatpush1.bf16.msra.mxu0 0
  %5264 = vmatprep.subr.bf16.mxu0 0
  %5265 = vmatpush1.bf16.msra.mxu0 0
  %5266 = vmatprep.subr.bf16.mxu0 0
  %5267 = vmatpush1.bf16.msra.mxu0 0
  %5268 = vmatprep.mubr.bf16.mxu0 0
  %5269 = vmatmul.mubr.bf16.gmra.mrb[0].mxu0 %v5210
  %v5270 = vpop.f32.mrb[0].mxu0
  %v5271 = vadd.f32 0.0, %v5270
  %v5272 = vpop.f32.mrb[0].mxu0
  %v5273 = vpop.f32.mrb[0].mxu0
  %v5274 = vadd.f32 0.0, %v5273
  %v5275 = vpop.f32.mrb[0].mxu0
  %5276 = vmatprep.mubr.bf16.mxu0 0
  %5277 = vmatmul.mubr.bf16.gmra.mrb[0].mxu0 %v5213
  %v5278 = vpop.f32.mrb[0].mxu0
  %v5279 = vadd.f32 0.0, %v5278
  %v5280 = vpop.f32.mrb[0].mxu0
  %v5281 = vpop.f32.mrb[0].mxu0
  %v5282 = vadd.f32 0.0, %v5281
  %v5283 = vpop.f32.mrb[0].mxu0
  %5284 = vmatprep.mubr.bf16.mxu0 0
  %5285 = vmatmul.mubr.bf16.gmra.mrb[0].mxu0 %v5216
  %v5286 = vpop.f32.mrb[0].mxu0
  %v5287 = vadd.f32 0.0, %v5286
  %v5288 = vpop.f32.mrb[0].mxu0
  %v5289 = vpop.f32.mrb[0].mxu0
  %v5290 = vadd.f32 0.0, %v5289
  %v5291 = vpop.f32.mrb[0].mxu0
  %5292 = vmatprep.mubr.bf16.mxu0 0
  %5293 = vmatmul.mubr.bf16.gmra.mrb[0].mxu0 %v5219
  %v5294 = vpop.f32.mrb[0].mxu0
  %v5295 = vadd.f32 0.0, %v5294
  %v5296 = vpop.f32.mrb[0].mxu0
  %v5297 = vpop.f32.mrb[0].mxu0
  %v5298 = vadd.f32 0.0, %v5297
  %v5299 = vpop.f32.mrb[0].mxu0
  %5300 = vmatprep.mubr.bf16.mxu0 0
  %5301 = vmatmul.mubr.bf16.gmra.mrb[0].mxu0 %v5222
  %v5302 = vpop.f32.mrb[0].mxu0
  %v5303 = vadd.f32 0.0, %v5302
  %v5304 = vpop.f32.mrb[0].mxu0
  %v5305 = vpop.f32.mrb[0].mxu0
  %v5306 = vadd.f32 0.0, %v5305
  %v5307 = vpop.f32.mrb[0].mxu0
  %5308 = vmatprep.mubr.bf16.mxu0 0
  %5309 = vmatmul.mubr.bf16.gmra.mrb[0].mxu0 %v5225
  %v5310 = vpop.f32.mrb[0].mxu0
  %v5311 = vadd.f32 0.0, %v5310
  %v5312 = vpop.f32.mrb[0].mxu0
  %v5313 = vpop.f32.mrb[0].mxu0
  %v5314 = vadd.f32 0.0, %v5313
  %v5315 = vpop.f32.mrb[0].mxu0
  %5316 = vmatprep.mubr.bf16.mxu0 0
  %5317 = vmatmul.mubr.bf16.gmra.mrb[0].mxu0 %v5228
  %v5318 = vpop.f32.mrb[0].mxu0
  %v5319 = vadd.f32 0.0, %v5318
  %v5320 = vpop.f32.mrb[0].mxu0
  %v5321 = vpop.f32.mrb[0].mxu0
  %v5322 = vadd.f32 0.0, %v5321
  %v5323 = vpop.f32.mrb[0].mxu0
  %5324 = vmatprep.mubr.bf16.mxu0 0
  %5325 = vmatmul.mubr.bf16.gmra.mrb[0].mxu0 %v5231
  %v5326 = vpop.f32.mrb[0].mxu0
  %v5327 = vadd.f32 0.0, %v5326
  %v5328 = vpop.f32.mrb[0].mxu0
  %v5329 = vpop.f32.mrb[0].mxu0
  %v5330 = vadd.f32 0.0, %v5329
  %v5331 = vpop.f32.mrb[0].mxu0
  %5332 = vdwg.mxu0
  %v5333 = vadd.f32 %v5055, %v5271
  %v5334 = vadd.f32 %v5056, %v5274
  %v5335 = vadd.f32 %v5057, %v5279
  %v5336 = vadd.f32 %v5058, %v5282
  %v5337 = vadd.f32 %v5059, %v5287
  %v5338 = vadd.f32 %v5060, %v5290
  %v5339 = vadd.f32 %v5061, %v5295
  %v5340 = vadd.f32 %v5062, %v5298
  %v5341 = vadd.f32 %v5063, %v5303
  %v5342 = vadd.f32 %v5064, %v5306
  %v5343 = vadd.f32 %v5065, %v5311
  %v5344 = vadd.f32 %v5066, %v5314
  %v5345 = vadd.f32 %v5067, %v5319
  %v5346 = vadd.f32 %v5068, %v5322
  %v5347 = vadd.f32 %v5069, %v5327
  %v5348 = vadd.f32 %v5070, %v5330
  %s5349 = scalar_lea.vmem [#allocation3], 16
  %v5350 = vld [vmem:[%s5349] sm:$0xf]
  %v5351 = vld [vmem:[%s5349 + $0x8] sm:$0xf]
  %v5352 = vld [vmem:[%s5349 + $0x10] sm:$0xf]
  %v5353 = vld [vmem:[%s5349 + $0x18] sm:$0xf]
  %v5354 = vld [vmem:[%s5349 + $0x20] sm:$0xf]
  %v5355 = vld [vmem:[%s5349 + $0x28] sm:$0xf]
  %v5356 = vld [vmem:[%s5349 + $0x30] sm:$0xf]
  %v5357 = vld [vmem:[%s5349 + $0x38] sm:$0xf]
  %v5358 = vld [vmem:[%s5349 + $0x50] sm:$0xf]
  %v5359 = vld [vmem:[%s5349 + $0x58] sm:$0xf]
  %v5360 = vld [vmem:[%s5349 + $0x60] sm:$0xf]
  %v5361 = vld [vmem:[%s5349 + $0x68] sm:$0xf]
  %v5362 = vld [vmem:[%s5349 + $0x70] sm:$0xf]
  %v5363 = vld [vmem:[%s5349 + $0x78] sm:$0xf]
  %v5364 = vld [vmem:[%s5349 + $0x80] sm:$0xf]
  %v5365 = vld [vmem:[%s5349 + $0x88] sm:$0xf]
  %s5366 = scalar_lea.vmem %s3, 24
  %v5367 = vld [vmem:[%s5366] sm:$0xf]
  %v5384 = vunpack.c.l.b16 %v5350
  %v5385 = vunpack.c.l.b16 %v5351
  %v5386 = vunpack.c.l.b16 %v5352
  %v5387 = vunpack.c.l.b16 %v5353
  %v5388 = vunpack.c.l.b16 %v5354
  %v5389 = vunpack.c.l.b16 %v5355
  %v5390 = vunpack.c.l.b16 %v5356
  %v5391 = vunpack.c.l.b16 %v5357
  %v5392 = vunpack.c.l.b16 %v5358
  %v5393 = vunpack.c.l.b16 %v5359
  %v5394 = vunpack.c.l.b16 %v5360
  %v5395 = vunpack.c.l.b16 %v5361
  %v5396 = vunpack.c.l.b16 %v5362
  %v5397 = vunpack.c.l.b16 %v5363
  %v5398 = vunpack.c.l.b16 %v5364
  %v5399 = vunpack.c.l.b16 %v5365
  %v5400 = vpack.c.b16 %v5385, %v5384
  %v5401 = vpack.c.b16 %v5387, %v5386
  %v5402 = vpack.c.b16 %v5389, %v5388
  %v5403 = vpack.c.b16 %v5391, %v5390
  %v5404 = vpack.c.b16 %v5393, %v5392
  %v5405 = vpack.c.b16 %v5395, %v5394
  %v5406 = vpack.c.b16 %v5397, %v5396
  %v5407 = vpack.c.b16 %v5399, %v5398
  %v5409 = vsel %vm3883, %v5400, 0
  %v5412 = vsel %vm3883, %v5401, 0
  %v5415 = vsel %vm3883, %v5402, 0
  %v5418 = vsel %vm3883, %v5403, 0
  %v5421 = vsel %vm3883, %v5404, 0
  %v5424 = vsel %vm3883, %v5405, 0
  %v5427 = vsel %vm3883, %v5406, 0
  %v5430 = vsel %vm3883, %v5407, 0
  %v5433 = vsel %vm3908, %v5367, 0
  %5435 = vmatprep.subr.bf16.mxu0 0
  %5436 = vmatpush1.bf16.msra.mxu0 %v5433
  %5437 = vmatprep.subr.bf16.mxu0 0
  %5438 = vmatpush1.bf16.msra.mxu0 0
  %5439 = vmatprep.subr.bf16.mxu0 0
  %5440 = vmatpush1.bf16.msra.mxu0 0
  %5441 = vmatprep.subr.bf16.mxu0 0
  %5442 = vmatpush1.bf16.msra.mxu0 0
  %5443 = vmatprep.subr.bf16.mxu0 0
  %5444 = vmatpush1.bf16.msra.mxu0 0
  %5445 = vmatprep.subr.bf16.mxu0 0
  %5446 = vmatpush1.bf16.msra.mxu0 0
  %5447 = vmatprep.subr.bf16.mxu0 0
  %5448 = vmatpush1.bf16.msra.mxu0 0
  %5449 = vmatprep.subr.bf16.mxu0 0
  %5450 = vmatpush1.bf16.msra.mxu0 0
  %5451 = vmatprep.subr.bf16.mxu0 0
  %5452 = vmatpush1.bf16.msra.mxu0 0
  %5453 = vmatprep.subr.bf16.mxu0 0
  %5454 = vmatpush1.bf16.msra.mxu0 0
  %5455 = vmatprep.subr.bf16.mxu0 0
  %5456 = vmatpush1.bf16.msra.mxu0 0
  %5457 = vmatprep.subr.bf16.mxu0 0
  %5458 = vmatpush1.bf16.msra.mxu0 0
  %5459 = vmatprep.subr.bf16.mxu0 0
  %5460 = vmatpush1.bf16.msra.mxu0 0
  %5461 = vmatprep.subr.bf16.mxu0 0
  %5462 = vmatpush1.bf16.msra.mxu0 0
  %5463 = vmatprep.subr.bf16.mxu0 0
  %5464 = vmatpush1.bf16.msra.mxu0 0
  %5465 = vmatprep.subr.bf16.mxu0 0
  %5466 = vmatpush1.bf16.msra.mxu0 0
  %5467 = vmatprep.mubr.bf16.mxu0 0
  %5468 = vmatmul.mubr.bf16.gmra.mrb[0].mxu0 %v5409
  %v5469 = vpop.f32.mrb[0].mxu0
  %v5470 = vadd.f32 0.0, %v5469
  %v5471 = vpop.f32.mrb[0].mxu0
  %v5472 = vpop.f32.mrb[0].mxu0
  %v5473 = vadd.f32 0.0, %v5472
  %v5474 = vpop.f32.mrb[0].mxu0
  %5475 = vmatprep.mubr.bf16.mxu0 0
  %5476 = vmatmul.mubr.bf16.gmra.mrb[0].mxu0 %v5412
  %v5477 = vpop.f32.mrb[0].mxu0
  %v5478 = vadd.f32 0.0, %v5477
  %v5479 = vpop.f32.mrb[0].mxu0
  %v5480 = vpop.f32.mrb[0].mxu0
  %v5481 = vadd.f32 0.0, %v5480
  %v5482 = vpop.f32.mrb[0].mxu0
  %5483 = vmatprep.mubr.bf16.mxu0 0
  %5484 = vmatmul.mubr.bf16.gmra.mrb[0].mxu0 %v5415
  %v5485 = vpop.f32.mrb[0].mxu0
  %v5486 = vadd.f32 0.0, %v5485
  %v5487 = vpop.f32.mrb[0].mxu0
  %v5488 = vpop.f32.mrb[0].mxu0
  %v5489 = vadd.f32 0.0, %v5488
  %v5490 = vpop.f32.mrb[0].mxu0
  %5491 = vmatprep.mubr.bf16.mxu0 0
  %5492 = vmatmul.mubr.bf16.gmra.mrb[0].mxu0 %v5418
  %v5493 = vpop.f32.mrb[0].mxu0
  %v5494 = vadd.f32 0.0, %v5493
  %v5495 = vpop.f32.mrb[0].mxu0
  %v5496 = vpop.f32.mrb[0].mxu0
  %v5497 = vadd.f32 0.0, %v5496
  %v5498 = vpop.f32.mrb[0].mxu0
  %5499 = vmatprep.mubr.bf16.mxu0 0
  %5500 = vmatmul.mubr.bf16.gmra.mrb[0].mxu0 %v5421
  %v5501 = vpop.f32.mrb[0].mxu0
  %v5502 = vadd.f32 0.0, %v5501
  %v5503 = vpop.f32.mrb[0].mxu0
  %v5504 = vpop.f32.mrb[0].mxu0
  %v5505 = vadd.f32 0.0, %v5504
  %v5506 = vpop.f32.mrb[0].mxu0
  %5507 = vmatprep.mubr.bf16.mxu0 0
  %5508 = vmatmul.mubr.bf16.gmra.mrb[0].mxu0 %v5424
  %v5509 = vpop.f32.mrb[0].mxu0
  %v5510 = vadd.f32 0.0, %v5509
  %v5511 = vpop.f32.mrb[0].mxu0
  %v5512 = vpop.f32.mrb[0].mxu0
  %v5513 = vadd.f32 0.0, %v5512
  %v5514 = vpop.f32.mrb[0].mxu0
  %5515 = vmatprep.mubr.bf16.mxu0 0
  %5516 = vmatmul.mubr.bf16.gmra.mrb[0].mxu0 %v5427
  %v5517 = vpop.f32.mrb[0].mxu0
  %v5518 = vadd.f32 0.0, %v5517
  %v5519 = vpop.f32.mrb[0].mxu0
  %v5520 = vpop.f32.mrb[0].mxu0
  %v5521 = vadd.f32 0.0, %v5520
  %v5522 = vpop.f32.mrb[0].mxu0
  %5523 = vmatprep.mubr.bf16.mxu0 0
  %5524 = vmatmul.mubr.bf16.gmra.mrb[0].mxu0 %v5430
  %v5525 = vpop.f32.mrb[0].mxu0
  %v5526 = vadd.f32 0.0, %v5525
  %v5527 = vpop.f32.mrb[0].mxu0
  %v5528 = vpop.f32.mrb[0].mxu0
  %v5529 = vadd.f32 0.0, %v5528
  %v5530 = vpop.f32.mrb[0].mxu0
  %5531 = vdwg.mxu0
  %v5532 = vadd.f32 %v5333, %v5470
  %v5533 = vadd.f32 %v5334, %v5473
  %v5534 = vadd.f32 %v5335, %v5478
  %v5535 = vadd.f32 %v5336, %v5481
  %v5536 = vadd.f32 %v5337, %v5486
  %v5537 = vadd.f32 %v5338, %v5489
  %v5538 = vadd.f32 %v5339, %v5494
  %v5539 = vadd.f32 %v5340, %v5497
  %v5540 = vadd.f32 %v5341, %v5502
  %v5541 = vadd.f32 %v5342, %v5505
  %v5542 = vadd.f32 %v5343, %v5510
  %v5543 = vadd.f32 %v5344, %v5513
  %v5544 = vadd.f32 %v5345, %v5518
  %v5545 = vadd.f32 %v5346, %v5521
  %v5546 = vadd.f32 %v5347, %v5526
  %v5547 = vadd.f32 %v5348, %v5529
  %v5548 = vld [vmem:[%s5349] sm:$0xf]
  %v5549 = vld [vmem:[%s5349 + $0x4] sm:$0x1]
  %v5550 = vld [vmem:[%s5349 + $0x8] sm:$0xf]
  %v5551 = vld [vmem:[%s5349 + $0xc] sm:$0x1]
  %v5552 = vld [vmem:[%s5349 + $0x10] sm:$0xf]
  %v5553 = vld [vmem:[%s5349 + $0x14] sm:$0x1]
  %v5554 = vld [vmem:[%s5349 + $0x18] sm:$0xf]
  %v5555 = vld [vmem:[%s5349 + $0x1c] sm:$0x1]
  %v5556 = vld [vmem:[%s5349 + $0x20] sm:$0xf]
  %v5557 = vld [vmem:[%s5349 + $0x24] sm:$0x1]
  %v5558 = vld [vmem:[%s5349 + $0x28] sm:$0xf]
  %v5559 = vld [vmem:[%s5349 + $0x2c] sm:$0x1]
  %v5560 = vld [vmem:[%s5349 + $0x30] sm:$0xf]
  %v5561 = vld [vmem:[%s5349 + $0x34] sm:$0x1]
  %v5562 = vld [vmem:[%s5349 + $0x38] sm:$0xf]
  %v5563 = vld [vmem:[%s5349 + $0x3c] sm:$0x1]
  %v5564 = vld [vmem:[%s5349 + $0x50] sm:$0xf]
  %v5565 = vld [vmem:[%s5349 + $0x54] sm:$0x1]
  %v5566 = vld [vmem:[%s5349 + $0x58] sm:$0xf]
  %v5567 = vld [vmem:[%s5349 + $0x5c] sm:$0x1]
  %v5568 = vld [vmem:[%s5349 + $0x60] sm:$0xf]
  %v5569 = vld [vmem:[%s5349 + $0x64] sm:$0x1]
  %v5570 = vld [vmem:[%s5349 + $0x68] sm:$0xf]
  %v5571 = vld [vmem:[%s5349 + $0x6c] sm:$0x1]
  %v5572 = vld [vmem:[%s5349 + $0x70] sm:$0xf]
  %v5573 = vld [vmem:[%s5349 + $0x74] sm:$0x1]
  %v5574 = vld [vmem:[%s5349 + $0x78] sm:$0xf]
  %v5575 = vld [vmem:[%s5349 + $0x7c] sm:$0x1]
  %v5576 = vld [vmem:[%s5349 + $0x80] sm:$0xf]
  %v5577 = vld [vmem:[%s5349 + $0x84] sm:$0x1]
  %v5578 = vld [vmem:[%s5349 + $0x88] sm:$0xf]
  %v5579 = vld [vmem:[%s5349 + $0x8c] sm:$0x1]
  %v5581 = vshrl.u32 %v5548, 16
  %v5583 = vrot.slane %v5581, 4
  %v5584 = vshll.u32 %v5548, 16
  %v5586 = vrot.slane %v5584, 5
  %v5587 = vor.u32 %v5583, %v5586
  %v5588 = vrot.slane %v5587, 4
  %v5590 = vshll.u32 %v5549, 16
  %v5592 = vrot.slane %v5590, 5
  %v5593 = vsel %vm617, %v5588, %v5592
  %v5595 = vshrl.u32 %v5550, 16
  %v5597 = vrot.slane %v5595, 4
  %v5598 = vshll.u32 %v5550, 16
  %v5600 = vrot.slane %v5598, 5
  %v5601 = vor.u32 %v5597, %v5600
  %v5602 = vrot.slane %v5601, 4
  %v5604 = vshll.u32 %v5551, 16
  %v5606 = vrot.slane %v5604, 5
  %v5607 = vsel %vm617, %v5602, %v5606
  %v5609 = vshrl.u32 %v5552, 16
  %v5611 = vrot.slane %v5609, 4
  %v5612 = vshll.u32 %v5552, 16
  %v5614 = vrot.slane %v5612, 5
  %v5615 = vor.u32 %v5611, %v5614
  %v5616 = vrot.slane %v5615, 4
  %v5618 = vshll.u32 %v5553, 16
  %v5620 = vrot.slane %v5618, 5
  %v5621 = vsel %vm617, %v5616, %v5620
  %v5623 = vshrl.u32 %v5554, 16
  %v5625 = vrot.slane %v5623, 4
  %v5626 = vshll.u32 %v5554, 16
  %v5628 = vrot.slane %v5626, 5
  %v5629 = vor.u32 %v5625, %v5628
  %v5630 = vrot.slane %v5629, 4
  %v5632 = vshll.u32 %v5555, 16
  %v5634 = vrot.slane %v5632, 5
  %v5635 = vsel %vm617, %v5630, %v5634
  %v5637 = vshrl.u32 %v5556, 16
  %v5639 = vrot.slane %v5637, 4
  %v5640 = vshll.u32 %v5556, 16
  %v5642 = vrot.slane %v5640, 5
  %v5643 = vor.u32 %v5639, %v5642
  %v5644 = vrot.slane %v5643, 4
  %v5646 = vshll.u32 %v5557, 16
  %v5648 = vrot.slane %v5646, 5
  %v5649 = vsel %vm617, %v5644, %v5648
  %v5651 = vshrl.u32 %v5558, 16
  %v5653 = vrot.slane %v5651, 4
  %v5654 = vshll.u32 %v5558, 16
  %v5656 = vrot.slane %v5654, 5
  %v5657 = vor.u32 %v5653, %v5656
  %v5658 = vrot.slane %v5657, 4
  %v5660 = vshll.u32 %v5559, 16
  %v5662 = vrot.slane %v5660, 5
  %v5663 = vsel %vm617, %v5658, %v5662
  %v5665 = vshrl.u32 %v5560, 16
  %v5667 = vrot.slane %v5665, 4
  %v5668 = vshll.u32 %v5560, 16
  %v5670 = vrot.slane %v5668, 5
  %v5671 = vor.u32 %v5667, %v5670
  %v5672 = vrot.slane %v5671, 4
  %v5674 = vshll.u32 %v5561, 16
  %v5676 = vrot.slane %v5674, 5
  %v5677 = vsel %vm617, %v5672, %v5676
  %v5679 = vshrl.u32 %v5562, 16
  %v5681 = vrot.slane %v5679, 4
  %v5682 = vshll.u32 %v5562, 16
  %v5684 = vrot.slane %v5682, 5
  %v5685 = vor.u32 %v5681, %v5684
  %v5686 = vrot.slane %v5685, 4
  %v5688 = vshll.u32 %v5563, 16
  %v5690 = vrot.slane %v5688, 5
  %v5691 = vsel %vm617, %v5686, %v5690
  %v5693 = vshrl.u32 %v5564, 16
  %v5695 = vrot.slane %v5693, 4
  %v5696 = vshll.u32 %v5564, 16
  %v5698 = vrot.slane %v5696, 5
  %v5699 = vor.u32 %v5695, %v5698
  %v5700 = vrot.slane %v5699, 4
  %v5702 = vshll.u32 %v5565, 16
  %v5704 = vrot.slane %v5702, 5
  %v5705 = vsel %vm617, %v5700, %v5704
  %v5707 = vshrl.u32 %v5566, 16
  %v5709 = vrot.slane %v5707, 4
  %v5710 = vshll.u32 %v5566, 16
  %v5712 = vrot.slane %v5710, 5
  %v5713 = vor.u32 %v5709, %v5712
  %v5714 = vrot.slane %v5713, 4
  %v5716 = vshll.u32 %v5567, 16
  %v5718 = vrot.slane %v5716, 5
  %v5719 = vsel %vm617, %v5714, %v5718
  %v5721 = vshrl.u32 %v5568, 16
  %v5723 = vrot.slane %v5721, 4
  %v5724 = vshll.u32 %v5568, 16
  %v5726 = vrot.slane %v5724, 5
  %v5727 = vor.u32 %v5723, %v5726
  %v5728 = vrot.slane %v5727, 4
  %v5730 = vshll.u32 %v5569, 16
  %v5732 = vrot.slane %v5730, 5
  %v5733 = vsel %vm617, %v5728, %v5732
  %v5735 = vshrl.u32 %v5570, 16
  %v5737 = vrot.slane %v5735, 4
  %v5738 = vshll.u32 %v5570, 16
  %v5740 = vrot.slane %v5738, 5
  %v5741 = vor.u32 %v5737, %v5740
  %v5742 = vrot.slane %v5741, 4
  %v5744 = vshll.u32 %v5571, 16
  %v5746 = vrot.slane %v5744, 5
  %v5747 = vsel %vm617, %v5742, %v5746
  %v5749 = vshrl.u32 %v5572, 16
  %v5751 = vrot.slane %v5749, 4
  %v5752 = vshll.u32 %v5572, 16
  %v5754 = vrot.slane %v5752, 5
  %v5755 = vor.u32 %v5751, %v5754
  %v5756 = vrot.slane %v5755, 4
  %v5758 = vshll.u32 %v5573, 16
  %v5760 = vrot.slane %v5758, 5
  %v5761 = vsel %vm617, %v5756, %v5760
  %v5763 = vshrl.u32 %v5574, 16
  %v5765 = vrot.slane %v5763, 4
  %v5766 = vshll.u32 %v5574, 16
  %v5768 = vrot.slane %v5766, 5
  %v5769 = vor.u32 %v5765, %v5768
  %v5770 = vrot.slane %v5769, 4
  %v5772 = vshll.u32 %v5575, 16
  %v5774 = vrot.slane %v5772, 5
  %v5775 = vsel %vm617, %v5770, %v5774
  %v5777 = vshrl.u32 %v5576, 16
  %v5779 = vrot.slane %v5777, 4
  %v5780 = vshll.u32 %v5576, 16
  %v5782 = vrot.slane %v5780, 5
  %v5783 = vor.u32 %v5779, %v5782
  %v5784 = vrot.slane %v5783, 4
  %v5786 = vshll.u32 %v5577, 16
  %v5788 = vrot.slane %v5786, 5
  %v5789 = vsel %vm617, %v5784, %v5788
  %v5791 = vshrl.u32 %v5578, 16
  %v5793 = vrot.slane %v5791, 4
  %v5794 = vshll.u32 %v5578, 16
  %v5796 = vrot.slane %v5794, 5
  %v5797 = vor.u32 %v5793, %v5796
  %v5798 = vrot.slane %v5797, 4
  %v5800 = vshll.u32 %v5579, 16
  %v5802 = vrot.slane %v5800, 5
  %v5803 = vsel %vm617, %v5798, %v5802
  %s5804 = scalar_lea.vmem %s3, 28
  %v5805 = vld [vmem:[%s5804] sm:$0xf]
  %v5806 = vunpack.c.l.b16 %v5593
  %v5807 = vunpack.c.l.b16 %v5607
  %v5808 = vunpack.c.l.b16 %v5621
  %v5809 = vunpack.c.l.b16 %v5635
  %v5810 = vunpack.c.l.b16 %v5649
  %v5811 = vunpack.c.l.b16 %v5663
  %v5812 = vunpack.c.l.b16 %v5677
  %v5813 = vunpack.c.l.b16 %v5691
  %v5814 = vunpack.c.l.b16 %v5705
  %v5815 = vunpack.c.l.b16 %v5719
  %v5816 = vunpack.c.l.b16 %v5733
  %v5817 = vunpack.c.l.b16 %v5747
  %v5818 = vunpack.c.l.b16 %v5761
  %v5819 = vunpack.c.l.b16 %v5775
  %v5820 = vunpack.c.l.b16 %v5789
  %v5821 = vunpack.c.l.b16 %v5803
  %v5822 = vpack.c.b16 %v5807, %v5806
  %v5823 = vpack.c.b16 %v5809, %v5808
  %v5824 = vpack.c.b16 %v5811, %v5810
  %v5825 = vpack.c.b16 %v5813, %v5812
  %v5826 = vpack.c.b16 %v5815, %v5814
  %v5827 = vpack.c.b16 %v5817, %v5816
  %v5828 = vpack.c.b16 %v5819, %v5818
  %v5829 = vpack.c.b16 %v5821, %v5820
  %v5831 = vsel %vm3883, %v5822, 0
  %v5834 = vsel %vm3883, %v5823, 0
  %v5837 = vsel %vm3883, %v5824, 0
  %v5840 = vsel %vm3883, %v5825, 0
  %v5843 = vsel %vm3883, %v5826, 0
  %v5846 = vsel %vm3883, %v5827, 0
  %v5849 = vsel %vm3883, %v5828, 0
  %v5852 = vsel %vm3883, %v5829, 0
  %v5855 = vsel %vm3908, %v5805, 0
  %5857 = vmatprep.subr.bf16.mxu0 0
  %5858 = vmatpush1.bf16.msra.mxu0 %v5855
  %5859 = vmatprep.subr.bf16.mxu0 0
  %5860 = vmatpush1.bf16.msra.mxu0 0
  %5861 = vmatprep.subr.bf16.mxu0 0
  %5862 = vmatpush1.bf16.msra.mxu0 0
  %5863 = vmatprep.subr.bf16.mxu0 0
  %5864 = vmatpush1.bf16.msra.mxu0 0
  %5865 = vmatprep.subr.bf16.mxu0 0
  %5866 = vmatpush1.bf16.msra.mxu0 0
  %5867 = vmatprep.subr.bf16.mxu0 0
  %5868 = vmatpush1.bf16.msra.mxu0 0
  %5869 = vmatprep.subr.bf16.mxu0 0
  %5870 = vmatpush1.bf16.msra.mxu0 0
  %5871 = vmatprep.subr.bf16.mxu0 0
  %5872 = vmatpush1.bf16.msra.mxu0 0
  %5873 = vmatprep.subr.bf16.mxu0 0
  %5874 = vmatpush1.bf16.msra.mxu0 0
  %5875 = vmatprep.subr.bf16.mxu0 0
  %5876 = vmatpush1.bf16.msra.mxu0 0
  %5877 = vmatprep.subr.bf16.mxu0 0
  %5878 = vmatpush1.bf16.msra.mxu0 0
  %5879 = vmatprep.subr.bf16.mxu0 0
  %5880 = vmatpush1.bf16.msra.mxu0 0
  %5881 = vmatprep.subr.bf16.mxu0 0
  %5882 = vmatpush1.bf16.msra.mxu0 0
  %5883 = vmatprep.subr.bf16.mxu0 0
  %5884 = vmatpush1.bf16.msra.mxu0 0
  %5885 = vmatprep.subr.bf16.mxu0 0
  %5886 = vmatpush1.bf16.msra.mxu0 0
  %5887 = vmatprep.subr.bf16.mxu0 0
  %5888 = vmatpush1.bf16.msra.mxu0 0
  %5889 = vmatprep.mubr.bf16.mxu0 0
  %5890 = vmatmul.mubr.bf16.gmra.mrb[0].mxu0 %v5831
  %v5891 = vpop.f32.mrb[0].mxu0
  %v5892 = vadd.f32 0.0, %v5891
  %v5893 = vpop.f32.mrb[0].mxu0
  %v5894 = vpop.f32.mrb[0].mxu0
  %v5895 = vadd.f32 0.0, %v5894
  %v5896 = vpop.f32.mrb[0].mxu0
  %5897 = vmatprep.mubr.bf16.mxu0 0
  %5898 = vmatmul.mubr.bf16.gmra.mrb[0].mxu0 %v5834
  %v5899 = vpop.f32.mrb[0].mxu0
  %v5900 = vadd.f32 0.0, %v5899
  %v5901 = vpop.f32.mrb[0].mxu0
  %v5902 = vpop.f32.mrb[0].mxu0
  %v5903 = vadd.f32 0.0, %v5902
  %v5904 = vpop.f32.mrb[0].mxu0
  %5905 = vmatprep.mubr.bf16.mxu0 0
  %5906 = vmatmul.mubr.bf16.gmra.mrb[0].mxu0 %v5837
  %v5907 = vpop.f32.mrb[0].mxu0
  %v5908 = vadd.f32 0.0, %v5907
  %v5909 = vpop.f32.mrb[0].mxu0
  %v5910 = vpop.f32.mrb[0].mxu0
  %v5911 = vadd.f32 0.0, %v5910
  %v5912 = vpop.f32.mrb[0].mxu0
  %5913 = vmatprep.mubr.bf16.mxu0 0
  %5914 = vmatmul.mubr.bf16.gmra.mrb[0].mxu0 %v5840
  %v5915 = vpop.f32.mrb[0].mxu0
  %v5916 = vadd.f32 0.0, %v5915
  %v5917 = vpop.f32.mrb[0].mxu0
  %v5918 = vpop.f32.mrb[0].mxu0
  %v5919 = vadd.f32 0.0, %v5918
  %v5920 = vpop.f32.mrb[0].mxu0
  %5921 = vmatprep.mubr.bf16.mxu0 0
  %5922 = vmatmul.mubr.bf16.gmra.mrb[0].mxu0 %v5843
  %v5923 = vpop.f32.mrb[0].mxu0
  %v5924 = vadd.f32 0.0, %v5923
  %v5925 = vpop.f32.mrb[0].mxu0
  %v5926 = vpop.f32.mrb[0].mxu0
  %v5927 = vadd.f32 0.0, %v5926
  %v5928 = vpop.f32.mrb[0].mxu0
  %5929 = vmatprep.mubr.bf16.mxu0 0
  %5930 = vmatmul.mubr.bf16.gmra.mrb[0].mxu0 %v5846
  %v5931 = vpop.f32.mrb[0].mxu0
  %v5932 = vadd.f32 0.0, %v5931
  %v5933 = vpop.f32.mrb[0].mxu0
  %v5934 = vpop.f32.mrb[0].mxu0
  %v5935 = vadd.f32 0.0, %v5934
  %v5936 = vpop.f32.mrb[0].mxu0
  %5937 = vmatprep.mubr.bf16.mxu0 0
  %5938 = vmatmul.mubr.bf16.gmra.mrb[0].mxu0 %v5849
  %v5939 = vpop.f32.mrb[0].mxu0
  %v5940 = vadd.f32 0.0, %v5939
  %v5941 = vpop.f32.mrb[0].mxu0
  %v5942 = vpop.f32.mrb[0].mxu0
  %v5943 = vadd.f32 0.0, %v5942
  %v5944 = vpop.f32.mrb[0].mxu0
  %5945 = vmatprep.mubr.bf16.mxu0 0
  %5946 = vmatmul.mubr.bf16.gmra.mrb[0].mxu0 %v5852
  %v5947 = vpop.f32.mrb[0].mxu0
  %v5948 = vadd.f32 0.0, %v5947
  %v5949 = vpop.f32.mrb[0].mxu0
  %v5950 = vpop.f32.mrb[0].mxu0
  %v5951 = vadd.f32 0.0, %v5950
  %v5952 = vpop.f32.mrb[0].mxu0
  %5953 = vdwg.mxu0
  %v5954 = vadd.f32 %v5532, %v5892
  %v5955 = vadd.f32 %v5533, %v5895
  %v5956 = vadd.f32 %v5534, %v5900
  %v5957 = vadd.f32 %v5535, %v5903
  %v5958 = vadd.f32 %v5536, %v5908
  %v5959 = vadd.f32 %v5537, %v5911
  %v5960 = vadd.f32 %v5538, %v5916
  %v5961 = vadd.f32 %v5539, %v5919
  %v5962 = vadd.f32 %v5540, %v5924
  %v5963 = vadd.f32 %v5541, %v5927
  %v5964 = vadd.f32 %v5542, %v5932
  %v5965 = vadd.f32 %v5543, %v5935
  %v5966 = vadd.f32 %v5544, %v5940
  %v5967 = vadd.f32 %v5545, %v5943
  %v5968 = vadd.f32 %v5546, %v5948
  %v5969 = vadd.f32 %v5547, %v5951
  %v5970 = vld [vmem:[%s5349] sm:$0xe]
  %v5971 = vld [vmem:[%s5349 + $0x8] sm:$0xe]
  %v5972 = vld [vmem:[%s5349 + $0x10] sm:$0xe]
  %v5973 = vld [vmem:[%s5349 + $0x18] sm:$0xe]
  %v5974 = vld [vmem:[%s5349 + $0x20] sm:$0xe]
  %v5975 = vld [vmem:[%s5349 + $0x28] sm:$0xe]
  %v5976 = vld [vmem:[%s5349 + $0x30] sm:$0xe]
  %v5977 = vld [vmem:[%s5349 + $0x38] sm:$0xe]
  %v5978 = vld [vmem:[%s5349 + $0x50] sm:$0xe]
  %v5979 = vld [vmem:[%s5349 + $0x58] sm:$0xe]
  %v5980 = vld [vmem:[%s5349 + $0x60] sm:$0xe]
  %v5981 = vld [vmem:[%s5349 + $0x68] sm:$0xe]
  %v5982 = vld [vmem:[%s5349 + $0x70] sm:$0xe]
  %v5983 = vld [vmem:[%s5349 + $0x78] sm:$0xe]
  %v5984 = vld [vmem:[%s5349 + $0x80] sm:$0xe]
  %v5985 = vld [vmem:[%s5349 + $0x88] sm:$0xe]
  %v6018 = vrot.slane %v5970, 5
  %v6019 = vrot.slane %v6018, 4
  %v6020 = vrot.slane %v5549, 5
  %v6021 = vsel %vm1208, %v6019, %v6020
  %v6022 = vrot.slane %v5971, 5
  %v6023 = vrot.slane %v6022, 4
  %v6024 = vrot.slane %v5551, 5
  %v6025 = vsel %vm1208, %v6023, %v6024
  %v6026 = vrot.slane %v5972, 5
  %v6027 = vrot.slane %v6026, 4
  %v6028 = vrot.slane %v5553, 5
  %v6029 = vsel %vm1208, %v6027, %v6028
  %v6030 = vrot.slane %v5973, 5
  %v6031 = vrot.slane %v6030, 4
  %v6032 = vrot.slane %v5555, 5
  %v6033 = vsel %vm1208, %v6031, %v6032
  %v6034 = vrot.slane %v5974, 5
  %v6035 = vrot.slane %v6034, 4
  %v6036 = vrot.slane %v5557, 5
  %v6037 = vsel %vm1208, %v6035, %v6036
  %v6038 = vrot.slane %v5975, 5
  %v6039 = vrot.slane %v6038, 4
  %v6040 = vrot.slane %v5559, 5
  %v6041 = vsel %vm1208, %v6039, %v6040
  %v6042 = vrot.slane %v5976, 5
  %v6043 = vrot.slane %v6042, 4
  %v6044 = vrot.slane %v5561, 5
  %v6045 = vsel %vm1208, %v6043, %v6044
  %v6046 = vrot.slane %v5977, 5
  %v6047 = vrot.slane %v6046, 4
  %v6048 = vrot.slane %v5563, 5
  %v6049 = vsel %vm1208, %v6047, %v6048
  %v6050 = vrot.slane %v5978, 5
  %v6051 = vrot.slane %v6050, 4
  %v6052 = vrot.slane %v5565, 5
  %v6053 = vsel %vm1208, %v6051, %v6052
  %v6054 = vrot.slane %v5979, 5
  %v6055 = vrot.slane %v6054, 4
  %v6056 = vrot.slane %v5567, 5
  %v6057 = vsel %vm1208, %v6055, %v6056
  %v6058 = vrot.slane %v5980, 5
  %v6059 = vrot.slane %v6058, 4
  %v6060 = vrot.slane %v5569, 5
  %v6061 = vsel %vm1208, %v6059, %v6060
  %v6062 = vrot.slane %v5981, 5
  %v6063 = vrot.slane %v6062, 4
  %v6064 = vrot.slane %v5571, 5
  %v6065 = vsel %vm1208, %v6063, %v6064
  %v6066 = vrot.slane %v5982, 5
  %v6067 = vrot.slane %v6066, 4
  %v6068 = vrot.slane %v5573, 5
  %v6069 = vsel %vm1208, %v6067, %v6068
  %v6070 = vrot.slane %v5983, 5
  %v6071 = vrot.slane %v6070, 4
  %v6072 = vrot.slane %v5575, 5
  %v6073 = vsel %vm1208, %v6071, %v6072
  %v6074 = vrot.slane %v5984, 5
  %v6075 = vrot.slane %v6074, 4
  %v6076 = vrot.slane %v5577, 5
  %v6077 = vsel %vm1208, %v6075, %v6076
  %v6078 = vrot.slane %v5985, 5
  %v6079 = vrot.slane %v6078, 4
  %v6080 = vrot.slane %v5579, 5
  %v6081 = vsel %vm1208, %v6079, %v6080
  %s6082 = scalar_lea.vmem %s3, 32
  %v6083 = vld [vmem:[%s6082] sm:$0xf]
  %v6084 = vunpack.c.l.b16 %v6021
  %v6085 = vunpack.c.l.b16 %v6025
  %v6086 = vunpack.c.l.b16 %v6029
  %v6087 = vunpack.c.l.b16 %v6033
  %v6088 = vunpack.c.l.b16 %v6037
  %v6089 = vunpack.c.l.b16 %v6041
  %v6090 = vunpack.c.l.b16 %v6045
  %v6091 = vunpack.c.l.b16 %v6049
  %v6092 = vunpack.c.l.b16 %v6053
  %v6093 = vunpack.c.l.b16 %v6057
  %v6094 = vunpack.c.l.b16 %v6061
  %v6095 = vunpack.c.l.b16 %v6065
  %v6096 = vunpack.c.l.b16 %v6069
  %v6097 = vunpack.c.l.b16 %v6073
  %v6098 = vunpack.c.l.b16 %v6077
  %v6099 = vunpack.c.l.b16 %v6081
  %v6100 = vpack.c.b16 %v6085, %v6084
  %v6101 = vpack.c.b16 %v6087, %v6086
  %v6102 = vpack.c.b16 %v6089, %v6088
  %v6103 = vpack.c.b16 %v6091, %v6090
  %v6104 = vpack.c.b16 %v6093, %v6092
  %v6105 = vpack.c.b16 %v6095, %v6094
  %v6106 = vpack.c.b16 %v6097, %v6096
  %v6107 = vpack.c.b16 %v6099, %v6098
  %v6109 = vsel %vm3883, %v6100, 0
  %v6112 = vsel %vm3883, %v6101, 0
  %v6115 = vsel %vm3883, %v6102, 0
  %v6118 = vsel %vm3883, %v6103, 0
  %v6121 = vsel %vm3883, %v6104, 0
  %v6124 = vsel %vm3883, %v6105, 0
  %v6127 = vsel %vm3883, %v6106, 0
  %v6130 = vsel %vm3883, %v6107, 0
  %v6133 = vsel %vm3908, %v6083, 0
  %6135 = vmatprep.subr.bf16.mxu0 0
  %6136 = vmatpush1.bf16.msra.mxu0 %v6133
  %6137 = vmatprep.subr.bf16.mxu0 0
  %6138 = vmatpush1.bf16.msra.mxu0 0
  %6139 = vmatprep.subr.bf16.mxu0 0
  %6140 = vmatpush1.bf16.msra.mxu0 0
  %6141 = vmatprep.subr.bf16.mxu0 0
  %6142 = vmatpush1.bf16.msra.mxu0 0
  %6143 = vmatprep.subr.bf16.mxu0 0
  %6144 = vmatpush1.bf16.msra.mxu0 0
  %6145 = vmatprep.subr.bf16.mxu0 0
  %6146 = vmatpush1.bf16.msra.mxu0 0
  %6147 = vmatprep.subr.bf16.mxu0 0
  %6148 = vmatpush1.bf16.msra.mxu0 0
  %6149 = vmatprep.subr.bf16.mxu0 0
  %6150 = vmatpush1.bf16.msra.mxu0 0
  %6151 = vmatprep.subr.bf16.mxu0 0
  %6152 = vmatpush1.bf16.msra.mxu0 0
  %6153 = vmatprep.subr.bf16.mxu0 0
  %6154 = vmatpush1.bf16.msra.mxu0 0
  %6155 = vmatprep.subr.bf16.mxu0 0
  %6156 = vmatpush1.bf16.msra.mxu0 0
  %6157 = vmatprep.subr.bf16.mxu0 0
  %6158 = vmatpush1.bf16.msra.mxu0 0
  %6159 = vmatprep.subr.bf16.mxu0 0
  %6160 = vmatpush1.bf16.msra.mxu0 0
  %6161 = vmatprep.subr.bf16.mxu0 0
  %6162 = vmatpush1.bf16.msra.mxu0 0
  %6163 = vmatprep.subr.bf16.mxu0 0
  %6164 = vmatpush1.bf16.msra.mxu0 0
  %6165 = vmatprep.subr.bf16.mxu0 0
  %6166 = vmatpush1.bf16.msra.mxu0 0
  %6167 = vmatprep.mubr.bf16.mxu0 0
  %6168 = vmatmul.mubr.bf16.gmra.mrb[0].mxu0 %v6109
  %v6169 = vpop.f32.mrb[0].mxu0
  %v6170 = vadd.f32 0.0, %v6169
  %v6171 = vpop.f32.mrb[0].mxu0
  %v6172 = vpop.f32.mrb[0].mxu0
  %v6173 = vadd.f32 0.0, %v6172
  %v6174 = vpop.f32.mrb[0].mxu0
  %6175 = vmatprep.mubr.bf16.mxu0 0
  %6176 = vmatmul.mubr.bf16.gmra.mrb[0].mxu0 %v6112
  %v6177 = vpop.f32.mrb[0].mxu0
  %v6178 = vadd.f32 0.0, %v6177
  %v6179 = vpop.f32.mrb[0].mxu0
  %v6180 = vpop.f32.mrb[0].mxu0
  %v6181 = vadd.f32 0.0, %v6180
  %v6182 = vpop.f32.mrb[0].mxu0
  %6183 = vmatprep.mubr.bf16.mxu0 0
  %6184 = vmatmul.mubr.bf16.gmra.mrb[0].mxu0 %v6115
  %v6185 = vpop.f32.mrb[0].mxu0
  %v6186 = vadd.f32 0.0, %v6185
  %v6187 = vpop.f32.mrb[0].mxu0
  %v6188 = vpop.f32.mrb[0].mxu0
  %v6189 = vadd.f32 0.0, %v6188
  %v6190 = vpop.f32.mrb[0].mxu0
  %6191 = vmatprep.mubr.bf16.mxu0 0
  %6192 = vmatmul.mubr.bf16.gmra.mrb[0].mxu0 %v6118
  %v6193 = vpop.f32.mrb[0].mxu0
  %v6194 = vadd.f32 0.0, %v6193
  %v6195 = vpop.f32.mrb[0].mxu0
  %v6196 = vpop.f32.mrb[0].mxu0
  %v6197 = vadd.f32 0.0, %v6196
  %v6198 = vpop.f32.mrb[0].mxu0
  %6199 = vmatprep.mubr.bf16.mxu0 0
  %6200 = vmatmul.mubr.bf16.gmra.mrb[0].mxu0 %v6121
  %v6201 = vpop.f32.mrb[0].mxu0
  %v6202 = vadd.f32 0.0, %v6201
  %v6203 = vpop.f32.mrb[0].mxu0
  %v6204 = vpop.f32.mrb[0].mxu0
  %v6205 = vadd.f32 0.0, %v6204
  %v6206 = vpop.f32.mrb[0].mxu0
  %6207 = vmatprep.mubr.bf16.mxu0 0
  %6208 = vmatmul.mubr.bf16.gmra.mrb[0].mxu0 %v6124
  %v6209 = vpop.f32.mrb[0].mxu0
  %v6210 = vadd.f32 0.0, %v6209
  %v6211 = vpop.f32.mrb[0].mxu0
  %v6212 = vpop.f32.mrb[0].mxu0
  %v6213 = vadd.f32 0.0, %v6212
  %v6214 = vpop.f32.mrb[0].mxu0
  %6215 = vmatprep.mubr.bf16.mxu0 0
  %6216 = vmatmul.mubr.bf16.gmra.mrb[0].mxu0 %v6127
  %v6217 = vpop.f32.mrb[0].mxu0
  %v6218 = vadd.f32 0.0, %v6217
  %v6219 = vpop.f32.mrb[0].mxu0
  %v6220 = vpop.f32.mrb[0].mxu0
  %v6221 = vadd.f32 0.0, %v6220
  %v6222 = vpop.f32.mrb[0].mxu0
  %6223 = vmatprep.mubr.bf16.mxu0 0
  %6224 = vmatmul.mubr.bf16.gmra.mrb[0].mxu0 %v6130
  %v6225 = vpop.f32.mrb[0].mxu0
  %v6226 = vadd.f32 0.0, %v6225
  %v6227 = vpop.f32.mrb[0].mxu0
  %v6228 = vpop.f32.mrb[0].mxu0
  %v6229 = vadd.f32 0.0, %v6228
  %v6230 = vpop.f32.mrb[0].mxu0
  %6231 = vdwg.mxu0
  %v6232 = vadd.f32 %v5954, %v6170
  %v6233 = vadd.f32 %v5955, %v6173
  %v6234 = vadd.f32 %v5956, %v6178
  %v6235 = vadd.f32 %v5957, %v6181
  %v6236 = vadd.f32 %v5958, %v6186
  %v6237 = vadd.f32 %v5959, %v6189
  %v6238 = vadd.f32 %v5960, %v6194
  %v6239 = vadd.f32 %v5961, %v6197
  %v6240 = vadd.f32 %v5962, %v6202
  %v6241 = vadd.f32 %v5963, %v6205
  %v6242 = vadd.f32 %v5964, %v6210
  %v6243 = vadd.f32 %v5965, %v6213
  %v6244 = vadd.f32 %v5966, %v6218
  %v6245 = vadd.f32 %v5967, %v6221
  %v6246 = vadd.f32 %v5968, %v6226
  %v6247 = vadd.f32 %v5969, %v6229
  %v6248 = vld [vmem:[%s4] sm:$0x1]
  %v6250 = vlaneseq
  %v6251 = vshrl.u32 %v6250, 7
  %v6252 = vsub.s32 0, %v6251
  %v6253 = vrot.slane %v6248, %v6252
  %v6255 = vadd.f32 %v6232, %v6253
  %v6256 = vadd.f32 %v6233, %v6253
  %v6257 = vadd.f32 %v6234, %v6253
  %v6258 = vadd.f32 %v6235, %v6253
  %v6259 = vadd.f32 %v6236, %v6253
  %v6260 = vadd.f32 %v6237, %v6253
  %v6261 = vadd.f32 %v6238, %v6253
  %v6262 = vadd.f32 %v6239, %v6253
  %v6263 = vadd.f32 %v6240, %v6253
  %v6264 = vadd.f32 %v6241, %v6253
  %v6265 = vadd.f32 %v6242, %v6253
  %v6266 = vadd.f32 %v6243, %v6253
  %v6267 = vadd.f32 %v6244, %v6253
  %v6268 = vadd.f32 %v6245, %v6253
  %v6269 = vadd.f32 %v6246, %v6253
  %v6270 = vadd.f32 %v6247, %v6253
  %v6271 = vmax.f32 %v6255, 0.0
  %v6272 = vmax.f32 %v6256, 0.0
  %v6273 = vmax.f32 %v6257, 0.0
  %v6274 = vmax.f32 %v6258, 0.0
  %v6275 = vmax.f32 %v6259, 0.0
  %v6276 = vmax.f32 %v6260, 0.0
  %v6277 = vmax.f32 %v6261, 0.0
  %v6278 = vmax.f32 %v6262, 0.0
  %v6279 = vmax.f32 %v6263, 0.0
  %v6280 = vmax.f32 %v6264, 0.0
  %v6281 = vmax.f32 %v6265, 0.0
  %v6282 = vmax.f32 %v6266, 0.0
  %v6283 = vmax.f32 %v6267, 0.0
  %v6284 = vmax.f32 %v6268, 0.0
  %v6285 = vmax.f32 %v6269, 0.0
  %v6286 = vmax.f32 %v6270, 0.0
  %v6287 = vpack.c.bf16 %v6272, %v6271
  %v6288 = vpack.c.bf16 %v6274, %v6273
  %v6289 = vpack.c.bf16 %v6276, %v6275
  %v6290 = vpack.c.bf16 %v6278, %v6277
  %v6291 = vpack.c.bf16 %v6280, %v6279
  %v6292 = vpack.c.bf16 %v6282, %v6281
  %v6293 = vpack.c.bf16 %v6284, %v6283
  %v6294 = vpack.c.bf16 %v6286, %v6285
  %v6303 = vunpack.c.l.b16 %v6287
  %v6304 = vunpack.c.h.b16 %v6287
  %v6305 = vunpack.c.l.b16 %v6288
  %v6306 = vunpack.c.h.b16 %v6288
  %v6307 = vunpack.c.l.b16 %v6289
  %v6308 = vunpack.c.h.b16 %v6289
  %v6309 = vunpack.c.l.b16 %v6290
  %v6310 = vunpack.c.h.b16 %v6290
  %v6311 = vunpack.c.l.b16 %v6291
  %v6312 = vunpack.c.h.b16 %v6291
  %v6313 = vunpack.c.l.b16 %v6292
  %v6314 = vunpack.c.h.b16 %v6292
  %v6315 = vunpack.c.l.b16 %v6293
  %v6316 = vunpack.c.h.b16 %v6293
  %v6317 = vunpack.c.l.b16 %v6294
  %v6318 = vunpack.c.h.b16 %v6294
  %v6319 = vpack.c.b16 %v6303, %v6303
  %v6320 = vpack.c.b16 %v6304, %v6304
  %v6321 = vpack.c.b16 %v6305, %v6305
  %v6322 = vpack.c.b16 %v6306, %v6306
  %v6323 = vpack.c.b16 %v6307, %v6307
  %v6324 = vpack.c.b16 %v6308, %v6308
  %v6325 = vpack.c.b16 %v6309, %v6309
  %v6326 = vpack.c.b16 %v6310, %v6310
  %v6327 = vpack.c.b16 %v6311, %v6311
  %v6328 = vpack.c.b16 %v6312, %v6312
  %v6329 = vpack.c.b16 %v6313, %v6313
  %v6330 = vpack.c.b16 %v6314, %v6314
  %v6331 = vpack.c.b16 %v6315, %v6315
  %v6332 = vpack.c.b16 %v6316, %v6316
  %v6333 = vpack.c.b16 %v6317, %v6317
  %v6334 = vpack.c.b16 %v6318, %v6318
  %vm6351 = vcmask 60416
  %6352 = vst.msk [vmem:[%s5] sm:$0xf] %vm6351, %v6319
  %6353 = vst.msk [vmem:[%s5 + $0x4] sm:$0xf] %vm6351, %v6320
  %6354 = vst.msk [vmem:[%s5 + $0x8] sm:$0xf] %vm6351, %v6321
  %6355 = vst.msk [vmem:[%s5 + $0xc] sm:$0xf] %vm6351, %v6322
  %6356 = vst.msk [vmem:[%s5 + $0x10] sm:$0xf] %vm6351, %v6323
  %6357 = vst.msk [vmem:[%s5 + $0x14] sm:$0xf] %vm6351, %v6324
  %6358 = vst.msk [vmem:[%s5 + $0x18] sm:$0xf] %vm6351, %v6325
  %6359 = vst.msk [vmem:[%s5 + $0x1c] sm:$0xf] %vm6351, %v6326
  %6360 = vst.msk [vmem:[%s5 + $0x20] sm:$0xf] %vm6351, %v6327
  %6361 = vst.msk [vmem:[%s5 + $0x24] sm:$0xf] %vm6351, %v6328
  %6362 = vst.msk [vmem:[%s5 + $0x28] sm:$0xf] %vm6351, %v6329
  %6363 = vst.msk [vmem:[%s5 + $0x2c] sm:$0xf] %vm6351, %v6330
  %6364 = vst.msk [vmem:[%s5 + $0x30] sm:$0xf] %vm6351, %v6331
  %6365 = vst.msk [vmem:[%s5 + $0x34] sm:$0xf] %vm6351, %v6332
  %6366 = vst.msk [vmem:[%s5 + $0x38] sm:$0xf] %vm6351, %v6333
  %6367 = vst.msk [vmem:[%s5 + $0x3c] sm:$0xf] %vm6351, %v6334
  // Predicated region
  $region26: #{down_forward.1} parent=0 // pred_check
    _
  $region27: #{down_forward.1} parent=0 // pred_check_branch
    %6369 = sbr.rel (0) target = $region29
  $region28: #{down_forward.1} parent=0 // pred_region
    _
  $region29: #{down_forward.1} parent=0 // pred_fallthru
    _
  // Predicated region
  $region30: #{down_forward.1} parent=0 // pred_check
    _
  $region31: #{down_forward.1} parent=0 // pred_check_branch
    %6371 = sbr.rel (0) target = $region33
  $region32: #{down_forward.1} parent=0 // pred_region
    _
  $region33: #{down_forward.1} parent=0 // pred_fallthru
    _

</llo_original>
